<compile_context>
chip_gen: v6e
topology: v6e:2x2x1
jax: 0.10.0
libtpu: 0.0.40
codegen_flags: <defaults>
</compile_context>

<pallas_src>
import functools

import numpy as np
import jax
import jax.numpy as jnp
from jax.experimental import pallas as pl
from jax.experimental.pallas import tpu as pltpu


# ----------------------------------------------------------------------------
# Config
# ----------------------------------------------------------------------------

CFG = dict(
    sur_in=8, sur_out=16,
    ego_in=8, ego_out=16, ego_hiddens=(32,),
    frame_out=32, frame_hiddens=(64,),
    time_out=32,
    action_hiddens=(64,),
)
ACTION_SHAPE = 4
NUM_ATOMS = 4
SOFTMAX = True
Q_HIDDENS = (64,)
V_HIDDENS = (64,)
PAD_B = 8          # time-GRU batch padded to one full sublane tile


# ----------------------------------------------------------------------------
# Fused forward kernel
# ----------------------------------------------------------------------------

def _fused_actor_kernel(dims, layout, sur_ref, ego_ref, wbig_ref, prm_ref, out_ref):
    """Whole MyActor forward pass in a single grid-less kernel.

    sur_ref : (n*history, n_nps*sur_in)   raw obs, contiguous reshape only
    ego_ref : (n*history, n_ego*ego_in)   raw obs, contiguous reshape only
    wbig_ref: packed per-step bi-GRU input projection (+ bias row)
    prm_ref : every other parameter, one (R, 128) buffer, static row offsets
    """
    f32 = jnp.float32
    dot = lambda a, b: jnp.dot(a, b, preferred_element_type=f32)

    def prm(name):
        r0, nr, nc = layout[name]          # static python ints
        return prm_ref[r0:r0 + nr, 0:nc]

    Bs = dims["nh"]            # n*history : sur-GRU batch rows
    Tn = dims["n_nps"]         # sur-GRU sequence length
    F = dims["sur_in"]
    Hs2 = 2 * dims["sur_out"]  # packed [h_fwd | h_bwd] width (32)
    G = 3 * Hs2                # 96 gate lanes per step block
    Th = dims["history"]       # time-GRU sequence length
    PB = dims["pad_b"]         # padded time-GRU batch rows (8)
    Ht = dims["time_out"]
    n = dims["n"]

    # ---------------- sur branch: fused bidirectional GRU --------------------
    # One matmul produces the (normalized) input-gate contributions of BOTH
    # directions for EVERY step; block j pairs fwd step j with bwd step Tn-1-j,
    # lane order [r_f r_b z_f z_b n_f n_b].  b_ih and b_hh(r,z) already folded.
    gi = dot(sur_ref[...], wbig_ref[0:Tn * F, :]) + wbig_ref[Tn * F:Tn * F + 1, :]
    w_blk = prm("sur_whh")                                    # (2H, 6H) block-diag
    b_hn = jnp.broadcast_to(prm("sur_bhn"), (Bs, Hs2))        # hoisted broadcast
    h = jnp.zeros((Bs, Hs2), f32)                             # [h_fwd | h_bwd]
    for j in range(Tn):                                       # static unroll (Tn=8)
        slab = gi[:, j * G:(j + 1) * G]                       # contiguous lane slice
        gh = dot(h, w_blk)                                    # ONE matmul / step
        rz = jax.nn.sigmoid(slab[:, 0:2 * Hs2] + gh[:, 0:2 * Hs2])
        r, z = rz[:, 0:Hs2], rz[:, Hs2:2 * Hs2]
        c = jnp.tanh(slab[:, 2 * Hs2:] + r * (gh[:, 2 * Hs2:] + b_hn))
        h = (1.0 - z) * c + z * h
    # h == sur_feature == [h_n fwd | h_n bwd]  (Bs, 2*sur_out)

    # ---------------- ego branch: per-entity MLP layer 1 ---------------------
    # Block-diagonal first layer (shared weights per entity, norm folded).
    he = jnp.maximum(dot(ego_ref[...], prm("ego_w1")) + prm("ego_b1"), 0.0)

    # ---------------- frame projection ---------------------------------------
    # Ego layer-2 + entity mean + [sur|ego] concat all folded into frm_w1e/b1.
    f1 = jnp.maximum(dot(h, prm("frm_w1s")) + dot(he, prm("frm_w1e"))
                     + prm("frm_b1"), 0.0)
    frame = dot(f1, prm("frm_w2")) + prm("frm_b2")            # (Bs, frame_out)

    # ---------------- time GRU -----------------------------------------------
    # Pack-time permutation matmul pads batch n -> 8 rows so every per-step
    # slab is an aligned 8-row slice (pad rows are junk and never read back).
    git16 = dot(frame, prm("t_wih")) + prm("t_bih")           # (Bs, 3*Ht)
    git = dot(prm("pad_perm"), git16)                         # (Th*PB, 3*Ht)
    t_whh = prm("t_whh")
    t_bhn = jnp.broadcast_to(prm("t_bhn"), (PB, Ht))          # hoisted broadcast
    ht = jnp.zeros((PB, Ht), f32)                             # rows = batch b
    for s in range(Th):                                       # static unroll (Th=8)
        slab = git[s * PB:(s + 1) * PB, :]                    # aligned 8-row slab
        gh = dot(ht, t_whh)                                   # ONE matmul / step
        rz = jax.nn.sigmoid(slab[:, 0:2 * Ht] + gh[:, 0:2 * Ht])
        r, z = rz[:, 0:Ht], rz[:, Ht:2 * Ht]
        c = jnp.tanh(slab[:, 2 * Ht:] + r * (gh[:, 2 * Ht:] + t_bhn))
        ht = (1.0 - z) * c + z * ht

    # ---------------- head: model MLP -> Q/V -> dueling -> softmax -----------
    m1 = jnp.maximum(dot(ht, prm("m_w1")) + prm("m_b1"), 0.0)
    qh = jnp.maximum(dot(m1, prm("q_w1")) + prm("q_b1"), 0.0)
    vh = jnp.maximum(dot(m1, prm("v_w1")) + prm("v_b1"), 0.0)
    # Dueling combine (q - mean_a(q) + v) folded into q_w2d / v_w2d / duel_b.
    lg = dot(qh, prm("q_w2d")) + dot(vh, prm("v_w2d")) + prm("duel_b")  # (PB, A*K)
    if dims["softmax"]:
        mx = jnp.max(lg, axis=-1, keepdims=True)   # per-row const stabilizes all segments
        e = jnp.exp(lg - mx)
        seg = dot(e, prm("ones_blk"))              # per-action atom sums, broadcast
        lg = e / seg                               # exact divide keeps sum-to-1 tight
    out_ref[...] = lg[0:n, :]                      # single contiguous store


# ----------------------------------------------------------------------------
# Parameter initialization (deterministic, synthetic)
# ----------------------------------------------------------------------------

def dense_params(key, din, dout):
    k1, k2 = jax.random.split(key)
    w = jax.random.normal(k1, (din, dout), jnp.float32) / np.sqrt(din)
    b = 0.01 * jax.random.normal(k2, (1, dout), jnp.float32)
    return w, b


def gru_params(key, din, hidden):
    k1, k2, k3, k4 = jax.random.split(key, 4)
    s = 1.0 / np.sqrt(hidden)
    wih = s * jax.random.normal(k1, (din, 3 * hidden), jnp.float32)   # gates [r,z,n]
    whh = s * jax.random.normal(k2, (hidden, 3 * hidden), jnp.float32)
    bih = s * jax.random.normal(k3, (1, 3 * hidden), jnp.float32)
    bhh = s * jax.random.normal(k4, (1, 3 * hidden), jnp.float32)
    return (wih, whh, bih, bhh)


def mlp_params(key, input_dim, output_dim, hidden_sizes):
    """Tianshou-style MLP: hidden layers with ReLU, optional linear head."""
    layers = []
    dims = [input_dim] + list(hidden_sizes)
    keys = jax.random.split(key, len(hidden_sizes) + 1)
    for i in range(len(hidden_sizes)):
        layers.append((dense_params(keys[i], dims[i], dims[i + 1]), True))
    if output_dim > 0:
        layers.append((dense_params(keys[-1], dims[-1], output_dim), False))
    return layers


def norm_params(key, feat):
    # TODO(synk): torch `Normalization` class not provided; modeled as fixed
    # running-stats (x - mean) / std with std > 0.
    k1, k2 = jax.random.split(key)
    mean = 0.1 * jax.random.normal(k1, (1, feat), jnp.float32)
    std = 1.0 + 0.1 * jnp.abs(jax.random.normal(k2, (1, feat), jnp.float32))
    return {"mean": mean, "std": std}


def init_actor_params(key):
    ks = jax.random.split(key, 10)
    action_dim = ACTION_SHAPE * NUM_ATOMS
    return {
        "sur_norm": norm_params(ks[0], CFG["sur_in"]),
        "ego_norm": norm_params(ks[1], CFG["ego_in"]),
        "sur_gru_fwd": gru_params(ks[2], CFG["sur_in"], CFG["sur_out"]),
        "sur_gru_bwd": gru_params(ks[3], CFG["sur_in"], CFG["sur_out"]),
        "ego_project": mlp_params(ks[4], CFG["ego_in"], CFG["ego_out"],
                                  CFG["ego_hiddens"]),
        "project": mlp_params(ks[5], 2 * CFG["sur_out"] + CFG["ego_out"],
                              CFG["frame_out"], CFG["frame_hiddens"]),
        "time_gru": gru_params(ks[6], CFG["frame_out"], CFG["time_out"]),
        # dueling => model MLP has output_dim=0 (last hidden is the output)
        "model": mlp_params(ks[7], CFG["time_out"], 0, CFG["action_hiddens"]),
        "Q": mlp_params(ks[8], CFG["action_hiddens"][-1], action_dim, Q_HIDDENS),
        "V": mlp_params(ks[9], CFG["action_hiddens"][-1], NUM_ATOMS, V_HIDDENS),
    }


# ----------------------------------------------------------------------------
# One-time parameter packing (all composition / folding happens here, in numpy)
# ----------------------------------------------------------------------------

class _ParamPacker:
    """Packs 2-D params into one (R, 128) buffer with 8-row-aligned offsets."""

    def __init__(self, lanes=128):
        self.lanes = lanes
        self.chunks = []
        self.layout = {}
        self.row = 0

    def add(self, name, arr):
        arr = np.asarray(arr, np.float32)
        if arr.ndim == 1:
            arr = arr[None, :]
        r, c = arr.shape
        assert c <= self.lanes, (name, arr.shape)
        pad = np.zeros((r, self.lanes), np.float32)
        pad[:, :c] = arr
        self.chunks.append(pad)
        self.layout[name] = (self.row, r, c)
        self.row += r
        extra = (-r) % 8                      # keep every entry 8-row aligned
        if extra:
            self.chunks.append(np.zeros((extra, self.lanes), np.float32))
            self.row += extra

    def finish(self):
        return np.concatenate(self.chunks, axis=0), self.layout


def pack_params(raw, *, n, history, n_nps, n_ego):
    npf = lambda x: np.asarray(x, np.float32)
    Hs = CFG["sur_out"]
    F = CFG["sur_in"]
    Ht = CFG["time_out"]
    A, K = ACTION_SHAPE, NUM_ATOMS
    assert n <= PAD_B

    # ---- sur bi-GRU: big per-step input projection (norm + biases folded) ----
    wih_f, whh_f, bih_f, bhh_f = map(npf, raw["sur_gru_fwd"])
    wih_b, whh_b, bih_b, bhh_b = map(npf, raw["sur_gru_bwd"])
    bf = bih_f.copy(); bf[:, :2 * Hs] += bhh_f[:, :2 * Hs]     # fold b_hh (r,z)
    bb = bih_b.copy(); bb[:, :2 * Hs] += bhh_b[:, :2 * Hs]
    G = 6 * Hs                                                 # 96 lanes / step
    w_big = np.zeros((n_nps * F, n_nps * G), np.float32)
    b_big = np.zeros((1, n_nps * G), np.float32)
    for j in range(n_nps):                 # loop step j: fwd step j, bwd step T-1-j
        tf_, tb_ = j, n_nps - 1 - j
        c0 = j * G
        for g in range(3):                 # gate order r, z, n
            w_big[tf_ * F:(tf_ + 1) * F, c0 + g * 2 * Hs: c0 + g * 2 * Hs + Hs] = \
                wih_f[:, g * Hs:(g + 1) * Hs]
            w_big[tb_ * F:(tb_ + 1) * F, c0 + g * 2 * Hs + Hs: c0 + (g + 1) * 2 * Hs] = \
                wih_b[:, g * Hs:(g + 1) * Hs]
            b_big[:, c0 + g * 2 * Hs: c0 + g * 2 * Hs + Hs] = bf[:, g * Hs:(g + 1) * Hs]
            b_big[:, c0 + g * 2 * Hs + Hs: c0 + (g + 1) * 2 * Hs] = bb[:, g * Hs:(g + 1) * Hs]
    s_sur = 1.0 / npf(raw["sur_norm"]["std"]).reshape(-1)
    m_sur = npf(raw["sur_norm"]["mean"]).reshape(-1)
    s_t = np.tile(s_sur, n_nps)
    m_t = np.tile(m_sur, n_nps)
    w_big = s_t[:, None] * w_big                               # fold (x-m)*s
    b_big = b_big - m_t[None, :] @ w_big
    buf_w = np.concatenate(
        [w_big, b_big, np.zeros((7, n_nps * G), np.float32)], axis=0)

    pk = _ParamPacker(128)

    # sur GRU recurrent: block-diagonal [h_f|h_b] -> [r_f r_b z_f z_b n_f n_b]
    w_blk = np.zeros((2 * Hs, 6 * Hs), np.float32)
    for g in range(3):
        w_blk[0:Hs, g * 2 * Hs: g * 2 * Hs + Hs] = whh_f[:, g * Hs:(g + 1) * Hs]
        w_blk[Hs:2 * Hs, g * 2 * Hs + Hs:(g + 1) * 2 * Hs] = whh_b[:, g * Hs:(g + 1) * Hs]
    pk.add("sur_whh", w_blk)
    pk.add("sur_bhn", np.concatenate([bhh_f[:, 2 * Hs:], bhh_b[:, 2 * Hs:]], axis=1))

    # ego MLP layer 1: per-entity block-diag, normalization folded
    (ew1, eb1), _ = raw["ego_project"][0]
    (ew2, eb2), _ = raw["ego_project"][1]
    ew1, eb1, ew2, eb2 = map(npf, (ew1, eb1, ew2, eb2))
    s_e = 1.0 / npf(raw["ego_norm"]["std"]).reshape(-1)
    m_e = npf(raw["ego_norm"]["mean"]).reshape(-1)
    ew1s = s_e[:, None] * ew1
    eb1f = eb1 - m_e[None, :] @ ew1s
    eh = ew1.shape[1]
    ew1_blk = np.zeros((n_ego * CFG["ego_in"], n_ego * eh), np.float32)
    for e in range(n_ego):
        ew1_blk[e * CFG["ego_in"]:(e + 1) * CFG["ego_in"], e * eh:(e + 1) * eh] = ew1s
    pk.add("ego_w1", ew1_blk)
    pk.add("ego_b1", np.tile(eb1f, (1, n_ego)))

    # frame projection; ego layer-2 + entity mean + concat folded into frm_w1e
    (pw1, pb1), _ = raw["project"][0]
    (pw2, pb2), _ = raw["project"][1]
    pw1, pb1, pw2, pb2 = map(npf, (pw1, pb1, pw2, pb2))
    w2m = np.concatenate([ew2] * n_ego, axis=0) / n_ego        # (n_ego*eh, ego_out)
    pk.add("frm_w1s", pw1[0:2 * Hs, :])
    pk.add("frm_w1e", w2m @ pw1[2 * Hs:, :])
    pk.add("frm_b1", eb2 @ pw1[2 * Hs:, :] + pb1)
    pk.add("frm_w2", pw2)
    pk.add("frm_b2", pb2)

    # time GRU: batch-pad permutation + weights (b_hh r,z folded into bias)
    p_mat = np.zeros((history * PAD_B, n * history), np.float32)
    for h in range(history):
        for b in range(n):
            p_mat[h * PAD_B + b, b * history + h] = 1.0
    pk.add("pad_perm", p_mat)
    twih, twhh, tbih, tbhh = map(npf, raw["time_gru"])
    tb = tbih.copy(); tb[:, :2 * Ht] += tbhh[:, :2 * Ht]
    pk.add("t_wih", twih)
    pk.add("t_bih", tb)
    pk.add("t_whh", twhh)
    pk.add("t_bhn", tbhh[:, 2 * Ht:])

    # head (dueling combine folded into second-layer weights)
    (mw1, mb1), _ = raw["model"][0]
    (qw1, qb1), _ = raw["Q"][0]
    (qw2, qb2), _ = raw["Q"][1]
    (vw1, vb1), _ = raw["V"][0]
    (vw2, vb2), _ = raw["V"][1]
    mw1, mb1, qw1, qb1, qw2, qb2, vw1, vb1, vw2, vb2 = map(
        npf, (mw1, mb1, qw1, qb1, qw2, qb2, vw1, vb1, vw2, vb2))
    pk.add("m_w1", mw1); pk.add("m_b1", mb1)
    pk.add("q_w1", qw1); pk.add("q_b1", qb1)
    pk.add("v_w1", vw1); pk.add("v_b1", vb1)
    eye_ak = np.eye(A * K, dtype=np.float32)
    m_avg = np.kron(np.ones((A, A), np.float32), np.eye(K, dtype=np.float32)) / A
    tile_m = np.tile(np.eye(K, dtype=np.float32), (1, A))
    pk.add("q_w2d", qw2 @ (eye_ak - m_avg))
    pk.add("v_w2d", vw2 @ tile_m)
    pk.add("duel_b", qb2 @ (eye_ak - m_avg) + vb2 @ tile_m)
    pk.add("ones_blk", np.kron(np.eye(A, dtype=np.float32), np.ones((K, K), np.float32)))

    buf_p, layout = pk.finish()
    meta = dict(n=n, history=history, n_nps=n_nps, n_ego=n_ego)
    return {"buf_w": jnp.asarray(buf_w), "buf_p": jnp.asarray(buf_p),
            "layout": layout, "meta": meta}


# ----------------------------------------------------------------------------
# Forward wrapper (single grid-less pallas_call, 4 input DMAs + 1 output)
# ----------------------------------------------------------------------------

def actor_forward(packed, sur_obs, ego_obs, state=None):
    n, history, n_nps, sur_in = sur_obs.shape
    _, _, n_ego, ego_in = ego_obs.shape
    assert (n, history, n_nps, n_ego) == tuple(packed["meta"].values())
    assert n <= PAD_B

    # Contiguous reshapes only (metadata-level, no transposes / HBM relayout).
    sur_x = sur_obs.reshape(n * history, n_nps * sur_in)
    ego_x = ego_obs.reshape(n * history, n_ego * ego_in)

    dims = dict(n=n, history=history, n_nps=n_nps, nh=n * history,
                sur_in=sur_in, sur_out=CFG["sur_out"], time_out=CFG["time_out"],
                pad_b=PAD_B, softmax=SOFTMAX)
    kernel = functools.partial(_fused_actor_kernel, dims, packed["layout"])

    out = pl.pallas_call(
        kernel,
        out_shape=jax.ShapeDtypeStruct((n, ACTION_SHAPE * NUM_ATOMS), jnp.float32),
        in_specs=[pl.BlockSpec(memory_space=pltpu.MemorySpace.VMEM)] * 4,
        out_specs=pl.BlockSpec(memory_space=pltpu.MemorySpace.VMEM),
    )(sur_x, ego_x, packed["buf_w"], packed["buf_p"])

    return out.reshape(n, ACTION_SHAPE, NUM_ATOMS), state


# ----------------------------------------------------------------------------
# Pure-JAX reference (mirrors the torch module) for correctness validation
# ----------------------------------------------------------------------------

def _gru_ref(x_seq, params, reverse=False):
    wih, whh, bih, bhh = params
    hp = jax.lax.Precision.HIGHEST
    H = whh.shape[0]
    h = jnp.zeros((x_seq.shape[0], H), jnp.float32)
    steps = list(range(x_seq.shape[1]))
    if reverse:
        steps = steps[::-1]
    for t in steps:
        gi = jnp.matmul(x_seq[:, t], wih, precision=hp) + bih
        gh = jnp.matmul(h, whh, precision=hp) + bhh
        r = jax.nn.sigmoid(gi[:, :H] + gh[:, :H])
        z = jax.nn.sigmoid(gi[:, H:2 * H] + gh[:, H:2 * H])
        c = jnp.tanh(gi[:, 2 * H:] + r * gh[:, 2 * H:])
        h = (1.0 - z) * c + z * h
    return h


def actor_reference(raw, sur_obs, ego_obs):
    hp = jax.lax.Precision.HIGHEST
    mm = functools.partial(jnp.matmul, precision=hp)
    n, history, n_nps, _ = sur_obs.shape

    sur = (sur_obs - raw["sur_norm"]["mean"]) / raw["sur_norm"]["std"]
    x = sur.reshape(n * history, n_nps, -1)
    hf = _gru_ref(x, raw["sur_gru_fwd"], reverse=False)
    hb = _gru_ref(x, raw["sur_gru_bwd"], reverse=True)
    sur_feat = jnp.concatenate([hf, hb], axis=-1).reshape(n, history, -1)

    ego = (ego_obs - raw["ego_norm"]["mean"]) / raw["ego_norm"]["std"]
    (ew1, eb1), _ = raw["ego_project"][0]
    (ew2, eb2), _ = raw["ego_project"][1]
    eo = mm(jnp.maximum(mm(ego, ew1) + eb1, 0.0), ew2) + eb2
    ego_feat = jnp.mean(eo, axis=2)

    feats = jnp.concatenate([sur_feat, ego_feat], axis=-1)
    (pw1, pb1), _ = raw["project"][0]
    (pw2, pb2), _ = raw["project"][1]
    frame = mm(jnp.maximum(mm(feats, pw1) + pb1, 0.0), pw2) + pb2

    h = _gru_ref(frame, raw["time_gru"], reverse=False)

    (mw1, mb1), _ = raw["model"][0]
    m1 = jnp.maximum(mm(h, mw1) + mb1, 0.0)
    (qw1, qb1), _ = raw["Q"][0]
    (qw2, qb2), _ = raw["Q"][1]
    (vw1, vb1), _ = raw["V"][0]
    (vw2, vb2), _ = raw["V"][1]
    q = mm(jnp.maximum(mm(m1, qw1) + qb1, 0.0), qw2) + qb2
    v = mm(jnp.maximum(mm(m1, vw1) + vb1, 0.0), vw2) + vb2
    q = q.reshape(n, -1, NUM_ATOMS)
    v = v.reshape(n, 1, NUM_ATOMS)
    lg = q - jnp.mean(q, axis=1, keepdims=True) + v
    if SOFTMAX:
        lg = jax.nn.softmax(lg, axis=-1)
    return lg


# ----------------------------------------------------------------------------
# Main
# ----------------------------------------------------------------------------

if __name__ == "__main__":
    key = jax.random.PRNGKey(0)
    kp, ks, ke = jax.random.split(key, 3)

    n, history, n_nps, n_ego = 2, 8, 8, 4
    raw_params = init_actor_params(kp)
    packed = pack_params(raw_params, n=n, history=history, n_nps=n_nps, n_ego=n_ego)

    sur_obs = jax.random.normal(ks, (n, history, n_nps, CFG["sur_in"]), jnp.float32)
    ego_obs = jax.random.normal(ke, (n, history, n_ego, CFG["ego_in"]), jnp.float32)

    forward = jax.jit(lambda s, e: actor_forward(packed, s, e)[0])
    out = jax.block_until_ready(forward(sur_obs, ego_obs))

    assert out.shape == (n, ACTION_SHAPE, NUM_ATOMS), out.shape
    assert bool(jnp.all(jnp.isfinite(out)))
    # distributional softmax: probabilities over atoms sum to 1 (exact divide)
    assert bool(jnp.allclose(jnp.sum(out, axis=-1), 1.0, atol=1e-4))
    # match the pure-JAX reference of the torch forward pass
    ref = actor_reference(raw_params, sur_obs, ego_obs)
    max_err = float(jnp.max(jnp.abs(out - ref)))
    assert bool(jnp.allclose(out, ref, atol=5e-3)), max_err

    print("KERNEL_OK")
</pallas_src>

<mosaic_0001>
module attributes {stable_mosaic.version = 11 : i64} {
  func.func @_fused_actor_kernel(%arg0: memref<16x64xf32, #tpu.memory_space<vmem>>, %arg1: memref<16x32xf32, #tpu.memory_space<vmem>>, %arg2: memref<72x768xf32, #tpu.memory_space<vmem>>, %arg3: memref<800x128xf32, #tpu.memory_space<vmem>>, %arg4: memref<2x16xf32, #tpu.memory_space<vmem>>) attributes {dimension_semantics = [], scalar_prefetch = 0 : i64, scratch_operands = 0 : i64, tpu.core_type = #tpu.core_type<tc>} {
    %c0 = arith.constant 0 : index
    %c0_0 = arith.constant 0 : index
    %0 = vector.load %arg0[%c0, %c0_0] : memref<16x64xf32, #tpu.memory_space<vmem>>, vector<16x64xf32>
    %c0_1 = arith.constant 0 : index
    %c0_2 = arith.constant 0 : index
    %1 = vector.load %arg2[%c0_1, %c0_2] : memref<72x768xf32, #tpu.memory_space<vmem>>, vector<64x768xf32>
    %cst = arith.constant dense<0.000000e+00> : vector<16x768xf32>
    %2 = tpu.matmul %0, %1, %cst {dimension_numbers = #tpu.dot_dimension_numbers<[1], [0], [0], [1], [0, 0, 1, 1], [], []>} : vector<16x64xf32>, vector<64x768xf32>, vector<16x768xf32> -> vector<16x768xf32>
    %c64 = arith.constant 64 : index
    %c0_3 = arith.constant 0 : index
    %3 = vector.load %arg2[%c64, %c0_3] : memref<72x768xf32, #tpu.memory_space<vmem>>, vector<1x768xf32>
    %4 = vector.broadcast %3 : vector<1x768xf32> to vector<16x768xf32>
    %5 = arith.addf %2, %4 : vector<16x768xf32>
    %c0_4 = arith.constant 0 : index
    %c0_5 = arith.constant 0 : index
    %6 = vector.load %arg3[%c0_4, %c0_5] : memref<800x128xf32, #tpu.memory_space<vmem>>, vector<32x96xf32>
    %c32 = arith.constant 32 : index
    %c0_6 = arith.constant 0 : index
    %7 = vector.load %arg3[%c32, %c0_6] : memref<800x128xf32, #tpu.memory_space<vmem>>, vector<1x32xf32>
    %8 = vector.shape_cast %7 : vector<1x32xf32> to vector<1x32xf32>
    %9 = vector.broadcast %8 : vector<1x32xf32> to vector<16x32xf32>
    %cst_7 = arith.constant 0.000000e+00 : f32
    %10 = vector.broadcast %cst_7 : f32 to vector<16x32xf32>
    %11 = vector.extract_strided_slice %5 {offsets = [0, 0], sizes = [16, 96], strides = [1, 1]} : vector<16x768xf32> to vector<16x96xf32>
    %cst_8 = arith.constant dense<0.000000e+00> : vector<16x96xf32>
    %12 = tpu.matmul %10, %6, %cst_8 {dimension_numbers = #tpu.dot_dimension_numbers<[1], [0], [0], [1], [0, 0, 1, 1], [], []>} : vector<16x32xf32>, vector<32x96xf32>, vector<16x96xf32> -> vector<16x96xf32>
    %13 = vector.extract_strided_slice %11 {offsets = [0, 0], sizes = [16, 64], strides = [1, 1]} : vector<16x96xf32> to vector<16x64xf32>
    %14 = vector.extract_strided_slice %12 {offsets = [0, 0], sizes = [16, 64], strides = [1, 1]} : vector<16x96xf32> to vector<16x64xf32>
    %15 = arith.addf %13, %14 : vector<16x64xf32>
    %16 = arith.negf %15 : vector<16x64xf32>
    %17 = math.exp %16 : vector<16x64xf32>
    %cst_9 = arith.constant 1.000000e+00 : f32
    %18 = vector.broadcast %cst_9 : f32 to vector<16x64xf32>
    %19 = arith.addf %18, %17 : vector<16x64xf32>
    %20 = arith.divf %18, %19 : vector<16x64xf32>
    %21 = vector.extract_strided_slice %20 {offsets = [0, 0], sizes = [16, 32], strides = [1, 1]} : vector<16x64xf32> to vector<16x32xf32>
    %22 = vector.extract_strided_slice %20 {offsets = [0, 32], sizes = [16, 32], strides = [1, 1]} : vector<16x64xf32> to vector<16x32xf32>
    %23 = vector.extract_strided_slice %11 {offsets = [0, 64], sizes = [16, 32], strides = [1, 1]} : vector<16x96xf32> to vector<16x32xf32>
    %24 = vector.extract_strided_slice %12 {offsets = [0, 64], sizes = [16, 32], strides = [1, 1]} : vector<16x96xf32> to vector<16x32xf32>
    %25 = arith.addf %24, %9 : vector<16x32xf32>
    %26 = arith.mulf %21, %25 : vector<16x32xf32>
    %27 = arith.addf %23, %26 : vector<16x32xf32>
    %28 = math.tanh %27 : vector<16x32xf32>
    %cst_10 = arith.constant 1.000000e+00 : f32
    %29 = vector.broadcast %cst_10 : f32 to vector<16x32xf32>
    %30 = arith.subf %29, %22 : vector<16x32xf32>
    %31 = arith.mulf %30, %28 : vector<16x32xf32>
    %32 = arith.mulf %22, %10 : vector<16x32xf32>
    %33 = arith.addf %31, %32 : vector<16x32xf32>
    %34 = vector.extract_strided_slice %5 {offsets = [0, 96], sizes = [16, 96], strides = [1, 1]} : vector<16x768xf32> to vector<16x96xf32>
    %cst_11 = arith.constant dense<0.000000e+00> : vector<16x96xf32>
    %35 = tpu.matmul %33, %6, %cst_11 {dimension_numbers = #tpu.dot_dimension_numbers<[1], [0], [0], [1], [0, 0, 1, 1], [], []>} : vector<16x32xf32>, vector<32x96xf32>, vector<16x96xf32> -> vector<16x96xf32>
    %36 = vector.extract_strided_slice %34 {offsets = [0, 0], sizes = [16, 64], strides = [1, 1]} : vector<16x96xf32> to vector<16x64xf32>
    %37 = vector.extract_strided_slice %35 {offsets = [0, 0], sizes = [16, 64], strides = [1, 1]} : vector<16x96xf32> to vector<16x64xf32>
    %38 = arith.addf %36, %37 : vector<16x64xf32>
    %39 = arith.negf %38 : vector<16x64xf32>
    %40 = math.exp %39 : vector<16x64xf32>
    %cst_12 = arith.constant 1.000000e+00 : f32
    %41 = vector.broadcast %cst_12 : f32 to vector<16x64xf32>
    %42 = arith.addf %41, %40 : vector<16x64xf32>
    %43 = arith.divf %41, %42 : vector<16x64xf32>
    %44 = vector.extract_strided_slice %43 {offsets = [0, 0], sizes = [16, 32], strides = [1, 1]} : vector<16x64xf32> to vector<16x32xf32>
    %45 = vector.extract_strided_slice %43 {offsets = [0, 32], sizes = [16, 32], strides = [1, 1]} : vector<16x64xf32> to vector<16x32xf32>
    %46 = vector.extract_strided_slice %34 {offsets = [0, 64], sizes = [16, 32], strides = [1, 1]} : vector<16x96xf32> to vector<16x32xf32>
    %47 = vector.extract_strided_slice %35 {offsets = [0, 64], sizes = [16, 32], strides = [1, 1]} : vector<16x96xf32> to vector<16x32xf32>
    %48 = arith.addf %47, %9 : vector<16x32xf32>
    %49 = arith.mulf %44, %48 : vector<16x32xf32>
    %50 = arith.addf %46, %49 : vector<16x32xf32>
    %51 = math.tanh %50 : vector<16x32xf32>
    %cst_13 = arith.constant 1.000000e+00 : f32
    %52 = vector.broadcast %cst_13 : f32 to vector<16x32xf32>
    %53 = arith.subf %52, %45 : vector<16x32xf32>
    %54 = arith.mulf %53, %51 : vector<16x32xf32>
    %55 = arith.mulf %45, %33 : vector<16x32xf32>
    %56 = arith.addf %54, %55 : vector<16x32xf32>
    %57 = vector.extract_strided_slice %5 {offsets = [0, 192], sizes = [16, 96], strides = [1, 1]} : vector<16x768xf32> to vector<16x96xf32>
    %cst_14 = arith.constant dense<0.000000e+00> : vector<16x96xf32>
    %58 = tpu.matmul %56, %6, %cst_14 {dimension_numbers = #tpu.dot_dimension_numbers<[1], [0], [0], [1], [0, 0, 1, 1], [], []>} : vector<16x32xf32>, vector<32x96xf32>, vector<16x96xf32> -> vector<16x96xf32>
    %59 = vector.extract_strided_slice %57 {offsets = [0, 0], sizes = [16, 64], strides = [1, 1]} : vector<16x96xf32> to vector<16x64xf32>
    %60 = vector.extract_strided_slice %58 {offsets = [0, 0], sizes = [16, 64], strides = [1, 1]} : vector<16x96xf32> to vector<16x64xf32>
    %61 = arith.addf %59, %60 : vector<16x64xf32>
    %62 = arith.negf %61 : vector<16x64xf32>
    %63 = math.exp %62 : vector<16x64xf32>
    %cst_15 = arith.constant 1.000000e+00 : f32
    %64 = vector.broadcast %cst_15 : f32 to vector<16x64xf32>
    %65 = arith.addf %64, %63 : vector<16x64xf32>
    %66 = arith.divf %64, %65 : vector<16x64xf32>
    %67 = vector.extract_strided_slice %66 {offsets = [0, 0], sizes = [16, 32], strides = [1, 1]} : vector<16x64xf32> to vector<16x32xf32>
    %68 = vector.extract_strided_slice %66 {offsets = [0, 32], sizes = [16, 32], strides = [1, 1]} : vector<16x64xf32> to vector<16x32xf32>
    %69 = vector.extract_strided_slice %57 {offsets = [0, 64], sizes = [16, 32], strides = [1, 1]} : vector<16x96xf32> to vector<16x32xf32>
    %70 = vector.extract_strided_slice %58 {offsets = [0, 64], sizes = [16, 32], strides = [1, 1]} : vector<16x96xf32> to vector<16x32xf32>
    %71 = arith.addf %70, %9 : vector<16x32xf32>
    %72 = arith.mulf %67, %71 : vector<16x32xf32>
    %73 = arith.addf %69, %72 : vector<16x32xf32>
    %74 = math.tanh %73 : vector<16x32xf32>
    %cst_16 = arith.constant 1.000000e+00 : f32
    %75 = vector.broadcast %cst_16 : f32 to vector<16x32xf32>
    %76 = arith.subf %75, %68 : vector<16x32xf32>
    %77 = arith.mulf %76, %74 : vector<16x32xf32>
    %78 = arith.mulf %68, %56 : vector<16x32xf32>
    %79 = arith.addf %77, %78 : vector<16x32xf32>
    %80 = vector.extract_strided_slice %5 {offsets = [0, 288], sizes = [16, 96], strides = [1, 1]} : vector<16x768xf32> to vector<16x96xf32>
    %cst_17 = arith.constant dense<0.000000e+00> : vector<16x96xf32>
    %81 = tpu.matmul %79, %6, %cst_17 {dimension_numbers = #tpu.dot_dimension_numbers<[1], [0], [0], [1], [0, 0, 1, 1], [], []>} : vector<16x32xf32>, vector<32x96xf32>, vector<16x96xf32> -> vector<16x96xf32>
    %82 = vector.extract_strided_slice %80 {offsets = [0, 0], sizes = [16, 64], strides = [1, 1]} : vector<16x96xf32> to vector<16x64xf32>
    %83 = vector.extract_strided_slice %81 {offsets = [0, 0], sizes = [16, 64], strides = [1, 1]} : vector<16x96xf32> to vector<16x64xf32>
    %84 = arith.addf %82, %83 : vector<16x64xf32>
    %85 = arith.negf %84 : vector<16x64xf32>
    %86 = math.exp %85 : vector<16x64xf32>
    %cst_18 = arith.constant 1.000000e+00 : f32
    %87 = vector.broadcast %cst_18 : f32 to vector<16x64xf32>
    %88 = arith.addf %87, %86 : vector<16x64xf32>
    %89 = arith.divf %87, %88 : vector<16x64xf32>
    %90 = vector.extract_strided_slice %89 {offsets = [0, 0], sizes = [16, 32], strides = [1, 1]} : vector<16x64xf32> to vector<16x32xf32>
    %91 = vector.extract_strided_slice %89 {offsets = [0, 32], sizes = [16, 32], strides = [1, 1]} : vector<16x64xf32> to vector<16x32xf32>
    %92 = vector.extract_strided_slice %80 {offsets = [0, 64], sizes = [16, 32], strides = [1, 1]} : vector<16x96xf32> to vector<16x32xf32>
    %93 = vector.extract_strided_slice %81 {offsets = [0, 64], sizes = [16, 32], strides = [1, 1]} : vector<16x96xf32> to vector<16x32xf32>
    %94 = arith.addf %93, %9 : vector<16x32xf32>
    %95 = arith.mulf %90, %94 : vector<16x32xf32>
    %96 = arith.addf %92, %95 : vector<16x32xf32>
    %97 = math.tanh %96 : vector<16x32xf32>
    %cst_19 = arith.constant 1.000000e+00 : f32
    %98 = vector.broadcast %cst_19 : f32 to vector<16x32xf32>
    %99 = arith.subf %98, %91 : vector<16x32xf32>
    %100 = arith.mulf %99, %97 : vector<16x32xf32>
    %101 = arith.mulf %91, %79 : vector<16x32xf32>
    %102 = arith.addf %100, %101 : vector<16x32xf32>
    %103 = vector.extract_strided_slice %5 {offsets = [0, 384], sizes = [16, 96], strides = [1, 1]} : vector<16x768xf32> to vector<16x96xf32>
    %cst_20 = arith.constant dense<0.000000e+00> : vector<16x96xf32>
    %104 = tpu.matmul %102, %6, %cst_20 {dimension_numbers = #tpu.dot_dimension_numbers<[1], [0], [0], [1], [0, 0, 1, 1], [], []>} : vector<16x32xf32>, vector<32x96xf32>, vector<16x96xf32> -> vector<16x96xf32>
    %105 = vector.extract_strided_slice %103 {offsets = [0, 0], sizes = [16, 64], strides = [1, 1]} : vector<16x96xf32> to vector<16x64xf32>
    %106 = vector.extract_strided_slice %104 {offsets = [0, 0], sizes = [16, 64], strides = [1, 1]} : vector<16x96xf32> to vector<16x64xf32>
    %107 = arith.addf %105, %106 : vector<16x64xf32>
    %108 = arith.negf %107 : vector<16x64xf32>
    %109 = math.exp %108 : vector<16x64xf32>
    %cst_21 = arith.constant 1.000000e+00 : f32
    %110 = vector.broadcast %cst_21 : f32 to vector<16x64xf32>
    %111 = arith.addf %110, %109 : vector<16x64xf32>
    %112 = arith.divf %110, %111 : vector<16x64xf32>
    %113 = vector.extract_strided_slice %112 {offsets = [0, 0], sizes = [16, 32], strides = [1, 1]} : vector<16x64xf32> to vector<16x32xf32>
    %114 = vector.extract_strided_slice %112 {offsets = [0, 32], sizes = [16, 32], strides = [1, 1]} : vector<16x64xf32> to vector<16x32xf32>
    %115 = vector.extract_strided_slice %103 {offsets = [0, 64], sizes = [16, 32], strides = [1, 1]} : vector<16x96xf32> to vector<16x32xf32>
    %116 = vector.extract_strided_slice %104 {offsets = [0, 64], sizes = [16, 32], strides = [1, 1]} : vector<16x96xf32> to vector<16x32xf32>
    %117 = arith.addf %116, %9 : vector<16x32xf32>
    %118 = arith.mulf %113, %117 : vector<16x32xf32>
    %119 = arith.addf %115, %118 : vector<16x32xf32>
    %120 = math.tanh %119 : vector<16x32xf32>
    %cst_22 = arith.constant 1.000000e+00 : f32
    %121 = vector.broadcast %cst_22 : f32 to vector<16x32xf32>
    %122 = arith.subf %121, %114 : vector<16x32xf32>
    %123 = arith.mulf %122, %120 : vector<16x32xf32>
    %124 = arith.mulf %114, %102 : vector<16x32xf32>
    %125 = arith.addf %123, %124 : vector<16x32xf32>
    %126 = vector.extract_strided_slice %5 {offsets = [0, 480], sizes = [16, 96], strides = [1, 1]} : vector<16x768xf32> to vector<16x96xf32>
    %cst_23 = arith.constant dense<0.000000e+00> : vector<16x96xf32>
    %127 = tpu.matmul %125, %6, %cst_23 {dimension_numbers = #tpu.dot_dimension_numbers<[1], [0], [0], [1], [0, 0, 1, 1], [], []>} : vector<16x32xf32>, vector<32x96xf32>, vector<16x96xf32> -> vector<16x96xf32>
    %128 = vector.extract_strided_slice %126 {offsets = [0, 0], sizes = [16, 64], strides = [1, 1]} : vector<16x96xf32> to vector<16x64xf32>
    %129 = vector.extract_strided_slice %127 {offsets = [0, 0], sizes = [16, 64], strides = [1, 1]} : vector<16x96xf32> to vector<16x64xf32>
    %130 = arith.addf %128, %129 : vector<16x64xf32>
    %131 = arith.negf %130 : vector<16x64xf32>
    %132 = math.exp %131 : vector<16x64xf32>
    %cst_24 = arith.constant 1.000000e+00 : f32
    %133 = vector.broadcast %cst_24 : f32 to vector<16x64xf32>
    %134 = arith.addf %133, %132 : vector<16x64xf32>
    %135 = arith.divf %133, %134 : vector<16x64xf32>
    %136 = vector.extract_strided_slice %135 {offsets = [0, 0], sizes = [16, 32], strides = [1, 1]} : vector<16x64xf32> to vector<16x32xf32>
    %137 = vector.extract_strided_slice %135 {offsets = [0, 32], sizes = [16, 32], strides = [1, 1]} : vector<16x64xf32> to vector<16x32xf32>
    %138 = vector.extract_strided_slice %126 {offsets = [0, 64], sizes = [16, 32], strides = [1, 1]} : vector<16x96xf32> to vector<16x32xf32>
    %139 = vector.extract_strided_slice %127 {offsets = [0, 64], sizes = [16, 32], strides = [1, 1]} : vector<16x96xf32> to vector<16x32xf32>
    %140 = arith.addf %139, %9 : vector<16x32xf32>
    %141 = arith.mulf %136, %140 : vector<16x32xf32>
    %142 = arith.addf %138, %141 : vector<16x32xf32>
    %143 = math.tanh %142 : vector<16x32xf32>
    %cst_25 = arith.constant 1.000000e+00 : f32
    %144 = vector.broadcast %cst_25 : f32 to vector<16x32xf32>
    %145 = arith.subf %144, %137 : vector<16x32xf32>
    %146 = arith.mulf %145, %143 : vector<16x32xf32>
    %147 = arith.mulf %137, %125 : vector<16x32xf32>
    %148 = arith.addf %146, %147 : vector<16x32xf32>
    %149 = vector.extract_strided_slice %5 {offsets = [0, 576], sizes = [16, 96], strides = [1, 1]} : vector<16x768xf32> to vector<16x96xf32>
    %cst_26 = arith.constant dense<0.000000e+00> : vector<16x96xf32>
    %150 = tpu.matmul %148, %6, %cst_26 {dimension_numbers = #tpu.dot_dimension_numbers<[1], [0], [0], [1], [0, 0, 1, 1], [], []>} : vector<16x32xf32>, vector<32x96xf32>, vector<16x96xf32> -> vector<16x96xf32>
    %151 = vector.extract_strided_slice %149 {offsets = [0, 0], sizes = [16, 64], strides = [1, 1]} : vector<16x96xf32> to vector<16x64xf32>
    %152 = vector.extract_strided_slice %150 {offsets = [0, 0], sizes = [16, 64], strides = [1, 1]} : vector<16x96xf32> to vector<16x64xf32>
    %153 = arith.addf %151, %152 : vector<16x64xf32>
    %154 = arith.negf %153 : vector<16x64xf32>
    %155 = math.exp %154 : vector<16x64xf32>
    %cst_27 = arith.constant 1.000000e+00 : f32
    %156 = vector.broadcast %cst_27 : f32 to vector<16x64xf32>
    %157 = arith.addf %156, %155 : vector<16x64xf32>
    %158 = arith.divf %156, %157 : vector<16x64xf32>
    %159 = vector.extract_strided_slice %158 {offsets = [0, 0], sizes = [16, 32], strides = [1, 1]} : vector<16x64xf32> to vector<16x32xf32>
    %160 = vector.extract_strided_slice %158 {offsets = [0, 32], sizes = [16, 32], strides = [1, 1]} : vector<16x64xf32> to vector<16x32xf32>
    %161 = vector.extract_strided_slice %149 {offsets = [0, 64], sizes = [16, 32], strides = [1, 1]} : vector<16x96xf32> to vector<16x32xf32>
    %162 = vector.extract_strided_slice %150 {offsets = [0, 64], sizes = [16, 32], strides = [1, 1]} : vector<16x96xf32> to vector<16x32xf32>
    %163 = arith.addf %162, %9 : vector<16x32xf32>
    %164 = arith.mulf %159, %163 : vector<16x32xf32>
    %165 = arith.addf %161, %164 : vector<16x32xf32>
    %166 = math.tanh %165 : vector<16x32xf32>
    %cst_28 = arith.constant 1.000000e+00 : f32
    %167 = vector.broadcast %cst_28 : f32 to vector<16x32xf32>
    %168 = arith.subf %167, %160 : vector<16x32xf32>
    %169 = arith.mulf %168, %166 : vector<16x32xf32>
    %170 = arith.mulf %160, %148 : vector<16x32xf32>
    %171 = arith.addf %169, %170 : vector<16x32xf32>
    %172 = vector.extract_strided_slice %5 {offsets = [0, 672], sizes = [16, 96], strides = [1, 1]} : vector<16x768xf32> to vector<16x96xf32>
    %cst_29 = arith.constant dense<0.000000e+00> : vector<16x96xf32>
    %173 = tpu.matmul %171, %6, %cst_29 {dimension_numbers = #tpu.dot_dimension_numbers<[1], [0], [0], [1], [0, 0, 1, 1], [], []>} : vector<16x32xf32>, vector<32x96xf32>, vector<16x96xf32> -> vector<16x96xf32>
    %174 = vector.extract_strided_slice %172 {offsets = [0, 0], sizes = [16, 64], strides = [1, 1]} : vector<16x96xf32> to vector<16x64xf32>
    %175 = vector.extract_strided_slice %173 {offsets = [0, 0], sizes = [16, 64], strides = [1, 1]} : vector<16x96xf32> to vector<16x64xf32>
    %176 = arith.addf %174, %175 : vector<16x64xf32>
    %177 = arith.negf %176 : vector<16x64xf32>
    %178 = math.exp %177 : vector<16x64xf32>
    %cst_30 = arith.constant 1.000000e+00 : f32
    %179 = vector.broadcast %cst_30 : f32 to vector<16x64xf32>
    %180 = arith.addf %179, %178 : vector<16x64xf32>
    %181 = arith.divf %179, %180 : vector<16x64xf32>
    %182 = vector.extract_strided_slice %181 {offsets = [0, 0], sizes = [16, 32], strides = [1, 1]} : vector<16x64xf32> to vector<16x32xf32>
    %183 = vector.extract_strided_slice %181 {offsets = [0, 32], sizes = [16, 32], strides = [1, 1]} : vector<16x64xf32> to vector<16x32xf32>
    %184 = vector.extract_strided_slice %172 {offsets = [0, 64], sizes = [16, 32], strides = [1, 1]} : vector<16x96xf32> to vector<16x32xf32>
    %185 = vector.extract_strided_slice %173 {offsets = [0, 64], sizes = [16, 32], strides = [1, 1]} : vector<16x96xf32> to vector<16x32xf32>
    %186 = arith.addf %185, %9 : vector<16x32xf32>
    %187 = arith.mulf %182, %186 : vector<16x32xf32>
    %188 = arith.addf %184, %187 : vector<16x32xf32>
    %189 = math.tanh %188 : vector<16x32xf32>
    %cst_31 = arith.constant 1.000000e+00 : f32
    %190 = vector.broadcast %cst_31 : f32 to vector<16x32xf32>
    %191 = arith.subf %190, %183 : vector<16x32xf32>
    %192 = arith.mulf %191, %189 : vector<16x32xf32>
    %193 = arith.mulf %183, %171 : vector<16x32xf32>
    %194 = arith.addf %192, %193 : vector<16x32xf32>
    %c0_32 = arith.constant 0 : index
    %c0_33 = arith.constant 0 : index
    %195 = vector.load %arg1[%c0_32, %c0_33] : memref<16x32xf32, #tpu.memory_space<vmem>>, vector<16x32xf32>
    %c40 = arith.constant 40 : index
    %c0_34 = arith.constant 0 : index
    %196 = vector.load %arg3[%c40, %c0_34] : memref<800x128xf32, #tpu.memory_space<vmem>>, vector<32x128xf32>
    %cst_35 = arith.constant dense<0.000000e+00> : vector<16x128xf32>
    %197 = tpu.matmul %195, %196, %cst_35 {dimension_numbers = #tpu.dot_dimension_numbers<[1], [0], [0], [1], [0, 0, 1, 1], [], []>} : vector<16x32xf32>, vector<32x128xf32>, vector<16x128xf32> -> vector<16x128xf32>
    %c72 = arith.constant 72 : index
    %c0_36 = arith.constant 0 : index
    %198 = vector.load %arg3[%c72, %c0_36] : memref<800x128xf32, #tpu.memory_space<vmem>>, vector<1x128xf32>
    %199 = vector.broadcast %198 : vector<1x128xf32> to vector<16x128xf32>
    %200 = arith.addf %197, %199 : vector<16x128xf32>
    %cst_37 = arith.constant 0.000000e+00 : f32
    %201 = vector.broadcast %cst_37 : f32 to vector<16x128xf32>
    %202 = arith.maximumf %200, %201 : vector<16x128xf32>
    %c80 = arith.constant 80 : index
    %c0_38 = arith.constant 0 : index
    %203 = vector.load %arg3[%c80, %c0_38] : memref<800x128xf32, #tpu.memory_space<vmem>>, vector<32x64xf32>
    %cst_39 = arith.constant dense<0.000000e+00> : vector<16x64xf32>
    %204 = tpu.matmul %194, %203, %cst_39 {dimension_numbers = #tpu.dot_dimension_numbers<[1], [0], [0], [1], [0, 0, 1, 1], [], []>} : vector<16x32xf32>, vector<32x64xf32>, vector<16x64xf32> -> vector<16x64xf32>
    %c112 = arith.constant 112 : index
    %c0_40 = arith.constant 0 : index
    %205 = vector.load %arg3[%c112, %c0_40] : memref<800x128xf32, #tpu.memory_space<vmem>>, vector<128x64xf32>
    %cst_41 = arith.constant dense<0.000000e+00> : vector<16x64xf32>
    %206 = tpu.matmul %202, %205, %cst_41 {dimension_numbers = #tpu.dot_dimension_numbers<[1], [0], [0], [1], [0, 0, 1, 1], [], []>} : vector<16x128xf32>, vector<128x64xf32>, vector<16x64xf32> -> vector<16x64xf32>
    %207 = arith.addf %204, %206 : vector<16x64xf32>
    %c240 = arith.constant 240 : index
    %c0_42 = arith.constant 0 : index
    %208 = vector.load %arg3[%c240, %c0_42] : memref<800x128xf32, #tpu.memory_space<vmem>>, vector<1x64xf32>
    %209 = vector.broadcast %208 : vector<1x64xf32> to vector<16x64xf32>
    %210 = arith.addf %207, %209 : vector<16x64xf32>
    %cst_43 = arith.constant 0.000000e+00 : f32
    %211 = vector.broadcast %cst_43 : f32 to vector<16x64xf32>
    %212 = arith.maximumf %210, %211 : vector<16x64xf32>
    %c248 = arith.constant 248 : index
    %c0_44 = arith.constant 0 : index
    %213 = vector.load %arg3[%c248, %c0_44] : memref<800x128xf32, #tpu.memory_space<vmem>>, vector<64x32xf32>
    %cst_45 = arith.constant dense<0.000000e+00> : vector<16x32xf32>
    %214 = tpu.matmul %212, %213, %cst_45 {dimension_numbers = #tpu.dot_dimension_numbers<[1], [0], [0], [1], [0, 0, 1, 1], [], []>} : vector<16x64xf32>, vector<64x32xf32>, vector<16x32xf32> -> vector<16x32xf32>
    %c312 = arith.constant 312 : index
    %c0_46 = arith.constant 0 : index
    %215 = vector.load %arg3[%c312, %c0_46] : memref<800x128xf32, #tpu.memory_space<vmem>>, vector<1x32xf32>
    %216 = vector.broadcast %215 : vector<1x32xf32> to vector<16x32xf32>
    %217 = arith.addf %214, %216 : vector<16x32xf32>
    %c384 = arith.constant 384 : index
    %c0_47 = arith.constant 0 : index
    %218 = vector.load %arg3[%c384, %c0_47] : memref<800x128xf32, #tpu.memory_space<vmem>>, vector<32x96xf32>
    %cst_48 = arith.constant dense<0.000000e+00> : vector<16x96xf32>
    %219 = tpu.matmul %217, %218, %cst_48 {dimension_numbers = #tpu.dot_dimension_numbers<[1], [0], [0], [1], [0, 0, 1, 1], [], []>} : vector<16x32xf32>, vector<32x96xf32>, vector<16x96xf32> -> vector<16x96xf32>
    %c416 = arith.constant 416 : index
    %c0_49 = arith.constant 0 : index
    %220 = vector.load %arg3[%c416, %c0_49] : memref<800x128xf32, #tpu.memory_space<vmem>>, vector<1x96xf32>
    %221 = vector.broadcast %220 : vector<1x96xf32> to vector<16x96xf32>
    %222 = arith.addf %219, %221 : vector<16x96xf32>
    %c320 = arith.constant 320 : index
    %c0_50 = arith.constant 0 : index
    %223 = vector.load %arg3[%c320, %c0_50] : memref<800x128xf32, #tpu.memory_space<vmem>>, vector<64x16xf32>
    %cst_51 = arith.constant dense<0.000000e+00> : vector<64x96xf32>
    %224 = tpu.matmul %223, %222, %cst_51 {dimension_numbers = #tpu.dot_dimension_numbers<[1], [0], [0], [1], [0, 0, 1, 1], [], []>} : vector<64x16xf32>, vector<16x96xf32>, vector<64x96xf32> -> vector<64x96xf32>
    %c424 = arith.constant 424 : index
    %c0_52 = arith.constant 0 : index
    %225 = vector.load %arg3[%c424, %c0_52] : memref<800x128xf32, #tpu.memory_space<vmem>>, vector<32x96xf32>
    %c456 = arith.constant 456 : index
    %c0_53 = arith.constant 0 : index
    %226 = vector.load %arg3[%c456, %c0_53] : memref<800x128xf32, #tpu.memory_space<vmem>>, vector<1x32xf32>
    %227 = vector.shape_cast %226 : vector<1x32xf32> to vector<1x32xf32>
    %228 = vector.broadcast %227 : vector<1x32xf32> to vector<8x32xf32>
    %cst_54 = arith.constant 0.000000e+00 : f32
    %229 = vector.broadcast %cst_54 : f32 to vector<8x32xf32>
    %230 = vector.extract_strided_slice %224 {offsets = [0, 0], sizes = [8, 96], strides = [1, 1]} : vector<64x96xf32> to vector<8x96xf32>
    %cst_55 = arith.constant dense<0.000000e+00> : vector<8x96xf32>
    %231 = tpu.matmul %229, %225, %cst_55 {dimension_numbers = #tpu.dot_dimension_numbers<[1], [0], [0], [1], [0, 0, 1, 1], [], []>} : vector<8x32xf32>, vector<32x96xf32>, vector<8x96xf32> -> vector<8x96xf32>
    %232 = vector.extract_strided_slice %230 {offsets = [0, 0], sizes = [8, 64], strides = [1, 1]} : vector<8x96xf32> to vector<8x64xf32>
    %233 = vector.extract_strided_slice %231 {offsets = [0, 0], sizes = [8, 64], strides = [1, 1]} : vector<8x96xf32> to vector<8x64xf32>
    %234 = arith.addf %232, %233 : vector<8x64xf32>
    %235 = arith.negf %234 : vector<8x64xf32>
    %236 = math.exp %235 : vector<8x64xf32>
    %cst_56 = arith.constant 1.000000e+00 : f32
    %237 = vector.broadcast %cst_56 : f32 to vector<8x64xf32>
    %238 = arith.addf %237, %236 : vector<8x64xf32>
    %239 = arith.divf %237, %238 : vector<8x64xf32>
    %240 = vector.extract_strided_slice %239 {offsets = [0, 0], sizes = [8, 32], strides = [1, 1]} : vector<8x64xf32> to vector<8x32xf32>
    %241 = vector.extract_strided_slice %239 {offsets = [0, 32], sizes = [8, 32], strides = [1, 1]} : vector<8x64xf32> to vector<8x32xf32>
    %242 = vector.extract_strided_slice %230 {offsets = [0, 64], sizes = [8, 32], strides = [1, 1]} : vector<8x96xf32> to vector<8x32xf32>
    %243 = vector.extract_strided_slice %231 {offsets = [0, 64], sizes = [8, 32], strides = [1, 1]} : vector<8x96xf32> to vector<8x32xf32>
    %244 = arith.addf %243, %228 : vector<8x32xf32>
    %245 = arith.mulf %240, %244 : vector<8x32xf32>
    %246 = arith.addf %242, %245 : vector<8x32xf32>
    %247 = math.tanh %246 : vector<8x32xf32>
    %cst_57 = arith.constant 1.000000e+00 : f32
    %248 = vector.broadcast %cst_57 : f32 to vector<8x32xf32>
    %249 = arith.subf %248, %241 : vector<8x32xf32>
    %250 = arith.mulf %249, %247 : vector<8x32xf32>
    %251 = arith.mulf %241, %229 : vector<8x32xf32>
    %252 = arith.addf %250, %251 : vector<8x32xf32>
    %253 = vector.extract_strided_slice %224 {offsets = [8, 0], sizes = [8, 96], strides = [1, 1]} : vector<64x96xf32> to vector<8x96xf32>
    %cst_58 = arith.constant dense<0.000000e+00> : vector<8x96xf32>
    %254 = tpu.matmul %252, %225, %cst_58 {dimension_numbers = #tpu.dot_dimension_numbers<[1], [0], [0], [1], [0, 0, 1, 1], [], []>} : vector<8x32xf32>, vector<32x96xf32>, vector<8x96xf32> -> vector<8x96xf32>
    %255 = vector.extract_strided_slice %253 {offsets = [0, 0], sizes = [8, 64], strides = [1, 1]} : vector<8x96xf32> to vector<8x64xf32>
    %256 = vector.extract_strided_slice %254 {offsets = [0, 0], sizes = [8, 64], strides = [1, 1]} : vector<8x96xf32> to vector<8x64xf32>
    %257 = arith.addf %255, %256 : vector<8x64xf32>
    %258 = arith.negf %257 : vector<8x64xf32>
    %259 = math.exp %258 : vector<8x64xf32>
    %cst_59 = arith.constant 1.000000e+00 : f32
    %260 = vector.broadcast %cst_59 : f32 to vector<8x64xf32>
    %261 = arith.addf %260, %259 : vector<8x64xf32>
    %262 = arith.divf %260, %261 : vector<8x64xf32>
    %263 = vector.extract_strided_slice %262 {offsets = [0, 0], sizes = [8, 32], strides = [1, 1]} : vector<8x64xf32> to vector<8x32xf32>
    %264 = vector.extract_strided_slice %262 {offsets = [0, 32], sizes = [8, 32], strides = [1, 1]} : vector<8x64xf32> to vector<8x32xf32>
    %265 = vector.extract_strided_slice %253 {offsets = [0, 64], sizes = [8, 32], strides = [1, 1]} : vector<8x96xf32> to vector<8x32xf32>
    %266 = vector.extract_strided_slice %254 {offsets = [0, 64], sizes = [8, 32], strides = [1, 1]} : vector<8x96xf32> to vector<8x32xf32>
    %267 = arith.addf %266, %228 : vector<8x32xf32>
    %268 = arith.mulf %263, %267 : vector<8x32xf32>
    %269 = arith.addf %265, %268 : vector<8x32xf32>
    %270 = math.tanh %269 : vector<8x32xf32>
    %cst_60 = arith.constant 1.000000e+00 : f32
    %271 = vector.broadcast %cst_60 : f32 to vector<8x32xf32>
    %272 = arith.subf %271, %264 : vector<8x32xf32>
    %273 = arith.mulf %272, %270 : vector<8x32xf32>
    %274 = arith.mulf %264, %252 : vector<8x32xf32>
    %275 = arith.addf %273, %274 : vector<8x32xf32>
    %276 = vector.extract_strided_slice %224 {offsets = [16, 0], sizes = [8, 96], strides = [1, 1]} : vector<64x96xf32> to vector<8x96xf32>
    %cst_61 = arith.constant dense<0.000000e+00> : vector<8x96xf32>
    %277 = tpu.matmul %275, %225, %cst_61 {dimension_numbers = #tpu.dot_dimension_numbers<[1], [0], [0], [1], [0, 0, 1, 1], [], []>} : vector<8x32xf32>, vector<32x96xf32>, vector<8x96xf32> -> vector<8x96xf32>
    %278 = vector.extract_strided_slice %276 {offsets = [0, 0], sizes = [8, 64], strides = [1, 1]} : vector<8x96xf32> to vector<8x64xf32>
    %279 = vector.extract_strided_slice %277 {offsets = [0, 0], sizes = [8, 64], strides = [1, 1]} : vector<8x96xf32> to vector<8x64xf32>
    %280 = arith.addf %278, %279 : vector<8x64xf32>
    %281 = arith.negf %280 : vector<8x64xf32>
    %282 = math.exp %281 : vector<8x64xf32>
    %cst_62 = arith.constant 1.000000e+00 : f32
    %283 = vector.broadcast %cst_62 : f32 to vector<8x64xf32>
    %284 = arith.addf %283, %282 : vector<8x64xf32>
    %285 = arith.divf %283, %284 : vector<8x64xf32>
    %286 = vector.extract_strided_slice %285 {offsets = [0, 0], sizes = [8, 32], strides = [1, 1]} : vector<8x64xf32> to vector<8x32xf32>
    %287 = vector.extract_strided_slice %285 {offsets = [0, 32], sizes = [8, 32], strides = [1, 1]} : vector<8x64xf32> to vector<8x32xf32>
    %288 = vector.extract_strided_slice %276 {offsets = [0, 64], sizes = [8, 32], strides = [1, 1]} : vector<8x96xf32> to vector<8x32xf32>
    %289 = vector.extract_strided_slice %277 {offsets = [0, 64], sizes = [8, 32], strides = [1, 1]} : vector<8x96xf32> to vector<8x32xf32>
    %290 = arith.addf %289, %228 : vector<8x32xf32>
    %291 = arith.mulf %286, %290 : vector<8x32xf32>
    %292 = arith.addf %288, %291 : vector<8x32xf32>
    %293 = math.tanh %292 : vector<8x32xf32>
    %cst_63 = arith.constant 1.000000e+00 : f32
    %294 = vector.broadcast %cst_63 : f32 to vector<8x32xf32>
    %295 = arith.subf %294, %287 : vector<8x32xf32>
    %296 = arith.mulf %295, %293 : vector<8x32xf32>
    %297 = arith.mulf %287, %275 : vector<8x32xf32>
    %298 = arith.addf %296, %297 : vector<8x32xf32>
    %299 = vector.extract_strided_slice %224 {offsets = [24, 0], sizes = [8, 96], strides = [1, 1]} : vector<64x96xf32> to vector<8x96xf32>
    %cst_64 = arith.constant dense<0.000000e+00> : vector<8x96xf32>
    %300 = tpu.matmul %298, %225, %cst_64 {dimension_numbers = #tpu.dot_dimension_numbers<[1], [0], [0], [1], [0, 0, 1, 1], [], []>} : vector<8x32xf32>, vector<32x96xf32>, vector<8x96xf32> -> vector<8x96xf32>
    %301 = vector.extract_strided_slice %299 {offsets = [0, 0], sizes = [8, 64], strides = [1, 1]} : vector<8x96xf32> to vector<8x64xf32>
    %302 = vector.extract_strided_slice %300 {offsets = [0, 0], sizes = [8, 64], strides = [1, 1]} : vector<8x96xf32> to vector<8x64xf32>
    %303 = arith.addf %301, %302 : vector<8x64xf32>
    %304 = arith.negf %303 : vector<8x64xf32>
    %305 = math.exp %304 : vector<8x64xf32>
    %cst_65 = arith.constant 1.000000e+00 : f32
    %306 = vector.broadcast %cst_65 : f32 to vector<8x64xf32>
    %307 = arith.addf %306, %305 : vector<8x64xf32>
    %308 = arith.divf %306, %307 : vector<8x64xf32>
    %309 = vector.extract_strided_slice %308 {offsets = [0, 0], sizes = [8, 32], strides = [1, 1]} : vector<8x64xf32> to vector<8x32xf32>
    %310 = vector.extract_strided_slice %308 {offsets = [0, 32], sizes = [8, 32], strides = [1, 1]} : vector<8x64xf32> to vector<8x32xf32>
    %311 = vector.extract_strided_slice %299 {offsets = [0, 64], sizes = [8, 32], strides = [1, 1]} : vector<8x96xf32> to vector<8x32xf32>
    %312 = vector.extract_strided_slice %300 {offsets = [0, 64], sizes = [8, 32], strides = [1, 1]} : vector<8x96xf32> to vector<8x32xf32>
    %313 = arith.addf %312, %228 : vector<8x32xf32>
    %314 = arith.mulf %309, %313 : vector<8x32xf32>
    %315 = arith.addf %311, %314 : vector<8x32xf32>
    %316 = math.tanh %315 : vector<8x32xf32>
    %cst_66 = arith.constant 1.000000e+00 : f32
    %317 = vector.broadcast %cst_66 : f32 to vector<8x32xf32>
    %318 = arith.subf %317, %310 : vector<8x32xf32>
    %319 = arith.mulf %318, %316 : vector<8x32xf32>
    %320 = arith.mulf %310, %298 : vector<8x32xf32>
    %321 = arith.addf %319, %320 : vector<8x32xf32>
    %322 = vector.extract_strided_slice %224 {offsets = [32, 0], sizes = [8, 96], strides = [1, 1]} : vector<64x96xf32> to vector<8x96xf32>
    %cst_67 = arith.constant dense<0.000000e+00> : vector<8x96xf32>
    %323 = tpu.matmul %321, %225, %cst_67 {dimension_numbers = #tpu.dot_dimension_numbers<[1], [0], [0], [1], [0, 0, 1, 1], [], []>} : vector<8x32xf32>, vector<32x96xf32>, vector<8x96xf32> -> vector<8x96xf32>
    %324 = vector.extract_strided_slice %322 {offsets = [0, 0], sizes = [8, 64], strides = [1, 1]} : vector<8x96xf32> to vector<8x64xf32>
    %325 = vector.extract_strided_slice %323 {offsets = [0, 0], sizes = [8, 64], strides = [1, 1]} : vector<8x96xf32> to vector<8x64xf32>
    %326 = arith.addf %324, %325 : vector<8x64xf32>
    %327 = arith.negf %326 : vector<8x64xf32>
    %328 = math.exp %327 : vector<8x64xf32>
    %cst_68 = arith.constant 1.000000e+00 : f32
    %329 = vector.broadcast %cst_68 : f32 to vector<8x64xf32>
    %330 = arith.addf %329, %328 : vector<8x64xf32>
    %331 = arith.divf %329, %330 : vector<8x64xf32>
    %332 = vector.extract_strided_slice %331 {offsets = [0, 0], sizes = [8, 32], strides = [1, 1]} : vector<8x64xf32> to vector<8x32xf32>
    %333 = vector.extract_strided_slice %331 {offsets = [0, 32], sizes = [8, 32], strides = [1, 1]} : vector<8x64xf32> to vector<8x32xf32>
    %334 = vector.extract_strided_slice %322 {offsets = [0, 64], sizes = [8, 32], strides = [1, 1]} : vector<8x96xf32> to vector<8x32xf32>
    %335 = vector.extract_strided_slice %323 {offsets = [0, 64], sizes = [8, 32], strides = [1, 1]} : vector<8x96xf32> to vector<8x32xf32>
    %336 = arith.addf %335, %228 : vector<8x32xf32>
    %337 = arith.mulf %332, %336 : vector<8x32xf32>
    %338 = arith.addf %334, %337 : vector<8x32xf32>
    %339 = math.tanh %338 : vector<8x32xf32>
    %cst_69 = arith.constant 1.000000e+00 : f32
    %340 = vector.broadcast %cst_69 : f32 to vector<8x32xf32>
    %341 = arith.subf %340, %333 : vector<8x32xf32>
    %342 = arith.mulf %341, %339 : vector<8x32xf32>
    %343 = arith.mulf %333, %321 : vector<8x32xf32>
    %344 = arith.addf %342, %343 : vector<8x32xf32>
    %345 = vector.extract_strided_slice %224 {offsets = [40, 0], sizes = [8, 96], strides = [1, 1]} : vector<64x96xf32> to vector<8x96xf32>
    %cst_70 = arith.constant dense<0.000000e+00> : vector<8x96xf32>
    %346 = tpu.matmul %344, %225, %cst_70 {dimension_numbers = #tpu.dot_dimension_numbers<[1], [0], [0], [1], [0, 0, 1, 1], [], []>} : vector<8x32xf32>, vector<32x96xf32>, vector<8x96xf32> -> vector<8x96xf32>
    %347 = vector.extract_strided_slice %345 {offsets = [0, 0], sizes = [8, 64], strides = [1, 1]} : vector<8x96xf32> to vector<8x64xf32>
    %348 = vector.extract_strided_slice %346 {offsets = [0, 0], sizes = [8, 64], strides = [1, 1]} : vector<8x96xf32> to vector<8x64xf32>
    %349 = arith.addf %347, %348 : vector<8x64xf32>
    %350 = arith.negf %349 : vector<8x64xf32>
    %351 = math.exp %350 : vector<8x64xf32>
    %cst_71 = arith.constant 1.000000e+00 : f32
    %352 = vector.broadcast %cst_71 : f32 to vector<8x64xf32>
    %353 = arith.addf %352, %351 : vector<8x64xf32>
    %354 = arith.divf %352, %353 : vector<8x64xf32>
    %355 = vector.extract_strided_slice %354 {offsets = [0, 0], sizes = [8, 32], strides = [1, 1]} : vector<8x64xf32> to vector<8x32xf32>
    %356 = vector.extract_strided_slice %354 {offsets = [0, 32], sizes = [8, 32], strides = [1, 1]} : vector<8x64xf32> to vector<8x32xf32>
    %357 = vector.extract_strided_slice %345 {offsets = [0, 64], sizes = [8, 32], strides = [1, 1]} : vector<8x96xf32> to vector<8x32xf32>
    %358 = vector.extract_strided_slice %346 {offsets = [0, 64], sizes = [8, 32], strides = [1, 1]} : vector<8x96xf32> to vector<8x32xf32>
    %359 = arith.addf %358, %228 : vector<8x32xf32>
    %360 = arith.mulf %355, %359 : vector<8x32xf32>
    %361 = arith.addf %357, %360 : vector<8x32xf32>
    %362 = math.tanh %361 : vector<8x32xf32>
    %cst_72 = arith.constant 1.000000e+00 : f32
    %363 = vector.broadcast %cst_72 : f32 to vector<8x32xf32>
    %364 = arith.subf %363, %356 : vector<8x32xf32>
    %365 = arith.mulf %364, %362 : vector<8x32xf32>
    %366 = arith.mulf %356, %344 : vector<8x32xf32>
    %367 = arith.addf %365, %366 : vector<8x32xf32>
    %368 = vector.extract_strided_slice %224 {offsets = [48, 0], sizes = [8, 96], strides = [1, 1]} : vector<64x96xf32> to vector<8x96xf32>
    %cst_73 = arith.constant dense<0.000000e+00> : vector<8x96xf32>
    %369 = tpu.matmul %367, %225, %cst_73 {dimension_numbers = #tpu.dot_dimension_numbers<[1], [0], [0], [1], [0, 0, 1, 1], [], []>} : vector<8x32xf32>, vector<32x96xf32>, vector<8x96xf32> -> vector<8x96xf32>
    %370 = vector.extract_strided_slice %368 {offsets = [0, 0], sizes = [8, 64], strides = [1, 1]} : vector<8x96xf32> to vector<8x64xf32>
    %371 = vector.extract_strided_slice %369 {offsets = [0, 0], sizes = [8, 64], strides = [1, 1]} : vector<8x96xf32> to vector<8x64xf32>
    %372 = arith.addf %370, %371 : vector<8x64xf32>
    %373 = arith.negf %372 : vector<8x64xf32>
    %374 = math.exp %373 : vector<8x64xf32>
    %cst_74 = arith.constant 1.000000e+00 : f32
    %375 = vector.broadcast %cst_74 : f32 to vector<8x64xf32>
    %376 = arith.addf %375, %374 : vector<8x64xf32>
    %377 = arith.divf %375, %376 : vector<8x64xf32>
    %378 = vector.extract_strided_slice %377 {offsets = [0, 0], sizes = [8, 32], strides = [1, 1]} : vector<8x64xf32> to vector<8x32xf32>
    %379 = vector.extract_strided_slice %377 {offsets = [0, 32], sizes = [8, 32], strides = [1, 1]} : vector<8x64xf32> to vector<8x32xf32>
    %380 = vector.extract_strided_slice %368 {offsets = [0, 64], sizes = [8, 32], strides = [1, 1]} : vector<8x96xf32> to vector<8x32xf32>
    %381 = vector.extract_strided_slice %369 {offsets = [0, 64], sizes = [8, 32], strides = [1, 1]} : vector<8x96xf32> to vector<8x32xf32>
    %382 = arith.addf %381, %228 : vector<8x32xf32>
    %383 = arith.mulf %378, %382 : vector<8x32xf32>
    %384 = arith.addf %380, %383 : vector<8x32xf32>
    %385 = math.tanh %384 : vector<8x32xf32>
    %cst_75 = arith.constant 1.000000e+00 : f32
    %386 = vector.broadcast %cst_75 : f32 to vector<8x32xf32>
    %387 = arith.subf %386, %379 : vector<8x32xf32>
    %388 = arith.mulf %387, %385 : vector<8x32xf32>
    %389 = arith.mulf %379, %367 : vector<8x32xf32>
    %390 = arith.addf %388, %389 : vector<8x32xf32>
    %391 = vector.extract_strided_slice %224 {offsets = [56, 0], sizes = [8, 96], strides = [1, 1]} : vector<64x96xf32> to vector<8x96xf32>
    %cst_76 = arith.constant dense<0.000000e+00> : vector<8x96xf32>
    %392 = tpu.matmul %390, %225, %cst_76 {dimension_numbers = #tpu.dot_dimension_numbers<[1], [0], [0], [1], [0, 0, 1, 1], [], []>} : vector<8x32xf32>, vector<32x96xf32>, vector<8x96xf32> -> vector<8x96xf32>
    %393 = vector.extract_strided_slice %391 {offsets = [0, 0], sizes = [8, 64], strides = [1, 1]} : vector<8x96xf32> to vector<8x64xf32>
    %394 = vector.extract_strided_slice %392 {offsets = [0, 0], sizes = [8, 64], strides = [1, 1]} : vector<8x96xf32> to vector<8x64xf32>
    %395 = arith.addf %393, %394 : vector<8x64xf32>
    %396 = arith.negf %395 : vector<8x64xf32>
    %397 = math.exp %396 : vector<8x64xf32>
    %cst_77 = arith.constant 1.000000e+00 : f32
    %398 = vector.broadcast %cst_77 : f32 to vector<8x64xf32>
    %399 = arith.addf %398, %397 : vector<8x64xf32>
    %400 = arith.divf %398, %399 : vector<8x64xf32>
    %401 = vector.extract_strided_slice %400 {offsets = [0, 0], sizes = [8, 32], strides = [1, 1]} : vector<8x64xf32> to vector<8x32xf32>
    %402 = vector.extract_strided_slice %400 {offsets = [0, 32], sizes = [8, 32], strides = [1, 1]} : vector<8x64xf32> to vector<8x32xf32>
    %403 = vector.extract_strided_slice %391 {offsets = [0, 64], sizes = [8, 32], strides = [1, 1]} : vector<8x96xf32> to vector<8x32xf32>
    %404 = vector.extract_strided_slice %392 {offsets = [0, 64], sizes = [8, 32], strides = [1, 1]} : vector<8x96xf32> to vector<8x32xf32>
    %405 = arith.addf %404, %228 : vector<8x32xf32>
    %406 = arith.mulf %401, %405 : vector<8x32xf32>
    %407 = arith.addf %403, %406 : vector<8x32xf32>
    %408 = math.tanh %407 : vector<8x32xf32>
    %cst_78 = arith.constant 1.000000e+00 : f32
    %409 = vector.broadcast %cst_78 : f32 to vector<8x32xf32>
    %410 = arith.subf %409, %402 : vector<8x32xf32>
    %411 = arith.mulf %410, %408 : vector<8x32xf32>
    %412 = arith.mulf %402, %390 : vector<8x32xf32>
    %413 = arith.addf %411, %412 : vector<8x32xf32>
    %c464 = arith.constant 464 : index
    %c0_79 = arith.constant 0 : index
    %414 = vector.load %arg3[%c464, %c0_79] : memref<800x128xf32, #tpu.memory_space<vmem>>, vector<32x64xf32>
    %cst_80 = arith.constant dense<0.000000e+00> : vector<8x64xf32>
    %415 = tpu.matmul %413, %414, %cst_80 {dimension_numbers = #tpu.dot_dimension_numbers<[1], [0], [0], [1], [0, 0, 1, 1], [], []>} : vector<8x32xf32>, vector<32x64xf32>, vector<8x64xf32> -> vector<8x64xf32>
    %c496 = arith.constant 496 : index
    %c0_81 = arith.constant 0 : index
    %416 = vector.load %arg3[%c496, %c0_81] : memref<800x128xf32, #tpu.memory_space<vmem>>, vector<1x64xf32>
    %417 = vector.broadcast %416 : vector<1x64xf32> to vector<8x64xf32>
    %418 = arith.addf %415, %417 : vector<8x64xf32>
    %cst_82 = arith.constant 0.000000e+00 : f32
    %419 = vector.broadcast %cst_82 : f32 to vector<8x64xf32>
    %420 = arith.maximumf %418, %419 : vector<8x64xf32>
    %c504 = arith.constant 504 : index
    %c0_83 = arith.constant 0 : index
    %421 = vector.load %arg3[%c504, %c0_83] : memref<800x128xf32, #tpu.memory_space<vmem>>, vector<64x64xf32>
    %cst_84 = arith.constant dense<0.000000e+00> : vector<8x64xf32>
    %422 = tpu.matmul %420, %421, %cst_84 {dimension_numbers = #tpu.dot_dimension_numbers<[1], [0], [0], [1], [0, 0, 1, 1], [], []>} : vector<8x64xf32>, vector<64x64xf32>, vector<8x64xf32> -> vector<8x64xf32>
    %c568 = arith.constant 568 : index
    %c0_85 = arith.constant 0 : index
    %423 = vector.load %arg3[%c568, %c0_85] : memref<800x128xf32, #tpu.memory_space<vmem>>, vector<1x64xf32>
    %424 = vector.broadcast %423 : vector<1x64xf32> to vector<8x64xf32>
    %425 = arith.addf %422, %424 : vector<8x64xf32>
    %cst_86 = arith.constant 0.000000e+00 : f32
    %426 = vector.broadcast %cst_86 : f32 to vector<8x64xf32>
    %427 = arith.maximumf %425, %426 : vector<8x64xf32>
    %c576 = arith.constant 576 : index
    %c0_87 = arith.constant 0 : index
    %428 = vector.load %arg3[%c576, %c0_87] : memref<800x128xf32, #tpu.memory_space<vmem>>, vector<64x64xf32>
    %cst_88 = arith.constant dense<0.000000e+00> : vector<8x64xf32>
    %429 = tpu.matmul %420, %428, %cst_88 {dimension_numbers = #tpu.dot_dimension_numbers<[1], [0], [0], [1], [0, 0, 1, 1], [], []>} : vector<8x64xf32>, vector<64x64xf32>, vector<8x64xf32> -> vector<8x64xf32>
    %c640 = arith.constant 640 : index
    %c0_89 = arith.constant 0 : index
    %430 = vector.load %arg3[%c640, %c0_89] : memref<800x128xf32, #tpu.memory_space<vmem>>, vector<1x64xf32>
    %431 = vector.broadcast %430 : vector<1x64xf32> to vector<8x64xf32>
    %432 = arith.addf %429, %431 : vector<8x64xf32>
    %cst_90 = arith.constant 0.000000e+00 : f32
    %433 = vector.broadcast %cst_90 : f32 to vector<8x64xf32>
    %434 = arith.maximumf %432, %433 : vector<8x64xf32>
    %c648 = arith.constant 648 : index
    %c0_91 = arith.constant 0 : index
    %435 = vector.load %arg3[%c648, %c0_91] : memref<800x128xf32, #tpu.memory_space<vmem>>, vector<64x16xf32>
    %cst_92 = arith.constant dense<0.000000e+00> : vector<8x16xf32>
    %436 = tpu.matmul %427, %435, %cst_92 {dimension_numbers = #tpu.dot_dimension_numbers<[1], [0], [0], [1], [0, 0, 1, 1], [], []>} : vector<8x64xf32>, vector<64x16xf32>, vector<8x16xf32> -> vector<8x16xf32>
    %c712 = arith.constant 712 : index
    %c0_93 = arith.constant 0 : index
    %437 = vector.load %arg3[%c712, %c0_93] : memref<800x128xf32, #tpu.memory_space<vmem>>, vector<64x16xf32>
    %cst_94 = arith.constant dense<0.000000e+00> : vector<8x16xf32>
    %438 = tpu.matmul %434, %437, %cst_94 {dimension_numbers = #tpu.dot_dimension_numbers<[1], [0], [0], [1], [0, 0, 1, 1], [], []>} : vector<8x64xf32>, vector<64x16xf32>, vector<8x16xf32> -> vector<8x16xf32>
    %439 = arith.addf %436, %438 : vector<8x16xf32>
    %c776 = arith.constant 776 : index
    %c0_95 = arith.constant 0 : index
    %440 = vector.load %arg3[%c776, %c0_95] : memref<800x128xf32, #tpu.memory_space<vmem>>, vector<1x16xf32>
    %441 = vector.broadcast %440 : vector<1x16xf32> to vector<8x16xf32>
    %442 = arith.addf %439, %441 : vector<8x16xf32>
    %cst_96 = arith.constant dense<0xFF800000> : vector<8xf32>
    %443 = vector.multi_reduction <maximumf>, %442, %cst_96 [1] : vector<8x16xf32> to vector<8xf32>
    %444 = vector.shape_cast %443 : vector<8xf32> to vector<8x1xf32>
    %445 = vector.broadcast %444 : vector<8x1xf32> to vector<8x16xf32>
    %446 = arith.subf %442, %445 : vector<8x16xf32>
    %447 = math.exp %446 : vector<8x16xf32>
    %c784 = arith.constant 784 : index
    %c0_97 = arith.constant 0 : index
    %448 = vector.load %arg3[%c784, %c0_97] : memref<800x128xf32, #tpu.memory_space<vmem>>, vector<16x16xf32>
    %cst_98 = arith.constant dense<0.000000e+00> : vector<8x16xf32>
    %449 = tpu.matmul %447, %448, %cst_98 {dimension_numbers = #tpu.dot_dimension_numbers<[1], [0], [0], [1], [0, 0, 1, 1], [], []>} : vector<8x16xf32>, vector<16x16xf32>, vector<8x16xf32> -> vector<8x16xf32>
    %450 = arith.divf %447, %449 : vector<8x16xf32>
    %451 = vector.extract_strided_slice %450 {offsets = [0, 0], sizes = [2, 16], strides = [1, 1]} : vector<8x16xf32> to vector<2x16xf32>
    %c0_99 = arith.constant 0 : index
    %c0_100 = arith.constant 0 : index
    %452 = vector.load %arg4[%c0_99, %c0_100] : memref<2x16xf32, #tpu.memory_space<vmem>>, vector<2x16xf32>
    tpu.vector_store %arg4[%c0_99, %c0_100], %451 {strides = array<i32>} : memref<2x16xf32, #tpu.memory_space<vmem>>, vector<2x16xf32>,
    return
  }
}

</mosaic_0001>

<llo_original>
// kernel: _lambda_.1
$region0: #{_lambda_.1}
  #allocation0 [shape = 'u32[]', space=smem, size = 0x4, offset = 0x4, fixed_abs, tag = 'smem constant byte address 0x4 - core index']
  #allocation1 [shape = 'u32[144,128]{1,0:T(1,128)}', space=vmem, size = 0x12000, scoped, tag = 'internal scratch']
  %s0 = inlined_call_operand.vmem [shape: f32[16,64], index: 0, kind: input, shape index: {}]
  %s1 = inlined_call_operand.vmem [shape: f32[16,32], index: 1, kind: input, shape index: {}]
  %s2 = inlined_call_operand.hbm [shape: f32[72,768], index: 2, kind: input, shape index: {}]
  %s3 = inlined_call_operand.hbm [shape: f32[800,128], index: 3, kind: input, shape index: {}]
  %s4 = inlined_call_operand.vmem [shape: f32[2,16], index: 4, kind: output, shape index: {}]
  %s5 = sld [smem:[#allocation0]]
  $region34: #{_lambda_.1} parent=0
    _
  %s7 = ssub.s32 1, %s5
  %s8 = scalar_select 0, %s7, %s5
  $region1: #{_lambda_.1} parent=0
    #allocation2 [shape = 'u8[221184]{0}', space=vmem, size = 0x36000, scoped, tag = 'input window, operand 2, single buffered']
    #allocation3 [shape = 's32[1]{0}', space=sflag, size = 0x4, scoped, tag = 'scoped memory for _lambda_.1']
    #allocation4 [shape = 'u8[409600]{0}', space=vmem, size = 0x64000, scoped, tag = 'input window, operand 3, single buffered']
    #allocation5 [shape = 's32[1]{0}', space=sflag, size = 0x4, scoped, tag = 'scoped memory for _lambda_.1']
    %9 = vsyncpa [#allocation3], 0
    %10 = vsyncpa [#allocation5], 0
    // Predicated region
    $region2: #{_lambda_.1} parent=1 // pred_check
      _
    $region3: #{_lambda_.1} parent=1 // pred_check_branch
      %12 = sbr.rel (0) target = $region5
    $region4: #{_lambda_.1} parent=1 // pred_region
      _
    $region5: #{_lambda_.1} parent=1 // pred_fallthru
      _
    // Predicated region
    $region6: #{_lambda_.1} parent=1 // pred_check
      _
    $region7: #{_lambda_.1} parent=1 // pred_check_branch
      %14 = sbr.rel (0) target = $region9
    $region8: #{_lambda_.1} parent=1 // pred_region
      _
    $region9: #{_lambda_.1} parent=1 // pred_fallthru
      _
    // Predicated region
    $region10: #{_lambda_.1} parent=1 // pred_check
      _
    $region11: #{_lambda_.1} parent=1 // pred_check_branch
      %16 = sbr.rel (0) target = $region13
    $region12: #{_lambda_.1} parent=1 // pred_region
      %s18 = ssub.s32 6912, 6912
      %19 = vsyncadd [#allocation3], %s18
      %s20 = sshll.u32 [#allocation2], 4
      %s21 = int_to_ptr.vmem [resolvable:$true] %s20
      %26 = dma.hbm_to_vmem [thread:$0]  %s2, 6912, %s21, [#allocation3], 768, 768, 48
    $region13: #{_lambda_.1} parent=1 // pred_fallthru
      _
    // Predicated region
    $region14: #{_lambda_.1} parent=1 // pred_check
      _
    $region15: #{_lambda_.1} parent=1 // pred_check_branch
      %28 = sbr.rel (0) target = $region17
    $region16: #{_lambda_.1} parent=1 // pred_region
      %s30 = ssub.s32 12800, 12800
      %31 = vsyncadd [#allocation5], %s30
      %s32 = sshll.u32 [#allocation4], 4
      %s33 = int_to_ptr.vmem [resolvable:$true] %s32
      %38 = dma.hbm_to_vmem [thread:$0]  %s3, 12800, %s33, [#allocation5], 128, 128, 8
    $region17: #{_lambda_.1} parent=1 // pred_fallthru
      _
    // Predicated region
    $region18: #{_lambda_.1} parent=1 // pred_check
      _
    $region19: #{_lambda_.1} parent=1 // pred_check_branch
      %40 = sbr.rel (0) target = $region21
    $region20: #{_lambda_.1} parent=1 // pred_region
      %41 = dma.done [#allocation3], 6912
    $region21: #{_lambda_.1} parent=1 // pred_fallthru
      _
    // Predicated region
    $region22: #{_lambda_.1} parent=1 // pred_check
      _
    $region23: #{_lambda_.1} parent=1 // pred_check_branch
      %43 = sbr.rel (0) target = $region25
    $region24: #{_lambda_.1} parent=1 // pred_region
      %44 = dma.done [#allocation5], 12800
    $region25: #{_lambda_.1} parent=1 // pred_fallthru
      _
    %v45 = vld [vmem:[%s0] sm:$0xff]
    %v46 = vld [vmem:[%s0 + $0x8] sm:$0xff]
    %v47 = vld [vmem:[#allocation2] sm:$0xff]
    %v48 = vld [vmem:[#allocation2 + $0x8] sm:$0xff]
    %v49 = vld [vmem:[#allocation2 + $0x10] sm:$0xff]
    %v50 = vld [vmem:[#allocation2 + $0x18] sm:$0xff]
    %v51 = vld [vmem:[#allocation2 + $0x20] sm:$0xff]
    %v52 = vld [vmem:[#allocation2 + $0x28] sm:$0xff]
    %v53 = vld [vmem:[#allocation2 + $0x30] sm:$0xff]
    %v54 = vld [vmem:[#allocation2 + $0x38] sm:$0xff]
    %v55 = vld [vmem:[#allocation2 + $0x40] sm:$0xff]
    %v56 = vld [vmem:[#allocation2 + $0x48] sm:$0xff]
    %v57 = vld [vmem:[#allocation2 + $0x50] sm:$0xff]
    %v58 = vld [vmem:[#allocation2 + $0x58] sm:$0xff]
    %v59 = vld [vmem:[#allocation2 + $0x60] sm:$0xff]
    %v60 = vld [vmem:[#allocation2 + $0x68] sm:$0xff]
    %v61 = vld [vmem:[#allocation2 + $0x70] sm:$0xff]
    %v62 = vld [vmem:[#allocation2 + $0x78] sm:$0xff]
    %v63 = vld [vmem:[#allocation2 + $0x80] sm:$0xff]
    %v64 = vld [vmem:[#allocation2 + $0x88] sm:$0xff]
    %v65 = vld [vmem:[#allocation2 + $0x90] sm:$0xff]
    %v66 = vld [vmem:[#allocation2 + $0x98] sm:$0xff]
    %v67 = vld [vmem:[#allocation2 + $0xa0] sm:$0xff]
    %v68 = vld [vmem:[#allocation2 + $0xa8] sm:$0xff]
    %v69 = vld [vmem:[#allocation2 + $0xb0] sm:$0xff]
    %v70 = vld [vmem:[#allocation2 + $0xb8] sm:$0xff]
    %v71 = vld [vmem:[#allocation2 + $0xc0] sm:$0xff]
    %v72 = vld [vmem:[#allocation2 + $0xc8] sm:$0xff]
    %v73 = vld [vmem:[#allocation2 + $0xd0] sm:$0xff]
    %v74 = vld [vmem:[#allocation2 + $0xd8] sm:$0xff]
    %v75 = vld [vmem:[#allocation2 + $0xe0] sm:$0xff]
    %v76 = vld [vmem:[#allocation2 + $0xe8] sm:$0xff]
    %v77 = vld [vmem:[#allocation2 + $0xf0] sm:$0xff]
    %v78 = vld [vmem:[#allocation2 + $0xf8] sm:$0xff]
    %v79 = vld [vmem:[#allocation2 + $0x100] sm:$0xff]
    %v80 = vld [vmem:[#allocation2 + $0x108] sm:$0xff]
    %v81 = vld [vmem:[#allocation2 + $0x110] sm:$0xff]
    %v82 = vld [vmem:[#allocation2 + $0x118] sm:$0xff]
    %v83 = vld [vmem:[#allocation2 + $0x120] sm:$0xff]
    %v84 = vld [vmem:[#allocation2 + $0x128] sm:$0xff]
    %v85 = vld [vmem:[#allocation2 + $0x130] sm:$0xff]
    %v86 = vld [vmem:[#allocation2 + $0x138] sm:$0xff]
    %v87 = vld [vmem:[#allocation2 + $0x140] sm:$0xff]
    %v88 = vld [vmem:[#allocation2 + $0x148] sm:$0xff]
    %v89 = vld [vmem:[#allocation2 + $0x150] sm:$0xff]
    %v90 = vld [vmem:[#allocation2 + $0x158] sm:$0xff]
    %v91 = vld [vmem:[#allocation2 + $0x160] sm:$0xff]
    %v92 = vld [vmem:[#allocation2 + $0x168] sm:$0xff]
    %v93 = vld [vmem:[#allocation2 + $0x170] sm:$0xff]
    %v94 = vld [vmem:[#allocation2 + $0x178] sm:$0xff]
    %s95 = scalar_lea.vmem [#allocation2], 384
    %v96 = vld [vmem:[%s95] ss:$8 sm:$0xf]
    %v97 = vld [vmem:[%s95] ss:$8 sm:$0x30]
    %v98 = vor.u32 %v96, %v97
    %v100 = vlaneseq
    %v101 = vshrl.u32 %v100, 7
    %v102 = vsub.s32 0, %v101
    %v103 = vrot.slane %v98, %v102
    %v104 = vlaneseq
    %v105 = vshrl.u32 %v104, 7
    %v106 = vsub.s32 1, %v105
    %v107 = vrot.slane %v98, %v106
    %v108 = vlaneseq
    %v109 = vshrl.u32 %v108, 7
    %v110 = vsub.s32 2, %v109
    %v111 = vrot.slane %v98, %v110
    %v112 = vlaneseq
    %v113 = vshrl.u32 %v112, 7
    %v114 = vsub.s32 3, %v113
    %v115 = vrot.slane %v98, %v114
    %v116 = vlaneseq
    %v117 = vshrl.u32 %v116, 7
    %v118 = vsub.s32 4, %v117
    %v119 = vrot.slane %v98, %v118
    %v120 = vlaneseq
    %v121 = vshrl.u32 %v120, 7
    %v122 = vsub.s32 5, %v121
    %v123 = vrot.slane %v98, %v122
    %vm130 = vcmask 523264
    %v132 = vsel %vm130, %v45, 0
    %v135 = vsel %vm130, %v46, 0
    %137 = vmatprep.subr.mxu0 0.0
    %138 = vmatpush1.msra.mxu0 0.0
    %139 = vmatprep.subr.mxu0 0.0
    %140 = vmatpush1.msra.mxu0 0.0
    %141 = vmatprep.subr.mxu0 0.0
    %142 = vmatpush1.msra.mxu0 0.0
    %143 = vmatprep.subr.mxu0 0.0
    %144 = vmatpush1.msra.mxu0 0.0
    %145 = vmatprep.subr.mxu0 0.0
    %146 = vmatpush1.msra.mxu0 0.0
    %147 = vmatprep.subr.mxu0 0.0
    %148 = vmatpush1.msra.mxu0 0.0
    %149 = vmatprep.subr.mxu0 0.0
    %150 = vmatpush1.msra.mxu0 0.0
    %151 = vmatprep.subr.mxu0 0.0
    %152 = vmatpush1.msra.mxu0 0.0
    %153 = vmatprep.subr.mxu0 %v90
    %154 = vmatpush1.msra.mxu0 %v89
    %155 = vmatprep.subr.mxu0 %v84
    %156 = vmatpush1.msra.mxu0 %v83
    %157 = vmatprep.subr.mxu0 %v78
    %158 = vmatpush1.msra.mxu0 %v77
    %159 = vmatprep.subr.mxu0 %v72
    %160 = vmatpush1.msra.mxu0 %v71
    %161 = vmatprep.subr.mxu0 %v66
    %162 = vmatpush1.msra.mxu0 %v65
    %163 = vmatprep.subr.mxu0 %v60
    %164 = vmatpush1.msra.mxu0 %v59
    %165 = vmatprep.subr.mxu0 %v54
    %166 = vmatpush1.msra.mxu0 %v53
    %167 = vmatprep.subr.mxu0 %v48
    %168 = vmatpush1.msra.mxu0 %v47
    %169 = vmatprep.subr.mxu0 0.0
    %170 = vmatpush2.msra.mxu0 0.0
    %171 = vmatprep.subr.mxu0 0.0
    %172 = vmatpush2.msra.mxu0 0.0
    %173 = vmatprep.subr.mxu0 0.0
    %174 = vmatpush2.msra.mxu0 0.0
    %175 = vmatprep.subr.mxu0 0.0
    %176 = vmatpush2.msra.mxu0 0.0
    %177 = vmatprep.subr.mxu0 0.0
    %178 = vmatpush2.msra.mxu0 0.0
    %179 = vmatprep.subr.mxu0 0.0
    %180 = vmatpush2.msra.mxu0 0.0
    %181 = vmatprep.subr.mxu0 0.0
    %182 = vmatpush2.msra.mxu0 0.0
    %183 = vmatprep.subr.mxu0 0.0
    %184 = vmatpush2.msra.mxu0 0.0
    %185 = vmatprep.subr.mxu0 0.0
    %186 = vmatpush2.msra.mxu0 0.0
    %187 = vmatprep.subr.mxu0 0.0
    %188 = vmatpush2.msra.mxu0 0.0
    %189 = vmatprep.subr.mxu0 0.0
    %190 = vmatpush2.msra.mxu0 0.0
    %191 = vmatprep.subr.mxu0 0.0
    %192 = vmatpush2.msra.mxu0 0.0
    %193 = vmatprep.subr.mxu0 0.0
    %194 = vmatpush2.msra.mxu0 0.0
    %195 = vmatprep.subr.mxu0 0.0
    %196 = vmatpush2.msra.mxu0 0.0
    %197 = vmatprep.subr.mxu0 0.0
    %198 = vmatpush2.msra.mxu0 0.0
    %199 = vmatprep.subr.mxu0 0.0
    %200 = vmatpush2.msra.mxu0 0.0
    %201 = vmatprep.mubr.f32.mxu0 0.0
    %202 = vmatmul.mubr.f32.gmra.mxu0 %v132
    %v203 = vpop.f32.mrf.mxu0
    %v204 = vadd.f32 %v103, %v203
    %v205 = vpop.f32.mrf.mxu0
    %v206 = vadd.f32 %v107, %v205
    %207 = vmatprep.mubr.f32.mxu0 0.0
    %208 = vmatmul.mubr.f32.gmra.mxu0 %v135
    %v209 = vpop.f32.mrf.mxu0
    %v210 = vadd.f32 %v103, %v209
    %v211 = vpop.f32.mrf.mxu0
    %v212 = vadd.f32 %v107, %v211
    %213 = vdwg.mxu0
    %214 = vmatprep.subr.mxu0 0.0
    %215 = vmatpush1.msra.mxu0 0.0
    %216 = vmatprep.subr.mxu0 0.0
    %217 = vmatpush1.msra.mxu0 0.0
    %218 = vmatprep.subr.mxu0 0.0
    %219 = vmatpush1.msra.mxu0 0.0
    %220 = vmatprep.subr.mxu0 0.0
    %221 = vmatpush1.msra.mxu0 0.0
    %222 = vmatprep.subr.mxu0 0.0
    %223 = vmatpush1.msra.mxu0 0.0
    %224 = vmatprep.subr.mxu0 0.0
    %225 = vmatpush1.msra.mxu0 0.0
    %226 = vmatprep.subr.mxu0 0.0
    %227 = vmatpush1.msra.mxu0 0.0
    %228 = vmatprep.subr.mxu0 0.0
    %229 = vmatpush1.msra.mxu0 0.0
    %230 = vmatprep.subr.mxu0 %v92
    %231 = vmatpush1.msra.mxu0 %v91
    %232 = vmatprep.subr.mxu0 %v86
    %233 = vmatpush1.msra.mxu0 %v85
    %234 = vmatprep.subr.mxu0 %v80
    %235 = vmatpush1.msra.mxu0 %v79
    %236 = vmatprep.subr.mxu0 %v74
    %237 = vmatpush1.msra.mxu0 %v73
    %238 = vmatprep.subr.mxu0 %v68
    %239 = vmatpush1.msra.mxu0 %v67
    %240 = vmatprep.subr.mxu0 %v62
    %241 = vmatpush1.msra.mxu0 %v61
    %242 = vmatprep.subr.mxu0 %v56
    %243 = vmatpush1.msra.mxu0 %v55
    %244 = vmatprep.subr.mxu0 %v50
    %245 = vmatpush1.msra.mxu0 %v49
    %246 = vmatprep.subr.mxu0 0.0
    %247 = vmatpush2.msra.mxu0 0.0
    %248 = vmatprep.subr.mxu0 0.0
    %249 = vmatpush2.msra.mxu0 0.0
    %250 = vmatprep.subr.mxu0 0.0
    %251 = vmatpush2.msra.mxu0 0.0
    %252 = vmatprep.subr.mxu0 0.0
    %253 = vmatpush2.msra.mxu0 0.0
    %254 = vmatprep.subr.mxu0 0.0
    %255 = vmatpush2.msra.mxu0 0.0
    %256 = vmatprep.subr.mxu0 0.0
    %257 = vmatpush2.msra.mxu0 0.0
    %258 = vmatprep.subr.mxu0 0.0
    %259 = vmatpush2.msra.mxu0 0.0
    %260 = vmatprep.subr.mxu0 0.0
    %261 = vmatpush2.msra.mxu0 0.0
    %262 = vmatprep.subr.mxu0 0.0
    %263 = vmatpush2.msra.mxu0 0.0
    %264 = vmatprep.subr.mxu0 0.0
    %265 = vmatpush2.msra.mxu0 0.0
    %266 = vmatprep.subr.mxu0 0.0
    %267 = vmatpush2.msra.mxu0 0.0
    %268 = vmatprep.subr.mxu0 0.0
    %269 = vmatpush2.msra.mxu0 0.0
    %270 = vmatprep.subr.mxu0 0.0
    %271 = vmatpush2.msra.mxu0 0.0
    %272 = vmatprep.subr.mxu0 0.0
    %273 = vmatpush2.msra.mxu0 0.0
    %274 = vmatprep.subr.mxu0 0.0
    %275 = vmatpush2.msra.mxu0 0.0
    %276 = vmatprep.subr.mxu0 0.0
    %277 = vmatpush2.msra.mxu0 0.0
    %278 = vmatprep.mubr.f32.mxu0 0.0
    %279 = vmatmul.mubr.f32.gmra.mxu0 %v132
    %v280 = vpop.f32.mrf.mxu0
    %v281 = vadd.f32 %v111, %v280
    %v282 = vpop.f32.mrf.mxu0
    %v283 = vadd.f32 %v115, %v282
    %284 = vmatprep.mubr.f32.mxu0 0.0
    %285 = vmatmul.mubr.f32.gmra.mxu0 %v135
    %v286 = vpop.f32.mrf.mxu0
    %v287 = vadd.f32 %v111, %v286
    %v288 = vpop.f32.mrf.mxu0
    %v289 = vadd.f32 %v115, %v288
    %290 = vdwg.mxu0
    %291 = vmatprep.subr.mxu0 0.0
    %292 = vmatpush1.msra.mxu0 0.0
    %293 = vmatprep.subr.mxu0 0.0
    %294 = vmatpush1.msra.mxu0 0.0
    %295 = vmatprep.subr.mxu0 0.0
    %296 = vmatpush1.msra.mxu0 0.0
    %297 = vmatprep.subr.mxu0 0.0
    %298 = vmatpush1.msra.mxu0 0.0
    %299 = vmatprep.subr.mxu0 0.0
    %300 = vmatpush1.msra.mxu0 0.0
    %301 = vmatprep.subr.mxu0 0.0
    %302 = vmatpush1.msra.mxu0 0.0
    %303 = vmatprep.subr.mxu0 0.0
    %304 = vmatpush1.msra.mxu0 0.0
    %305 = vmatprep.subr.mxu0 0.0
    %306 = vmatpush1.msra.mxu0 0.0
    %307 = vmatprep.subr.mxu0 %v94
    %308 = vmatpush1.msra.mxu0 %v93
    %309 = vmatprep.subr.mxu0 %v88
    %310 = vmatpush1.msra.mxu0 %v87
    %311 = vmatprep.subr.mxu0 %v82
    %312 = vmatpush1.msra.mxu0 %v81
    %313 = vmatprep.subr.mxu0 %v76
    %314 = vmatpush1.msra.mxu0 %v75
    %315 = vmatprep.subr.mxu0 %v70
    %316 = vmatpush1.msra.mxu0 %v69
    %317 = vmatprep.subr.mxu0 %v64
    %318 = vmatpush1.msra.mxu0 %v63
    %319 = vmatprep.subr.mxu0 %v58
    %320 = vmatpush1.msra.mxu0 %v57
    %321 = vmatprep.subr.mxu0 %v52
    %322 = vmatpush1.msra.mxu0 %v51
    %323 = vmatprep.subr.mxu0 0.0
    %324 = vmatpush2.msra.mxu0 0.0
    %325 = vmatprep.subr.mxu0 0.0
    %326 = vmatpush2.msra.mxu0 0.0
    %327 = vmatprep.subr.mxu0 0.0
    %328 = vmatpush2.msra.mxu0 0.0
    %329 = vmatprep.subr.mxu0 0.0
    %330 = vmatpush2.msra.mxu0 0.0
    %331 = vmatprep.subr.mxu0 0.0
    %332 = vmatpush2.msra.mxu0 0.0
    %333 = vmatprep.subr.mxu0 0.0
    %334 = vmatpush2.msra.mxu0 0.0
    %335 = vmatprep.subr.mxu0 0.0
    %336 = vmatpush2.msra.mxu0 0.0
    %337 = vmatprep.subr.mxu0 0.0
    %338 = vmatpush2.msra.mxu0 0.0
    %339 = vmatprep.subr.mxu0 0.0
    %340 = vmatpush2.msra.mxu0 0.0
    %341 = vmatprep.subr.mxu0 0.0
    %342 = vmatpush2.msra.mxu0 0.0
    %343 = vmatprep.subr.mxu0 0.0
    %344 = vmatpush2.msra.mxu0 0.0
    %345 = vmatprep.subr.mxu0 0.0
    %346 = vmatpush2.msra.mxu0 0.0
    %347 = vmatprep.subr.mxu0 0.0
    %348 = vmatpush2.msra.mxu0 0.0
    %349 = vmatprep.subr.mxu0 0.0
    %350 = vmatpush2.msra.mxu0 0.0
    %351 = vmatprep.subr.mxu0 0.0
    %352 = vmatpush2.msra.mxu0 0.0
    %353 = vmatprep.subr.mxu0 0.0
    %354 = vmatpush2.msra.mxu0 0.0
    %355 = vmatprep.mubr.f32.mxu0 0.0
    %356 = vmatmul.mubr.f32.gmra.mxu0 %v132
    %v357 = vpop.f32.mrf.mxu0
    %v358 = vadd.f32 %v119, %v357
    %v359 = vpop.f32.mrf.mxu0
    %v360 = vadd.f32 %v123, %v359
    %361 = vmatprep.mubr.f32.mxu0 0.0
    %362 = vmatmul.mubr.f32.gmra.mxu0 %v135
    %v363 = vpop.f32.mrf.mxu0
    %v364 = vadd.f32 %v119, %v363
    %v365 = vpop.f32.mrf.mxu0
    %v366 = vadd.f32 %v123, %v365
    %367 = vdwg.mxu0
    %v368 = vld [vmem:[#allocation4] sm:$0xff]
    %v369 = vld [vmem:[#allocation4 + $0x8] sm:$0xff]
    %v370 = vld [vmem:[#allocation4 + $0x10] sm:$0xff]
    %v371 = vld [vmem:[#allocation4 + $0x18] sm:$0xff]
    %v372 = vld [vmem:[#allocation4 + $0x20] sm:$0x1]
    %v373 = vlaneseq
    %v374 = vshrl.u32 %v373, 7
    %v375 = vsub.s32 0, %v374
    %v376 = vrot.slane %v372, %v375
    %vm377 = vcmask 261120
    %v379 = vsel %vm377, 0.0, 0
    %381 = vmatprep.subr.mxu0 0.0
    %382 = vmatpush1.msra.mxu0 0.0
    %383 = vmatprep.subr.mxu0 0.0
    %384 = vmatpush1.msra.mxu0 0.0
    %385 = vmatprep.subr.mxu0 0.0
    %386 = vmatpush1.msra.mxu0 0.0
    %387 = vmatprep.subr.mxu0 0.0
    %388 = vmatpush1.msra.mxu0 0.0
    %389 = vmatprep.subr.mxu0 0.0
    %390 = vmatpush1.msra.mxu0 0.0
    %391 = vmatprep.subr.mxu0 0.0
    %392 = vmatpush1.msra.mxu0 0.0
    %393 = vmatprep.subr.mxu0 0.0
    %394 = vmatpush1.msra.mxu0 0.0
    %395 = vmatprep.subr.mxu0 0.0
    %396 = vmatpush1.msra.mxu0 0.0
    %397 = vmatprep.subr.mxu0 0.0
    %398 = vmatpush1.msra.mxu0 0.0
    %399 = vmatprep.subr.mxu0 0.0
    %400 = vmatpush1.msra.mxu0 0.0
    %401 = vmatprep.subr.mxu0 0.0
    %402 = vmatpush1.msra.mxu0 0.0
    %403 = vmatprep.subr.mxu0 0.0
    %404 = vmatpush1.msra.mxu0 0.0
    %405 = vmatprep.subr.mxu0 0.0
    %406 = vmatpush1.msra.mxu0 %v371
    %407 = vmatprep.subr.mxu0 0.0
    %408 = vmatpush1.msra.mxu0 %v370
    %409 = vmatprep.subr.mxu0 0.0
    %410 = vmatpush1.msra.mxu0 %v369
    %411 = vmatprep.subr.mxu0 0.0
    %412 = vmatpush1.msra.mxu0 %v368
    %413 = vmatprep.subr.mxu0 0.0
    %414 = vmatpush2.msra.mxu0 0.0
    %415 = vmatprep.subr.mxu0 0.0
    %416 = vmatpush2.msra.mxu0 0.0
    %417 = vmatprep.subr.mxu0 0.0
    %418 = vmatpush2.msra.mxu0 0.0
    %419 = vmatprep.subr.mxu0 0.0
    %420 = vmatpush2.msra.mxu0 0.0
    %421 = vmatprep.subr.mxu0 0.0
    %422 = vmatpush2.msra.mxu0 0.0
    %423 = vmatprep.subr.mxu0 0.0
    %424 = vmatpush2.msra.mxu0 0.0
    %425 = vmatprep.subr.mxu0 0.0
    %426 = vmatpush2.msra.mxu0 0.0
    %427 = vmatprep.subr.mxu0 0.0
    %428 = vmatpush2.msra.mxu0 0.0
    %429 = vmatprep.subr.mxu0 0.0
    %430 = vmatpush2.msra.mxu0 0.0
    %431 = vmatprep.subr.mxu0 0.0
    %432 = vmatpush2.msra.mxu0 0.0
    %433 = vmatprep.subr.mxu0 0.0
    %434 = vmatpush2.msra.mxu0 0.0
    %435 = vmatprep.subr.mxu0 0.0
    %436 = vmatpush2.msra.mxu0 0.0
    %437 = vmatprep.subr.mxu0 0.0
    %438 = vmatpush2.msra.mxu0 0.0
    %439 = vmatprep.subr.mxu0 0.0
    %440 = vmatpush2.msra.mxu0 0.0
    %441 = vmatprep.subr.mxu0 0.0
    %442 = vmatpush2.msra.mxu0 0.0
    %443 = vmatprep.subr.mxu0 0.0
    %444 = vmatpush2.msra.mxu0 0.0
    %445 = vmatprep.mubr.f32.mxu0 0.0
    %446 = vmatmul.mubr.f32.gmra.mxu0 %v379
    %v447 = vpop.f32.mrf.mxu0
    %v448 = vadd.f32 0.0, %v447
    %v449 = vpop.f32.mrf.mxu0
    %450 = vmatprep.mubr.f32.mxu0 0.0
    %451 = vmatmul.mubr.f32.gmra.mxu0 %v379
    %v452 = vpop.f32.mrf.mxu0
    %v453 = vadd.f32 0.0, %v452
    %v454 = vpop.f32.mrf.mxu0
    %455 = vdwg.mxu0
    %v456 = vadd.f32 %v204, %v448
    %v457 = vadd.f32 %v210, %v453
    %v458 = vxor.u32 %v456, 2147483648
    %v459 = vxor.u32 %v457, 2147483648
    %v460 = vmul.f32 %v458, 1.442695
    %v461 = vpow.pop %v460
    %v462 = vmul.f32 %v459, 1.442695
    %v463 = vpow.pop %v462
    %v464 = vadd.f32 %v461, 1.0
    %v465 = vadd.f32 %v463, 1.0
    %v466 = vrcp.pop %v464
    %v467 = vmul.f32 1.0, %v466
    %v468 = vrcp.pop %v465
    %v469 = vmul.f32 1.0, %v468
    %471 = vrot.lane.b32.xlu0 %v376, 64
    %v472 = vpop.permute.xlu0 %471
    %v474 = vadd.f32 %v448, %v472
    %v475 = vadd.f32 %v453, %v472
    %478 = vrot.lane.b32.xlu0 %v474, 64
    %v479 = vpop.permute.xlu0 %478
    %480 = vrot.lane.b32.xlu0 %v475, 64
    %v481 = vpop.permute.xlu0 %480
    %v484 = vmul.f32 %v467, %v479
    %v485 = vmul.f32 %v469, %v481
    %488 = vrot.lane.b32.xlu0 %v484, 64
    %v489 = vpop.permute.xlu0 %488
    %490 = vrot.lane.b32.xlu0 %v485, 64
    %v491 = vpop.permute.xlu0 %490
    %v494 = vadd.f32 %v204, %v489
    %v495 = vadd.f32 %v210, %v491
    %v496 = vtanh.pop %v494
    %v497 = vtanh.pop %v495
    %v498 = vsub.f32 1.0, %v467
    %v499 = vsub.f32 1.0, %v469
    %502 = vrot.lane.b32.xlu0 %v496, 96
    %v503 = vpop.permute.xlu0 %502
    %504 = vrot.lane.b32.xlu0 %v497, 96
    %v505 = vpop.permute.xlu0 %504
    %v508 = vmul.f32 %v498, %v503
    %v509 = vmul.f32 %v499, %v505
    %v510 = vmul.f32 %v467, 0.0
    %v511 = vmul.f32 %v469, 0.0
    %v512 = vadd.f32 %v508, %v510
    %v513 = vadd.f32 %v509, %v511
    %516 = vrot.lane.b32.xlu0 %v512, 96
    %v517 = vpop.permute.xlu0 %516
    %518 = vrot.lane.b32.xlu0 %v513, 96
    %v519 = vpop.permute.xlu0 %518
    %v520 = vsel %vm377, %v517, 0
    %v522 = vsel %vm377, %v519, 0
    %524 = vmatprep.subr.mxu0 0.0
    %525 = vmatpush1.msra.mxu0 0.0
    %526 = vmatprep.subr.mxu0 0.0
    %527 = vmatpush1.msra.mxu0 0.0
    %528 = vmatprep.subr.mxu0 0.0
    %529 = vmatpush1.msra.mxu0 0.0
    %530 = vmatprep.subr.mxu0 0.0
    %531 = vmatpush1.msra.mxu0 0.0
    %532 = vmatprep.subr.mxu0 0.0
    %533 = vmatpush1.msra.mxu0 0.0
    %534 = vmatprep.subr.mxu0 0.0
    %535 = vmatpush1.msra.mxu0 0.0
    %536 = vmatprep.subr.mxu0 0.0
    %537 = vmatpush1.msra.mxu0 0.0
    %538 = vmatprep.subr.mxu0 0.0
    %539 = vmatpush1.msra.mxu0 0.0
    %540 = vmatprep.subr.mxu0 0.0
    %541 = vmatpush1.msra.mxu0 0.0
    %542 = vmatprep.subr.mxu0 0.0
    %543 = vmatpush1.msra.mxu0 0.0
    %544 = vmatprep.subr.mxu0 0.0
    %545 = vmatpush1.msra.mxu0 0.0
    %546 = vmatprep.subr.mxu0 0.0
    %547 = vmatpush1.msra.mxu0 0.0
    %548 = vmatprep.subr.mxu0 0.0
    %549 = vmatpush1.msra.mxu0 %v371
    %550 = vmatprep.subr.mxu0 0.0
    %551 = vmatpush1.msra.mxu0 %v370
    %552 = vmatprep.subr.mxu0 0.0
    %553 = vmatpush1.msra.mxu0 %v369
    %554 = vmatprep.subr.mxu0 0.0
    %555 = vmatpush1.msra.mxu0 %v368
    %556 = vmatprep.subr.mxu0 0.0
    %557 = vmatpush2.msra.mxu0 0.0
    %558 = vmatprep.subr.mxu0 0.0
    %559 = vmatpush2.msra.mxu0 0.0
    %560 = vmatprep.subr.mxu0 0.0
    %561 = vmatpush2.msra.mxu0 0.0
    %562 = vmatprep.subr.mxu0 0.0
    %563 = vmatpush2.msra.mxu0 0.0
    %564 = vmatprep.subr.mxu0 0.0
    %565 = vmatpush2.msra.mxu0 0.0
    %566 = vmatprep.subr.mxu0 0.0
    %567 = vmatpush2.msra.mxu0 0.0
    %568 = vmatprep.subr.mxu0 0.0
    %569 = vmatpush2.msra.mxu0 0.0
    %570 = vmatprep.subr.mxu0 0.0
    %571 = vmatpush2.msra.mxu0 0.0
    %572 = vmatprep.subr.mxu0 0.0
    %573 = vmatpush2.msra.mxu0 0.0
    %574 = vmatprep.subr.mxu0 0.0
    %575 = vmatpush2.msra.mxu0 0.0
    %576 = vmatprep.subr.mxu0 0.0
    %577 = vmatpush2.msra.mxu0 0.0
    %578 = vmatprep.subr.mxu0 0.0
    %579 = vmatpush2.msra.mxu0 0.0
    %580 = vmatprep.subr.mxu0 0.0
    %581 = vmatpush2.msra.mxu0 0.0
    %582 = vmatprep.subr.mxu0 0.0
    %583 = vmatpush2.msra.mxu0 0.0
    %584 = vmatprep.subr.mxu0 0.0
    %585 = vmatpush2.msra.mxu0 0.0
    %586 = vmatprep.subr.mxu0 0.0
    %587 = vmatpush2.msra.mxu0 0.0
    %588 = vmatprep.mubr.f32.mxu0 0.0
    %589 = vmatmul.mubr.f32.gmra.mxu0 %v520
    %v590 = vpop.f32.mrf.mxu0
    %v591 = vadd.f32 0.0, %v590
    %v592 = vpop.f32.mrf.mxu0
    %593 = vmatprep.mubr.f32.mxu0 0.0
    %594 = vmatmul.mubr.f32.gmra.mxu0 %v522
    %v595 = vpop.f32.mrf.mxu0
    %v596 = vadd.f32 0.0, %v595
    %v597 = vpop.f32.mrf.mxu0
    %598 = vdwg.mxu0
    %601 = vrot.lane.b32.xlu0 %v591, 96
    %v602 = vpop.permute.xlu0 %601
    %603 = vrot.lane.b32.xlu0 %v596, 96
    %v604 = vpop.permute.xlu0 %603
    %v607 = vadd.f32 %v204, %v602
    %v608 = vadd.f32 %v206, %v602
    %v609 = vadd.f32 %v210, %v604
    %v610 = vadd.f32 %v212, %v604
    %v611 = vxor.u32 %v607, 2147483648
    %v612 = vxor.u32 %v608, 2147483648
    %v613 = vxor.u32 %v609, 2147483648
    %v614 = vxor.u32 %v610, 2147483648
    %v615 = vmul.f32 %v611, 1.442695
    %v616 = vpow.pop %v615
    %v617 = vmul.f32 %v612, 1.442695
    %v618 = vpow.pop %v617
    %v619 = vmul.f32 %v613, 1.442695
    %v620 = vpow.pop %v619
    %v621 = vmul.f32 %v614, 1.442695
    %v622 = vpow.pop %v621
    %v623 = vadd.f32 %v616, 1.0
    %v624 = vadd.f32 %v618, 1.0
    %v625 = vadd.f32 %v620, 1.0
    %v626 = vadd.f32 %v622, 1.0
    %v627 = vrcp.pop %v623
    %v628 = vmul.f32 1.0, %v627
    %v629 = vrcp.pop %v624
    %v630 = vmul.f32 1.0, %v629
    %v631 = vrcp.pop %v625
    %v632 = vmul.f32 1.0, %v631
    %v633 = vrcp.pop %v626
    %v634 = vmul.f32 1.0, %v633
    %v635 = vadd.f32 %v591, %v472
    %v636 = vadd.f32 %v596, %v472
    %639 = vrot.lane.b32.xlu0 %v635, 32
    %v640 = vpop.permute.xlu0 %639
    %641 = vrot.lane.b32.xlu0 %v636, 32
    %v642 = vpop.permute.xlu0 %641
    %v645 = vmul.f32 %v628, %v640
    %v646 = vmul.f32 %v632, %v642
    %649 = vrot.lane.b32.xlu0 %v645, 64
    %v650 = vpop.permute.xlu0 %649
    %651 = vrot.lane.b32.xlu0 %v646, 64
    %v652 = vpop.permute.xlu0 %651
    %v655 = vadd.f32 %v206, %v650
    %v656 = vadd.f32 %v212, %v652
    %v657 = vtanh.pop %v655
    %v658 = vtanh.pop %v656
    %v659 = vsub.f32 1.0, %v630
    %v660 = vsub.f32 1.0, %v634
    %663 = vrot.lane.b32.xlu0 %v657, 96
    %v664 = vpop.permute.xlu0 %663
    %665 = vrot.lane.b32.xlu0 %v658, 96
    %v666 = vpop.permute.xlu0 %665
    %v669 = vmul.f32 %v659, %v664
    %v670 = vmul.f32 %v660, %v666
    %v673 = vmul.f32 %v630, %v517
    %v674 = vmul.f32 %v634, %v519
    %v675 = vadd.f32 %v669, %v673
    %v676 = vadd.f32 %v670, %v674
    %v678 = vsel %vm377, %v675, 0
    %v681 = vsel %vm377, %v676, 0
    %683 = vmatprep.subr.mxu0 0.0
    %684 = vmatpush1.msra.mxu0 0.0
    %685 = vmatprep.subr.mxu0 0.0
    %686 = vmatpush1.msra.mxu0 0.0
    %687 = vmatprep.subr.mxu0 0.0
    %688 = vmatpush1.msra.mxu0 0.0
    %689 = vmatprep.subr.mxu0 0.0
    %690 = vmatpush1.msra.mxu0 0.0
    %691 = vmatprep.subr.mxu0 0.0
    %692 = vmatpush1.msra.mxu0 0.0
    %693 = vmatprep.subr.mxu0 0.0
    %694 = vmatpush1.msra.mxu0 0.0
    %695 = vmatprep.subr.mxu0 0.0
    %696 = vmatpush1.msra.mxu0 0.0
    %697 = vmatprep.subr.mxu0 0.0
    %698 = vmatpush1.msra.mxu0 0.0
    %699 = vmatprep.subr.mxu0 0.0
    %700 = vmatpush1.msra.mxu0 0.0
    %701 = vmatprep.subr.mxu0 0.0
    %702 = vmatpush1.msra.mxu0 0.0
    %703 = vmatprep.subr.mxu0 0.0
    %704 = vmatpush1.msra.mxu0 0.0
    %705 = vmatprep.subr.mxu0 0.0
    %706 = vmatpush1.msra.mxu0 0.0
    %707 = vmatprep.subr.mxu0 0.0
    %708 = vmatpush1.msra.mxu0 %v371
    %709 = vmatprep.subr.mxu0 0.0
    %710 = vmatpush1.msra.mxu0 %v370
    %711 = vmatprep.subr.mxu0 0.0
    %712 = vmatpush1.msra.mxu0 %v369
    %713 = vmatprep.subr.mxu0 0.0
    %714 = vmatpush1.msra.mxu0 %v368
    %715 = vmatprep.subr.mxu0 0.0
    %716 = vmatpush2.msra.mxu0 0.0
    %717 = vmatprep.subr.mxu0 0.0
    %718 = vmatpush2.msra.mxu0 0.0
    %719 = vmatprep.subr.mxu0 0.0
    %720 = vmatpush2.msra.mxu0 0.0
    %721 = vmatprep.subr.mxu0 0.0
    %722 = vmatpush2.msra.mxu0 0.0
    %723 = vmatprep.subr.mxu0 0.0
    %724 = vmatpush2.msra.mxu0 0.0
    %725 = vmatprep.subr.mxu0 0.0
    %726 = vmatpush2.msra.mxu0 0.0
    %727 = vmatprep.subr.mxu0 0.0
    %728 = vmatpush2.msra.mxu0 0.0
    %729 = vmatprep.subr.mxu0 0.0
    %730 = vmatpush2.msra.mxu0 0.0
    %731 = vmatprep.subr.mxu0 0.0
    %732 = vmatpush2.msra.mxu0 0.0
    %733 = vmatprep.subr.mxu0 0.0
    %734 = vmatpush2.msra.mxu0 0.0
    %735 = vmatprep.subr.mxu0 0.0
    %736 = vmatpush2.msra.mxu0 0.0
    %737 = vmatprep.subr.mxu0 0.0
    %738 = vmatpush2.msra.mxu0 0.0
    %739 = vmatprep.subr.mxu0 0.0
    %740 = vmatpush2.msra.mxu0 0.0
    %741 = vmatprep.subr.mxu0 0.0
    %742 = vmatpush2.msra.mxu0 0.0
    %743 = vmatprep.subr.mxu0 0.0
    %744 = vmatpush2.msra.mxu0 0.0
    %745 = vmatprep.subr.mxu0 0.0
    %746 = vmatpush2.msra.mxu0 0.0
    %747 = vmatprep.mubr.f32.mxu0 0.0
    %748 = vmatmul.mubr.f32.gmra.mxu0 %v678
    %v749 = vpop.f32.mrf.mxu0
    %v750 = vadd.f32 0.0, %v749
    %v751 = vpop.f32.mrf.mxu0
    %752 = vmatprep.mubr.f32.mxu0 0.0
    %753 = vmatmul.mubr.f32.gmra.mxu0 %v681
    %v754 = vpop.f32.mrf.mxu0
    %v755 = vadd.f32 0.0, %v754
    %v756 = vpop.f32.mrf.mxu0
    %757 = vdwg.mxu0
    %760 = vrot.lane.b32.xlu0 %v750, 64
    %v761 = vpop.permute.xlu0 %760
    %762 = vrot.lane.b32.xlu0 %v755, 64
    %v763 = vpop.permute.xlu0 %762
    %v766 = vadd.f32 %v206, %v761
    %v767 = vadd.f32 %v212, %v763
    %v768 = vxor.u32 %v766, 2147483648
    %v769 = vxor.u32 %v767, 2147483648
    %v770 = vmul.f32 %v768, 1.442695
    %v771 = vpow.pop %v770
    %v772 = vmul.f32 %v769, 1.442695
    %v773 = vpow.pop %v772
    %v774 = vadd.f32 %v771, 1.0
    %v775 = vadd.f32 %v773, 1.0
    %v776 = vrcp.pop %v774
    %v777 = vmul.f32 1.0, %v776
    %v778 = vrcp.pop %v775
    %v779 = vmul.f32 1.0, %v778
    %v780 = vadd.f32 %v750, %v472
    %v781 = vadd.f32 %v755, %v472
    %v782 = vmul.f32 %v777, %v780
    %v783 = vmul.f32 %v779, %v781
    %786 = vrot.lane.b32.xlu0 %v782, 64
    %v787 = vpop.permute.xlu0 %786
    %788 = vrot.lane.b32.xlu0 %v783, 64
    %v789 = vpop.permute.xlu0 %788
    %v792 = vadd.f32 %v281, %v787
    %v793 = vadd.f32 %v287, %v789
    %v794 = vtanh.pop %v792
    %v795 = vtanh.pop %v793
    %v796 = vsub.f32 1.0, %v777
    %v797 = vsub.f32 1.0, %v779
    %800 = vrot.lane.b32.xlu0 %v794, 96
    %v801 = vpop.permute.xlu0 %800
    %802 = vrot.lane.b32.xlu0 %v795, 96
    %v803 = vpop.permute.xlu0 %802
    %v806 = vmul.f32 %v796, %v801
    %v807 = vmul.f32 %v797, %v803
    %808 = vrot.lane.b32.xlu0 %v675, 96
    %v809 = vpop.permute.xlu0 %808
    %810 = vrot.lane.b32.xlu0 %v676, 96
    %v811 = vpop.permute.xlu0 %810
    %v814 = vmul.f32 %v777, %v809
    %v815 = vmul.f32 %v779, %v811
    %v816 = vadd.f32 %v806, %v814
    %v817 = vadd.f32 %v807, %v815
    %820 = vrot.lane.b32.xlu0 %v816, 32
    %v821 = vpop.permute.xlu0 %820
    %822 = vrot.lane.b32.xlu0 %v817, 32
    %v823 = vpop.permute.xlu0 %822
    %v824 = vsel %vm377, %v821, 0
    %v826 = vsel %vm377, %v823, 0
    %828 = vmatprep.subr.mxu0 0.0
    %829 = vmatpush1.msra.mxu0 0.0
    %830 = vmatprep.subr.mxu0 0.0
    %831 = vmatpush1.msra.mxu0 0.0
    %832 = vmatprep.subr.mxu0 0.0
    %833 = vmatpush1.msra.mxu0 0.0
    %834 = vmatprep.subr.mxu0 0.0
    %835 = vmatpush1.msra.mxu0 0.0
    %836 = vmatprep.subr.mxu0 0.0
    %837 = vmatpush1.msra.mxu0 0.0
    %838 = vmatprep.subr.mxu0 0.0
    %839 = vmatpush1.msra.mxu0 0.0
    %840 = vmatprep.subr.mxu0 0.0
    %841 = vmatpush1.msra.mxu0 0.0
    %842 = vmatprep.subr.mxu0 0.0
    %843 = vmatpush1.msra.mxu0 0.0
    %844 = vmatprep.subr.mxu0 0.0
    %845 = vmatpush1.msra.mxu0 0.0
    %846 = vmatprep.subr.mxu0 0.0
    %847 = vmatpush1.msra.mxu0 0.0
    %848 = vmatprep.subr.mxu0 0.0
    %849 = vmatpush1.msra.mxu0 0.0
    %850 = vmatprep.subr.mxu0 0.0
    %851 = vmatpush1.msra.mxu0 0.0
    %852 = vmatprep.subr.mxu0 0.0
    %853 = vmatpush1.msra.mxu0 %v371
    %854 = vmatprep.subr.mxu0 0.0
    %855 = vmatpush1.msra.mxu0 %v370
    %856 = vmatprep.subr.mxu0 0.0
    %857 = vmatpush1.msra.mxu0 %v369
    %858 = vmatprep.subr.mxu0 0.0
    %859 = vmatpush1.msra.mxu0 %v368
    %860 = vmatprep.subr.mxu0 0.0
    %861 = vmatpush2.msra.mxu0 0.0
    %862 = vmatprep.subr.mxu0 0.0
    %863 = vmatpush2.msra.mxu0 0.0
    %864 = vmatprep.subr.mxu0 0.0
    %865 = vmatpush2.msra.mxu0 0.0
    %866 = vmatprep.subr.mxu0 0.0
    %867 = vmatpush2.msra.mxu0 0.0
    %868 = vmatprep.subr.mxu0 0.0
    %869 = vmatpush2.msra.mxu0 0.0
    %870 = vmatprep.subr.mxu0 0.0
    %871 = vmatpush2.msra.mxu0 0.0
    %872 = vmatprep.subr.mxu0 0.0
    %873 = vmatpush2.msra.mxu0 0.0
    %874 = vmatprep.subr.mxu0 0.0
    %875 = vmatpush2.msra.mxu0 0.0
    %876 = vmatprep.subr.mxu0 0.0
    %877 = vmatpush2.msra.mxu0 0.0
    %878 = vmatprep.subr.mxu0 0.0
    %879 = vmatpush2.msra.mxu0 0.0
    %880 = vmatprep.subr.mxu0 0.0
    %881 = vmatpush2.msra.mxu0 0.0
    %882 = vmatprep.subr.mxu0 0.0
    %883 = vmatpush2.msra.mxu0 0.0
    %884 = vmatprep.subr.mxu0 0.0
    %885 = vmatpush2.msra.mxu0 0.0
    %886 = vmatprep.subr.mxu0 0.0
    %887 = vmatpush2.msra.mxu0 0.0
    %888 = vmatprep.subr.mxu0 0.0
    %889 = vmatpush2.msra.mxu0 0.0
    %890 = vmatprep.subr.mxu0 0.0
    %891 = vmatpush2.msra.mxu0 0.0
    %892 = vmatprep.mubr.f32.mxu0 0.0
    %893 = vmatmul.mubr.f32.gmra.mxu0 %v824
    %v894 = vpop.f32.mrf.mxu0
    %v895 = vadd.f32 0.0, %v894
    %v896 = vpop.f32.mrf.mxu0
    %897 = vmatprep.mubr.f32.mxu0 0.0
    %898 = vmatmul.mubr.f32.gmra.mxu0 %v826
    %v899 = vpop.f32.mrf.mxu0
    %v900 = vadd.f32 0.0, %v899
    %v901 = vpop.f32.mrf.mxu0
    %902 = vdwg.mxu0
    %905 = vrot.lane.b32.xlu0 %v895, 32
    %v906 = vpop.permute.xlu0 %905
    %907 = vrot.lane.b32.xlu0 %v900, 32
    %v908 = vpop.permute.xlu0 %907
    %v911 = vadd.f32 %v281, %v906
    %v912 = vadd.f32 %v287, %v908
    %v913 = vxor.u32 %v911, 2147483648
    %v914 = vxor.u32 %v912, 2147483648
    %v915 = vmul.f32 %v913, 1.442695
    %v916 = vpow.pop %v915
    %v917 = vmul.f32 %v914, 1.442695
    %v918 = vpow.pop %v917
    %v919 = vadd.f32 %v916, 1.0
    %v920 = vadd.f32 %v918, 1.0
    %v921 = vrcp.pop %v919
    %v922 = vmul.f32 1.0, %v921
    %v923 = vrcp.pop %v920
    %v924 = vmul.f32 1.0, %v923
    %v925 = vadd.f32 %v895, %v472
    %v926 = vadd.f32 %v900, %v472
    %929 = vrot.lane.b32.xlu0 %v925, 96
    %v930 = vpop.permute.xlu0 %929
    %931 = vrot.lane.b32.xlu0 %v926, 96
    %v932 = vpop.permute.xlu0 %931
    %v935 = vmul.f32 %v922, %v930
    %v936 = vmul.f32 %v924, %v932
    %939 = vrot.lane.b32.xlu0 %v935, 64
    %v940 = vpop.permute.xlu0 %939
    %941 = vrot.lane.b32.xlu0 %v936, 64
    %v942 = vpop.permute.xlu0 %941
    %v945 = vadd.f32 %v281, %v940
    %v946 = vadd.f32 %v287, %v942
    %v947 = vtanh.pop %v945
    %v948 = vtanh.pop %v946
    %v949 = vsub.f32 1.0, %v922
    %v950 = vsub.f32 1.0, %v924
    %953 = vrot.lane.b32.xlu0 %v947, 96
    %v954 = vpop.permute.xlu0 %953
    %955 = vrot.lane.b32.xlu0 %v948, 96
    %v956 = vpop.permute.xlu0 %955
    %v959 = vmul.f32 %v949, %v954
    %v960 = vmul.f32 %v950, %v956
    %961 = vrot.lane.b32.xlu0 %v816, 96
    %v962 = vpop.permute.xlu0 %961
    %963 = vrot.lane.b32.xlu0 %v817, 96
    %v964 = vpop.permute.xlu0 %963
    %v967 = vmul.f32 %v922, %v962
    %v968 = vmul.f32 %v924, %v964
    %v969 = vadd.f32 %v959, %v967
    %v970 = vadd.f32 %v960, %v968
    %973 = vrot.lane.b32.xlu0 %v969, 64
    %v974 = vpop.permute.xlu0 %973
    %975 = vrot.lane.b32.xlu0 %v970, 64
    %v976 = vpop.permute.xlu0 %975
    %v977 = vsel %vm377, %v974, 0
    %v979 = vsel %vm377, %v976, 0
    %981 = vmatprep.subr.mxu0 0.0
    %982 = vmatpush1.msra.mxu0 0.0
    %983 = vmatprep.subr.mxu0 0.0
    %984 = vmatpush1.msra.mxu0 0.0
    %985 = vmatprep.subr.mxu0 0.0
    %986 = vmatpush1.msra.mxu0 0.0
    %987 = vmatprep.subr.mxu0 0.0
    %988 = vmatpush1.msra.mxu0 0.0
    %989 = vmatprep.subr.mxu0 0.0
    %990 = vmatpush1.msra.mxu0 0.0
    %991 = vmatprep.subr.mxu0 0.0
    %992 = vmatpush1.msra.mxu0 0.0
    %993 = vmatprep.subr.mxu0 0.0
    %994 = vmatpush1.msra.mxu0 0.0
    %995 = vmatprep.subr.mxu0 0.0
    %996 = vmatpush1.msra.mxu0 0.0
    %997 = vmatprep.subr.mxu0 0.0
    %998 = vmatpush1.msra.mxu0 0.0
    %999 = vmatprep.subr.mxu0 0.0
    %1000 = vmatpush1.msra.mxu0 0.0
    %1001 = vmatprep.subr.mxu0 0.0
    %1002 = vmatpush1.msra.mxu0 0.0
    %1003 = vmatprep.subr.mxu0 0.0
    %1004 = vmatpush1.msra.mxu0 0.0
    %1005 = vmatprep.subr.mxu0 0.0
    %1006 = vmatpush1.msra.mxu0 %v371
    %1007 = vmatprep.subr.mxu0 0.0
    %1008 = vmatpush1.msra.mxu0 %v370
    %1009 = vmatprep.subr.mxu0 0.0
    %1010 = vmatpush1.msra.mxu0 %v369
    %1011 = vmatprep.subr.mxu0 0.0
    %1012 = vmatpush1.msra.mxu0 %v368
    %1013 = vmatprep.subr.mxu0 0.0
    %1014 = vmatpush2.msra.mxu0 0.0
    %1015 = vmatprep.subr.mxu0 0.0
    %1016 = vmatpush2.msra.mxu0 0.0
    %1017 = vmatprep.subr.mxu0 0.0
    %1018 = vmatpush2.msra.mxu0 0.0
    %1019 = vmatprep.subr.mxu0 0.0
    %1020 = vmatpush2.msra.mxu0 0.0
    %1021 = vmatprep.subr.mxu0 0.0
    %1022 = vmatpush2.msra.mxu0 0.0
    %1023 = vmatprep.subr.mxu0 0.0
    %1024 = vmatpush2.msra.mxu0 0.0
    %1025 = vmatprep.subr.mxu0 0.0
    %1026 = vmatpush2.msra.mxu0 0.0
    %1027 = vmatprep.subr.mxu0 0.0
    %1028 = vmatpush2.msra.mxu0 0.0
    %1029 = vmatprep.subr.mxu0 0.0
    %1030 = vmatpush2.msra.mxu0 0.0
    %1031 = vmatprep.subr.mxu0 0.0
    %1032 = vmatpush2.msra.mxu0 0.0
    %1033 = vmatprep.subr.mxu0 0.0
    %1034 = vmatpush2.msra.mxu0 0.0
    %1035 = vmatprep.subr.mxu0 0.0
    %1036 = vmatpush2.msra.mxu0 0.0
    %1037 = vmatprep.subr.mxu0 0.0
    %1038 = vmatpush2.msra.mxu0 0.0
    %1039 = vmatprep.subr.mxu0 0.0
    %1040 = vmatpush2.msra.mxu0 0.0
    %1041 = vmatprep.subr.mxu0 0.0
    %1042 = vmatpush2.msra.mxu0 0.0
    %1043 = vmatprep.subr.mxu0 0.0
    %1044 = vmatpush2.msra.mxu0 0.0
    %1045 = vmatprep.mubr.f32.mxu0 0.0
    %1046 = vmatmul.mubr.f32.gmra.mxu0 %v977
    %v1047 = vpop.f32.mrf.mxu0
    %v1048 = vadd.f32 0.0, %v1047
    %v1049 = vpop.f32.mrf.mxu0
    %1050 = vmatprep.mubr.f32.mxu0 0.0
    %1051 = vmatmul.mubr.f32.gmra.mxu0 %v979
    %v1052 = vpop.f32.mrf.mxu0
    %v1053 = vadd.f32 0.0, %v1052
    %v1054 = vpop.f32.mrf.mxu0
    %1055 = vdwg.mxu0
    %v1056 = vadd.f32 %v283, %v1048
    %v1057 = vadd.f32 %v289, %v1053
    %v1058 = vxor.u32 %v1056, 2147483648
    %v1059 = vxor.u32 %v1057, 2147483648
    %v1060 = vmul.f32 %v1058, 1.442695
    %v1061 = vpow.pop %v1060
    %v1062 = vmul.f32 %v1059, 1.442695
    %v1063 = vpow.pop %v1062
    %v1064 = vadd.f32 %v1061, 1.0
    %v1065 = vadd.f32 %v1063, 1.0
    %v1066 = vrcp.pop %v1064
    %v1067 = vmul.f32 1.0, %v1066
    %v1068 = vrcp.pop %v1065
    %v1069 = vmul.f32 1.0, %v1068
    %v1070 = vadd.f32 %v1048, %v472
    %v1071 = vadd.f32 %v1053, %v472
    %1074 = vrot.lane.b32.xlu0 %v1070, 64
    %v1075 = vpop.permute.xlu0 %1074
    %1076 = vrot.lane.b32.xlu0 %v1071, 64
    %v1077 = vpop.permute.xlu0 %1076
    %v1080 = vmul.f32 %v1067, %v1075
    %v1081 = vmul.f32 %v1069, %v1077
    %1084 = vrot.lane.b32.xlu0 %v1080, 64
    %v1085 = vpop.permute.xlu0 %1084
    %1086 = vrot.lane.b32.xlu0 %v1081, 64
    %v1087 = vpop.permute.xlu0 %1086
    %v1090 = vadd.f32 %v283, %v1085
    %v1091 = vadd.f32 %v289, %v1087
    %v1092 = vtanh.pop %v1090
    %v1093 = vtanh.pop %v1091
    %v1094 = vsub.f32 1.0, %v1067
    %v1095 = vsub.f32 1.0, %v1069
    %1098 = vrot.lane.b32.xlu0 %v1092, 96
    %v1099 = vpop.permute.xlu0 %1098
    %1100 = vrot.lane.b32.xlu0 %v1093, 96
    %v1101 = vpop.permute.xlu0 %1100
    %v1104 = vmul.f32 %v1094, %v1099
    %v1105 = vmul.f32 %v1095, %v1101
    %1106 = vrot.lane.b32.xlu0 %v969, 96
    %v1107 = vpop.permute.xlu0 %1106
    %1108 = vrot.lane.b32.xlu0 %v970, 96
    %v1109 = vpop.permute.xlu0 %1108
    %v1112 = vmul.f32 %v1067, %v1107
    %v1113 = vmul.f32 %v1069, %v1109
    %v1114 = vadd.f32 %v1104, %v1112
    %v1115 = vadd.f32 %v1105, %v1113
    %1118 = vrot.lane.b32.xlu0 %v1114, 96
    %v1119 = vpop.permute.xlu0 %1118
    %1120 = vrot.lane.b32.xlu0 %v1115, 96
    %v1121 = vpop.permute.xlu0 %1120
    %v1122 = vsel %vm377, %v1119, 0
    %v1124 = vsel %vm377, %v1121, 0
    %1126 = vmatprep.subr.mxu0 0.0
    %1127 = vmatpush1.msra.mxu0 0.0
    %1128 = vmatprep.subr.mxu0 0.0
    %1129 = vmatpush1.msra.mxu0 0.0
    %1130 = vmatprep.subr.mxu0 0.0
    %1131 = vmatpush1.msra.mxu0 0.0
    %1132 = vmatprep.subr.mxu0 0.0
    %1133 = vmatpush1.msra.mxu0 0.0
    %1134 = vmatprep.subr.mxu0 0.0
    %1135 = vmatpush1.msra.mxu0 0.0
    %1136 = vmatprep.subr.mxu0 0.0
    %1137 = vmatpush1.msra.mxu0 0.0
    %1138 = vmatprep.subr.mxu0 0.0
    %1139 = vmatpush1.msra.mxu0 0.0
    %1140 = vmatprep.subr.mxu0 0.0
    %1141 = vmatpush1.msra.mxu0 0.0
    %1142 = vmatprep.subr.mxu0 0.0
    %1143 = vmatpush1.msra.mxu0 0.0
    %1144 = vmatprep.subr.mxu0 0.0
    %1145 = vmatpush1.msra.mxu0 0.0
    %1146 = vmatprep.subr.mxu0 0.0
    %1147 = vmatpush1.msra.mxu0 0.0
    %1148 = vmatprep.subr.mxu0 0.0
    %1149 = vmatpush1.msra.mxu0 0.0
    %1150 = vmatprep.subr.mxu0 0.0
    %1151 = vmatpush1.msra.mxu0 %v371
    %1152 = vmatprep.subr.mxu0 0.0
    %1153 = vmatpush1.msra.mxu0 %v370
    %1154 = vmatprep.subr.mxu0 0.0
    %1155 = vmatpush1.msra.mxu0 %v369
    %1156 = vmatprep.subr.mxu0 0.0
    %1157 = vmatpush1.msra.mxu0 %v368
    %1158 = vmatprep.subr.mxu0 0.0
    %1159 = vmatpush2.msra.mxu0 0.0
    %1160 = vmatprep.subr.mxu0 0.0
    %1161 = vmatpush2.msra.mxu0 0.0
    %1162 = vmatprep.subr.mxu0 0.0
    %1163 = vmatpush2.msra.mxu0 0.0
    %1164 = vmatprep.subr.mxu0 0.0
    %1165 = vmatpush2.msra.mxu0 0.0
    %1166 = vmatprep.subr.mxu0 0.0
    %1167 = vmatpush2.msra.mxu0 0.0
    %1168 = vmatprep.subr.mxu0 0.0
    %1169 = vmatpush2.msra.mxu0 0.0
    %1170 = vmatprep.subr.mxu0 0.0
    %1171 = vmatpush2.msra.mxu0 0.0
    %1172 = vmatprep.subr.mxu0 0.0
    %1173 = vmatpush2.msra.mxu0 0.0
    %1174 = vmatprep.subr.mxu0 0.0
    %1175 = vmatpush2.msra.mxu0 0.0
    %1176 = vmatprep.subr.mxu0 0.0
    %1177 = vmatpush2.msra.mxu0 0.0
    %1178 = vmatprep.subr.mxu0 0.0
    %1179 = vmatpush2.msra.mxu0 0.0
    %1180 = vmatprep.subr.mxu0 0.0
    %1181 = vmatpush2.msra.mxu0 0.0
    %1182 = vmatprep.subr.mxu0 0.0
    %1183 = vmatpush2.msra.mxu0 0.0
    %1184 = vmatprep.subr.mxu0 0.0
    %1185 = vmatpush2.msra.mxu0 0.0
    %1186 = vmatprep.subr.mxu0 0.0
    %1187 = vmatpush2.msra.mxu0 0.0
    %1188 = vmatprep.subr.mxu0 0.0
    %1189 = vmatpush2.msra.mxu0 0.0
    %1190 = vmatprep.mubr.f32.mxu0 0.0
    %1191 = vmatmul.mubr.f32.gmra.mxu0 %v1122
    %v1192 = vpop.f32.mrf.mxu0
    %v1193 = vadd.f32 0.0, %v1192
    %v1194 = vpop.f32.mrf.mxu0
    %1195 = vmatprep.mubr.f32.mxu0 0.0
    %1196 = vmatmul.mubr.f32.gmra.mxu0 %v1124
    %v1197 = vpop.f32.mrf.mxu0
    %v1198 = vadd.f32 0.0, %v1197
    %v1199 = vpop.f32.mrf.mxu0
    %1200 = vdwg.mxu0
    %1203 = vrot.lane.b32.xlu0 %v1193, 96
    %v1204 = vpop.permute.xlu0 %1203
    %1205 = vrot.lane.b32.xlu0 %v1198, 96
    %v1206 = vpop.permute.xlu0 %1205
    %v1209 = vadd.f32 %v283, %v1204
    %v1210 = vadd.f32 %v358, %v1204
    %v1211 = vadd.f32 %v289, %v1206
    %v1212 = vadd.f32 %v364, %v1206
    %v1213 = vxor.u32 %v1209, 2147483648
    %v1214 = vxor.u32 %v1210, 2147483648
    %v1215 = vxor.u32 %v1211, 2147483648
    %v1216 = vxor.u32 %v1212, 2147483648
    %v1217 = vmul.f32 %v1213, 1.442695
    %v1218 = vpow.pop %v1217
    %v1219 = vmul.f32 %v1214, 1.442695
    %v1220 = vpow.pop %v1219
    %v1221 = vmul.f32 %v1215, 1.442695
    %v1222 = vpow.pop %v1221
    %v1223 = vmul.f32 %v1216, 1.442695
    %v1224 = vpow.pop %v1223
    %v1225 = vadd.f32 %v1218, 1.0
    %v1226 = vadd.f32 %v1220, 1.0
    %v1227 = vadd.f32 %v1222, 1.0
    %v1228 = vadd.f32 %v1224, 1.0
    %v1229 = vrcp.pop %v1225
    %v1230 = vmul.f32 1.0, %v1229
    %v1231 = vrcp.pop %v1226
    %v1232 = vmul.f32 1.0, %v1231
    %v1233 = vrcp.pop %v1227
    %v1234 = vmul.f32 1.0, %v1233
    %v1235 = vrcp.pop %v1228
    %v1236 = vmul.f32 1.0, %v1235
    %v1237 = vadd.f32 %v1193, %v472
    %v1238 = vadd.f32 %v1198, %v472
    %1241 = vrot.lane.b32.xlu0 %v1237, 32
    %v1242 = vpop.permute.xlu0 %1241
    %1243 = vrot.lane.b32.xlu0 %v1238, 32
    %v1244 = vpop.permute.xlu0 %1243
    %v1247 = vmul.f32 %v1230, %v1242
    %v1248 = vmul.f32 %v1234, %v1244
    %1251 = vrot.lane.b32.xlu0 %v1247, 64
    %v1252 = vpop.permute.xlu0 %1251
    %1253 = vrot.lane.b32.xlu0 %v1248, 64
    %v1254 = vpop.permute.xlu0 %1253
    %v1257 = vadd.f32 %v358, %v1252
    %v1258 = vadd.f32 %v364, %v1254
    %v1259 = vtanh.pop %v1257
    %v1260 = vtanh.pop %v1258
    %v1261 = vsub.f32 1.0, %v1232
    %v1262 = vsub.f32 1.0, %v1236
    %1265 = vrot.lane.b32.xlu0 %v1259, 96
    %v1266 = vpop.permute.xlu0 %1265
    %1267 = vrot.lane.b32.xlu0 %v1260, 96
    %v1268 = vpop.permute.xlu0 %1267
    %v1271 = vmul.f32 %v1261, %v1266
    %v1272 = vmul.f32 %v1262, %v1268
    %v1275 = vmul.f32 %v1232, %v1119
    %v1276 = vmul.f32 %v1236, %v1121
    %v1277 = vadd.f32 %v1271, %v1275
    %v1278 = vadd.f32 %v1272, %v1276
    %v1280 = vsel %vm377, %v1277, 0
    %v1283 = vsel %vm377, %v1278, 0
    %1285 = vmatprep.subr.mxu0 0.0
    %1286 = vmatpush1.msra.mxu0 0.0
    %1287 = vmatprep.subr.mxu0 0.0
    %1288 = vmatpush1.msra.mxu0 0.0
    %1289 = vmatprep.subr.mxu0 0.0
    %1290 = vmatpush1.msra.mxu0 0.0
    %1291 = vmatprep.subr.mxu0 0.0
    %1292 = vmatpush1.msra.mxu0 0.0
    %1293 = vmatprep.subr.mxu0 0.0
    %1294 = vmatpush1.msra.mxu0 0.0
    %1295 = vmatprep.subr.mxu0 0.0
    %1296 = vmatpush1.msra.mxu0 0.0
    %1297 = vmatprep.subr.mxu0 0.0
    %1298 = vmatpush1.msra.mxu0 0.0
    %1299 = vmatprep.subr.mxu0 0.0
    %1300 = vmatpush1.msra.mxu0 0.0
    %1301 = vmatprep.subr.mxu0 0.0
    %1302 = vmatpush1.msra.mxu0 0.0
    %1303 = vmatprep.subr.mxu0 0.0
    %1304 = vmatpush1.msra.mxu0 0.0
    %1305 = vmatprep.subr.mxu0 0.0
    %1306 = vmatpush1.msra.mxu0 0.0
    %1307 = vmatprep.subr.mxu0 0.0
    %1308 = vmatpush1.msra.mxu0 0.0
    %1309 = vmatprep.subr.mxu0 0.0
    %1310 = vmatpush1.msra.mxu0 %v371
    %1311 = vmatprep.subr.mxu0 0.0
    %1312 = vmatpush1.msra.mxu0 %v370
    %1313 = vmatprep.subr.mxu0 0.0
    %1314 = vmatpush1.msra.mxu0 %v369
    %1315 = vmatprep.subr.mxu0 0.0
    %1316 = vmatpush1.msra.mxu0 %v368
    %1317 = vmatprep.subr.mxu0 0.0
    %1318 = vmatpush2.msra.mxu0 0.0
    %1319 = vmatprep.subr.mxu0 0.0
    %1320 = vmatpush2.msra.mxu0 0.0
    %1321 = vmatprep.subr.mxu0 0.0
    %1322 = vmatpush2.msra.mxu0 0.0
    %1323 = vmatprep.subr.mxu0 0.0
    %1324 = vmatpush2.msra.mxu0 0.0
    %1325 = vmatprep.subr.mxu0 0.0
    %1326 = vmatpush2.msra.mxu0 0.0
    %1327 = vmatprep.subr.mxu0 0.0
    %1328 = vmatpush2.msra.mxu0 0.0
    %1329 = vmatprep.subr.mxu0 0.0
    %1330 = vmatpush2.msra.mxu0 0.0
    %1331 = vmatprep.subr.mxu0 0.0
    %1332 = vmatpush2.msra.mxu0 0.0
    %1333 = vmatprep.subr.mxu0 0.0
    %1334 = vmatpush2.msra.mxu0 0.0
    %1335 = vmatprep.subr.mxu0 0.0
    %1336 = vmatpush2.msra.mxu0 0.0
    %1337 = vmatprep.subr.mxu0 0.0
    %1338 = vmatpush2.msra.mxu0 0.0
    %1339 = vmatprep.subr.mxu0 0.0
    %1340 = vmatpush2.msra.mxu0 0.0
    %1341 = vmatprep.subr.mxu0 0.0
    %1342 = vmatpush2.msra.mxu0 0.0
    %1343 = vmatprep.subr.mxu0 0.0
    %1344 = vmatpush2.msra.mxu0 0.0
    %1345 = vmatprep.subr.mxu0 0.0
    %1346 = vmatpush2.msra.mxu0 0.0
    %1347 = vmatprep.subr.mxu0 0.0
    %1348 = vmatpush2.msra.mxu0 0.0
    %1349 = vmatprep.mubr.f32.mxu0 0.0
    %1350 = vmatmul.mubr.f32.gmra.mxu0 %v1280
    %v1351 = vpop.f32.mrf.mxu0
    %v1352 = vadd.f32 0.0, %v1351
    %v1353 = vpop.f32.mrf.mxu0
    %1354 = vmatprep.mubr.f32.mxu0 0.0
    %1355 = vmatmul.mubr.f32.gmra.mxu0 %v1283
    %v1356 = vpop.f32.mrf.mxu0
    %v1357 = vadd.f32 0.0, %v1356
    %v1358 = vpop.f32.mrf.mxu0
    %1359 = vdwg.mxu0
    %1362 = vrot.lane.b32.xlu0 %v1352, 64
    %v1363 = vpop.permute.xlu0 %1362
    %1364 = vrot.lane.b32.xlu0 %v1357, 64
    %v1365 = vpop.permute.xlu0 %1364
    %v1368 = vadd.f32 %v358, %v1363
    %v1369 = vadd.f32 %v364, %v1365
    %v1370 = vxor.u32 %v1368, 2147483648
    %v1371 = vxor.u32 %v1369, 2147483648
    %v1372 = vmul.f32 %v1370, 1.442695
    %v1373 = vpow.pop %v1372
    %v1374 = vmul.f32 %v1371, 1.442695
    %v1375 = vpow.pop %v1374
    %v1376 = vadd.f32 %v1373, 1.0
    %v1377 = vadd.f32 %v1375, 1.0
    %v1378 = vrcp.pop %v1376
    %v1379 = vmul.f32 1.0, %v1378
    %v1380 = vrcp.pop %v1377
    %v1381 = vmul.f32 1.0, %v1380
    %v1382 = vadd.f32 %v1352, %v472
    %v1383 = vadd.f32 %v1357, %v472
    %v1384 = vmul.f32 %v1379, %v1382
    %v1385 = vmul.f32 %v1381, %v1383
    %1388 = vrot.lane.b32.xlu0 %v1384, 64
    %v1389 = vpop.permute.xlu0 %1388
    %1390 = vrot.lane.b32.xlu0 %v1385, 64
    %v1391 = vpop.permute.xlu0 %1390
    %v1394 = vadd.f32 %v360, %v1389
    %v1395 = vadd.f32 %v366, %v1391
    %v1396 = vtanh.pop %v1394
    %v1397 = vtanh.pop %v1395
    %v1398 = vsub.f32 1.0, %v1379
    %v1399 = vsub.f32 1.0, %v1381
    %1402 = vrot.lane.b32.xlu0 %v1396, 96
    %v1403 = vpop.permute.xlu0 %1402
    %1404 = vrot.lane.b32.xlu0 %v1397, 96
    %v1405 = vpop.permute.xlu0 %1404
    %v1408 = vmul.f32 %v1398, %v1403
    %v1409 = vmul.f32 %v1399, %v1405
    %1410 = vrot.lane.b32.xlu0 %v1277, 96
    %v1411 = vpop.permute.xlu0 %1410
    %1412 = vrot.lane.b32.xlu0 %v1278, 96
    %v1413 = vpop.permute.xlu0 %1412
    %v1416 = vmul.f32 %v1379, %v1411
    %v1417 = vmul.f32 %v1381, %v1413
    %v1418 = vadd.f32 %v1408, %v1416
    %v1419 = vadd.f32 %v1409, %v1417
    %1422 = vrot.lane.b32.xlu0 %v1418, 32
    %v1423 = vpop.permute.xlu0 %1422
    %1424 = vrot.lane.b32.xlu0 %v1419, 32
    %v1425 = vpop.permute.xlu0 %1424
    %v1426 = vsel %vm377, %v1423, 0
    %v1428 = vsel %vm377, %v1425, 0
    %1430 = vmatprep.subr.mxu0 0.0
    %1431 = vmatpush1.msra.mxu0 0.0
    %1432 = vmatprep.subr.mxu0 0.0
    %1433 = vmatpush1.msra.mxu0 0.0
    %1434 = vmatprep.subr.mxu0 0.0
    %1435 = vmatpush1.msra.mxu0 0.0
    %1436 = vmatprep.subr.mxu0 0.0
    %1437 = vmatpush1.msra.mxu0 0.0
    %1438 = vmatprep.subr.mxu0 0.0
    %1439 = vmatpush1.msra.mxu0 0.0
    %1440 = vmatprep.subr.mxu0 0.0
    %1441 = vmatpush1.msra.mxu0 0.0
    %1442 = vmatprep.subr.mxu0 0.0
    %1443 = vmatpush1.msra.mxu0 0.0
    %1444 = vmatprep.subr.mxu0 0.0
    %1445 = vmatpush1.msra.mxu0 0.0
    %1446 = vmatprep.subr.mxu0 0.0
    %1447 = vmatpush1.msra.mxu0 0.0
    %1448 = vmatprep.subr.mxu0 0.0
    %1449 = vmatpush1.msra.mxu0 0.0
    %1450 = vmatprep.subr.mxu0 0.0
    %1451 = vmatpush1.msra.mxu0 0.0
    %1452 = vmatprep.subr.mxu0 0.0
    %1453 = vmatpush1.msra.mxu0 0.0
    %1454 = vmatprep.subr.mxu0 0.0
    %1455 = vmatpush1.msra.mxu0 %v371
    %1456 = vmatprep.subr.mxu0 0.0
    %1457 = vmatpush1.msra.mxu0 %v370
    %1458 = vmatprep.subr.mxu0 0.0
    %1459 = vmatpush1.msra.mxu0 %v369
    %1460 = vmatprep.subr.mxu0 0.0
    %1461 = vmatpush1.msra.mxu0 %v368
    %1462 = vmatprep.subr.mxu0 0.0
    %1463 = vmatpush2.msra.mxu0 0.0
    %1464 = vmatprep.subr.mxu0 0.0
    %1465 = vmatpush2.msra.mxu0 0.0
    %1466 = vmatprep.subr.mxu0 0.0
    %1467 = vmatpush2.msra.mxu0 0.0
    %1468 = vmatprep.subr.mxu0 0.0
    %1469 = vmatpush2.msra.mxu0 0.0
    %1470 = vmatprep.subr.mxu0 0.0
    %1471 = vmatpush2.msra.mxu0 0.0
    %1472 = vmatprep.subr.mxu0 0.0
    %1473 = vmatpush2.msra.mxu0 0.0
    %1474 = vmatprep.subr.mxu0 0.0
    %1475 = vmatpush2.msra.mxu0 0.0
    %1476 = vmatprep.subr.mxu0 0.0
    %1477 = vmatpush2.msra.mxu0 0.0
    %1478 = vmatprep.subr.mxu0 0.0
    %1479 = vmatpush2.msra.mxu0 0.0
    %1480 = vmatprep.subr.mxu0 0.0
    %1481 = vmatpush2.msra.mxu0 0.0
    %1482 = vmatprep.subr.mxu0 0.0
    %1483 = vmatpush2.msra.mxu0 0.0
    %1484 = vmatprep.subr.mxu0 0.0
    %1485 = vmatpush2.msra.mxu0 0.0
    %1486 = vmatprep.subr.mxu0 0.0
    %1487 = vmatpush2.msra.mxu0 0.0
    %1488 = vmatprep.subr.mxu0 0.0
    %1489 = vmatpush2.msra.mxu0 0.0
    %1490 = vmatprep.subr.mxu0 0.0
    %1491 = vmatpush2.msra.mxu0 0.0
    %1492 = vmatprep.subr.mxu0 0.0
    %1493 = vmatpush2.msra.mxu0 0.0
    %1494 = vmatprep.mubr.f32.mxu0 0.0
    %1495 = vmatmul.mubr.f32.gmra.mxu0 %v1426
    %v1496 = vpop.f32.mrf.mxu0
    %v1497 = vadd.f32 0.0, %v1496
    %v1498 = vpop.f32.mrf.mxu0
    %1499 = vmatprep.mubr.f32.mxu0 0.0
    %1500 = vmatmul.mubr.f32.gmra.mxu0 %v1428
    %v1501 = vpop.f32.mrf.mxu0
    %v1502 = vadd.f32 0.0, %v1501
    %v1503 = vpop.f32.mrf.mxu0
    %1504 = vdwg.mxu0
    %1507 = vrot.lane.b32.xlu0 %v1497, 32
    %v1508 = vpop.permute.xlu0 %1507
    %1509 = vrot.lane.b32.xlu0 %v1502, 32
    %v1510 = vpop.permute.xlu0 %1509
    %v1513 = vadd.f32 %v360, %v1508
    %v1514 = vadd.f32 %v366, %v1510
    %v1515 = vxor.u32 %v1513, 2147483648
    %v1516 = vxor.u32 %v1514, 2147483648
    %v1517 = vmul.f32 %v1515, 1.442695
    %v1518 = vpow.pop %v1517
    %v1519 = vmul.f32 %v1516, 1.442695
    %v1520 = vpow.pop %v1519
    %v1521 = vadd.f32 %v1518, 1.0
    %v1522 = vadd.f32 %v1520, 1.0
    %v1523 = vrcp.pop %v1521
    %v1524 = vmul.f32 1.0, %v1523
    %v1525 = vrcp.pop %v1522
    %v1526 = vmul.f32 1.0, %v1525
    %v1527 = vadd.f32 %v1497, %v472
    %v1528 = vadd.f32 %v1502, %v472
    %1531 = vrot.lane.b32.xlu0 %v1527, 96
    %v1532 = vpop.permute.xlu0 %1531
    %1533 = vrot.lane.b32.xlu0 %v1528, 96
    %v1534 = vpop.permute.xlu0 %1533
    %v1537 = vmul.f32 %v1524, %v1532
    %v1538 = vmul.f32 %v1526, %v1534
    %1541 = vrot.lane.b32.xlu0 %v1537, 64
    %v1542 = vpop.permute.xlu0 %1541
    %1543 = vrot.lane.b32.xlu0 %v1538, 64
    %v1544 = vpop.permute.xlu0 %1543
    %v1547 = vadd.f32 %v360, %v1542
    %v1548 = vadd.f32 %v366, %v1544
    %v1549 = vtanh.pop %v1547
    %v1550 = vtanh.pop %v1548
    %v1551 = vsub.f32 1.0, %v1524
    %v1552 = vsub.f32 1.0, %v1526
    %1555 = vrot.lane.b32.xlu0 %v1549, 96
    %v1556 = vpop.permute.xlu0 %1555
    %1557 = vrot.lane.b32.xlu0 %v1550, 96
    %v1558 = vpop.permute.xlu0 %1557
    %v1561 = vmul.f32 %v1551, %v1556
    %v1562 = vmul.f32 %v1552, %v1558
    %1563 = vrot.lane.b32.xlu0 %v1418, 96
    %v1564 = vpop.permute.xlu0 %1563
    %1565 = vrot.lane.b32.xlu0 %v1419, 96
    %v1566 = vpop.permute.xlu0 %1565
    %v1569 = vmul.f32 %v1524, %v1564
    %v1570 = vmul.f32 %v1526, %v1566
    %v1571 = vadd.f32 %v1561, %v1569
    %v1572 = vadd.f32 %v1562, %v1570
    %v1573 = vld [vmem:[%s1] sm:$0xff]
    %v1574 = vld [vmem:[%s1 + $0x8] sm:$0xff]
    %v1575 = vld [vmem:[#allocation4 + $0x28] sm:$0xff]
    %v1576 = vld [vmem:[#allocation4 + $0x30] sm:$0xff]
    %v1577 = vld [vmem:[#allocation4 + $0x38] sm:$0xff]
    %v1578 = vld [vmem:[#allocation4 + $0x40] sm:$0xff]
    %v1579 = vld [vmem:[#allocation4 + $0x48] sm:$0x1]
    %v1580 = vlaneseq
    %v1581 = vshrl.u32 %v1580, 7
    %v1582 = vsub.s32 0, %v1581
    %v1583 = vrot.slane %v1579, %v1582
    %v1585 = vsel %vm377, %v1573, 0
    %v1588 = vsel %vm377, %v1574, 0
    %1590 = vmatprep.subr.mxu0 0.0
    %1591 = vmatpush1.msra.mxu0 0.0
    %1592 = vmatprep.subr.mxu0 0.0
    %1593 = vmatpush1.msra.mxu0 0.0
    %1594 = vmatprep.subr.mxu0 0.0
    %1595 = vmatpush1.msra.mxu0 0.0
    %1596 = vmatprep.subr.mxu0 0.0
    %1597 = vmatpush1.msra.mxu0 0.0
    %1598 = vmatprep.subr.mxu0 0.0
    %1599 = vmatpush1.msra.mxu0 0.0
    %1600 = vmatprep.subr.mxu0 0.0
    %1601 = vmatpush1.msra.mxu0 0.0
    %1602 = vmatprep.subr.mxu0 0.0
    %1603 = vmatpush1.msra.mxu0 0.0
    %1604 = vmatprep.subr.mxu0 0.0
    %1605 = vmatpush1.msra.mxu0 0.0
    %1606 = vmatprep.subr.mxu0 0.0
    %1607 = vmatpush1.msra.mxu0 0.0
    %1608 = vmatprep.subr.mxu0 0.0
    %1609 = vmatpush1.msra.mxu0 0.0
    %1610 = vmatprep.subr.mxu0 0.0
    %1611 = vmatpush1.msra.mxu0 0.0
    %1612 = vmatprep.subr.mxu0 0.0
    %1613 = vmatpush1.msra.mxu0 0.0
    %1614 = vmatprep.subr.mxu0 0.0
    %1615 = vmatpush1.msra.mxu0 %v1578
    %1616 = vmatprep.subr.mxu0 0.0
    %1617 = vmatpush1.msra.mxu0 %v1577
    %1618 = vmatprep.subr.mxu0 0.0
    %1619 = vmatpush1.msra.mxu0 %v1576
    %1620 = vmatprep.subr.mxu0 0.0
    %1621 = vmatpush1.msra.mxu0 %v1575
    %1622 = vmatprep.subr.mxu0 0.0
    %1623 = vmatpush2.msra.mxu0 0.0
    %1624 = vmatprep.subr.mxu0 0.0
    %1625 = vmatpush2.msra.mxu0 0.0
    %1626 = vmatprep.subr.mxu0 0.0
    %1627 = vmatpush2.msra.mxu0 0.0
    %1628 = vmatprep.subr.mxu0 0.0
    %1629 = vmatpush2.msra.mxu0 0.0
    %1630 = vmatprep.subr.mxu0 0.0
    %1631 = vmatpush2.msra.mxu0 0.0
    %1632 = vmatprep.subr.mxu0 0.0
    %1633 = vmatpush2.msra.mxu0 0.0
    %1634 = vmatprep.subr.mxu0 0.0
    %1635 = vmatpush2.msra.mxu0 0.0
    %1636 = vmatprep.subr.mxu0 0.0
    %1637 = vmatpush2.msra.mxu0 0.0
    %1638 = vmatprep.subr.mxu0 0.0
    %1639 = vmatpush2.msra.mxu0 0.0
    %1640 = vmatprep.subr.mxu0 0.0
    %1641 = vmatpush2.msra.mxu0 0.0
    %1642 = vmatprep.subr.mxu0 0.0
    %1643 = vmatpush2.msra.mxu0 0.0
    %1644 = vmatprep.subr.mxu0 0.0
    %1645 = vmatpush2.msra.mxu0 0.0
    %1646 = vmatprep.subr.mxu0 0.0
    %1647 = vmatpush2.msra.mxu0 0.0
    %1648 = vmatprep.subr.mxu0 0.0
    %1649 = vmatpush2.msra.mxu0 0.0
    %1650 = vmatprep.subr.mxu0 0.0
    %1651 = vmatpush2.msra.mxu0 0.0
    %1652 = vmatprep.subr.mxu0 0.0
    %1653 = vmatpush2.msra.mxu0 0.0
    %1654 = vmatprep.mubr.f32.mxu0 0.0
    %1655 = vmatmul.mubr.f32.gmra.mxu0 %v1585
    %v1656 = vpop.f32.mrf.mxu0
    %v1657 = vadd.f32 %v1583, %v1656
    %v1658 = vpop.f32.mrf.mxu0
    %1659 = vmatprep.mubr.f32.mxu0 0.0
    %1660 = vmatmul.mubr.f32.gmra.mxu0 %v1588
    %v1661 = vpop.f32.mrf.mxu0
    %v1662 = vadd.f32 %v1583, %v1661
    %v1663 = vpop.f32.mrf.mxu0
    %1664 = vdwg.mxu0
    %v1665 = vmax.f32 %v1657, 0.0
    %v1666 = vmax.f32 %v1662, 0.0
    %v1667 = vld [vmem:[#allocation4 + $0x50] sm:$0xff]
    %v1668 = vld [vmem:[#allocation4 + $0x58] sm:$0xff]
    %v1669 = vld [vmem:[#allocation4 + $0x60] sm:$0xff]
    %v1670 = vld [vmem:[#allocation4 + $0x68] sm:$0xff]
    %v1671 = vld [vmem:[#allocation4 + $0x70] sm:$0xff]
    %v1672 = vld [vmem:[#allocation4 + $0x78] sm:$0xff]
    %v1673 = vld [vmem:[#allocation4 + $0x80] sm:$0xff]
    %v1674 = vld [vmem:[#allocation4 + $0x88] sm:$0xff]
    %v1675 = vld [vmem:[#allocation4 + $0x90] sm:$0xff]
    %v1676 = vld [vmem:[#allocation4 + $0x98] sm:$0xff]
    %v1677 = vld [vmem:[#allocation4 + $0xa0] sm:$0xff]
    %v1678 = vld [vmem:[#allocation4 + $0xa8] sm:$0xff]
    %v1679 = vld [vmem:[#allocation4 + $0xb0] sm:$0xff]
    %v1680 = vld [vmem:[#allocation4 + $0xb8] sm:$0xff]
    %v1681 = vld [vmem:[#allocation4 + $0xc0] sm:$0xff]
    %v1682 = vld [vmem:[#allocation4 + $0xc8] sm:$0xff]
    %v1683 = vld [vmem:[#allocation4 + $0xd0] sm:$0xff]
    %v1684 = vld [vmem:[#allocation4 + $0xd8] sm:$0xff]
    %v1685 = vld [vmem:[#allocation4 + $0xe0] sm:$0xff]
    %v1686 = vld [vmem:[#allocation4 + $0xe8] sm:$0xff]
    %1687 = vmatprep.subr.mxu0 0.0
    %1688 = vmatpush1.msra.mxu0 %v1686
    %1689 = vmatprep.subr.mxu0 0.0
    %1690 = vmatpush1.msra.mxu0 %v1685
    %1691 = vmatprep.subr.mxu0 0.0
    %1692 = vmatpush1.msra.mxu0 %v1684
    %1693 = vmatprep.subr.mxu0 0.0
    %1694 = vmatpush1.msra.mxu0 %v1683
    %1695 = vmatprep.subr.mxu0 0.0
    %1696 = vmatpush1.msra.mxu0 %v1682
    %1697 = vmatprep.subr.mxu0 0.0
    %1698 = vmatpush1.msra.mxu0 %v1681
    %1699 = vmatprep.subr.mxu0 0.0
    %1700 = vmatpush1.msra.mxu0 %v1680
    %1701 = vmatprep.subr.mxu0 0.0
    %1702 = vmatpush1.msra.mxu0 %v1679
    %1703 = vmatprep.subr.mxu0 0.0
    %1704 = vmatpush1.msra.mxu0 %v1678
    %1705 = vmatprep.subr.mxu0 0.0
    %1706 = vmatpush1.msra.mxu0 %v1677
    %1707 = vmatprep.subr.mxu0 0.0
    %1708 = vmatpush1.msra.mxu0 %v1676
    %1709 = vmatprep.subr.mxu0 0.0
    %1710 = vmatpush1.msra.mxu0 %v1675
    %1711 = vmatprep.subr.mxu0 0.0
    %1712 = vmatpush1.msra.mxu0 %v1674
    %1713 = vmatprep.subr.mxu0 0.0
    %1714 = vmatpush1.msra.mxu0 %v1673
    %1715 = vmatprep.subr.mxu0 0.0
    %1716 = vmatpush1.msra.mxu0 %v1672
    %1717 = vmatprep.subr.mxu0 0.0
    %1718 = vmatpush1.msra.mxu0 %v1671
    %1719 = vmatprep.subr.mxu0 0.0
    %1720 = vmatpush2.msra.mxu0 0.0
    %1721 = vmatprep.subr.mxu0 0.0
    %1722 = vmatpush2.msra.mxu0 0.0
    %1723 = vmatprep.subr.mxu0 0.0
    %1724 = vmatpush2.msra.mxu0 0.0
    %1725 = vmatprep.subr.mxu0 0.0
    %1726 = vmatpush2.msra.mxu0 0.0
    %1727 = vmatprep.subr.mxu0 0.0
    %1728 = vmatpush2.msra.mxu0 0.0
    %1729 = vmatprep.subr.mxu0 0.0
    %1730 = vmatpush2.msra.mxu0 0.0
    %1731 = vmatprep.subr.mxu0 0.0
    %1732 = vmatpush2.msra.mxu0 0.0
    %1733 = vmatprep.subr.mxu0 0.0
    %1734 = vmatpush2.msra.mxu0 0.0
    %1735 = vmatprep.subr.mxu0 0.0
    %1736 = vmatpush2.msra.mxu0 0.0
    %1737 = vmatprep.subr.mxu0 0.0
    %1738 = vmatpush2.msra.mxu0 0.0
    %1739 = vmatprep.subr.mxu0 0.0
    %1740 = vmatpush2.msra.mxu0 0.0
    %1741 = vmatprep.subr.mxu0 0.0
    %1742 = vmatpush2.msra.mxu0 0.0
    %1743 = vmatprep.subr.mxu0 0.0
    %1744 = vmatpush2.msra.mxu0 0.0
    %1745 = vmatprep.subr.mxu0 0.0
    %1746 = vmatpush2.msra.mxu0 0.0
    %1747 = vmatprep.subr.mxu0 0.0
    %1748 = vmatpush2.msra.mxu0 0.0
    %1749 = vmatprep.subr.mxu0 0.0
    %1750 = vmatpush2.msra.mxu0 0.0
    %1751 = vmatprep.mubr.f32.mxu0 0.0
    %1752 = vmatmul.mubr.f32.gmra.mxu0 %v1665
    %v1753 = vpop.f32.mrf.mxu0
    %v1754 = vadd.f32 0.0, %v1753
    %v1755 = vpop.f32.mrf.mxu0
    %1756 = vmatprep.mubr.f32.mxu0 0.0
    %1757 = vmatmul.mubr.f32.gmra.mxu0 %v1666
    %v1758 = vpop.f32.mrf.mxu0
    %v1759 = vadd.f32 0.0, %v1758
    %v1760 = vpop.f32.mrf.mxu0
    %1761 = vdwg.mxu0
    %1764 = vrot.lane.b32.xlu0 %v1571, 64
    %v1765 = vpop.permute.xlu0 %1764
    %1766 = vrot.lane.b32.xlu0 %v1572, 64
    %v1767 = vpop.permute.xlu0 %1766
    %v1768 = vsel %vm377, %v1765, 0
    %v1770 = vsel %vm377, %v1767, 0
    %1772 = vmatprep.subr.mxu0 0.0
    %1773 = vmatpush1.msra.mxu0 0.0
    %1774 = vmatprep.subr.mxu0 0.0
    %1775 = vmatpush1.msra.mxu0 0.0
    %1776 = vmatprep.subr.mxu0 0.0
    %1777 = vmatpush1.msra.mxu0 0.0
    %1778 = vmatprep.subr.mxu0 0.0
    %1779 = vmatpush1.msra.mxu0 0.0
    %1780 = vmatprep.subr.mxu0 0.0
    %1781 = vmatpush1.msra.mxu0 0.0
    %1782 = vmatprep.subr.mxu0 0.0
    %1783 = vmatpush1.msra.mxu0 0.0
    %1784 = vmatprep.subr.mxu0 0.0
    %1785 = vmatpush1.msra.mxu0 0.0
    %1786 = vmatprep.subr.mxu0 0.0
    %1787 = vmatpush1.msra.mxu0 0.0
    %1788 = vmatprep.subr.mxu0 0.0
    %1789 = vmatpush1.msra.mxu0 0.0
    %1790 = vmatprep.subr.mxu0 0.0
    %1791 = vmatpush1.msra.mxu0 0.0
    %1792 = vmatprep.subr.mxu0 0.0
    %1793 = vmatpush1.msra.mxu0 0.0
    %1794 = vmatprep.subr.mxu0 0.0
    %1795 = vmatpush1.msra.mxu0 0.0
    %1796 = vmatprep.subr.mxu0 0.0
    %1797 = vmatpush1.msra.mxu0 %v1670
    %1798 = vmatprep.subr.mxu0 0.0
    %1799 = vmatpush1.msra.mxu0 %v1669
    %1800 = vmatprep.subr.mxu0 0.0
    %1801 = vmatpush1.msra.mxu0 %v1668
    %1802 = vmatprep.subr.mxu0 0.0
    %1803 = vmatpush1.msra.mxu0 %v1667
    %1804 = vmatprep.subr.mxu0 0.0
    %1805 = vmatpush2.msra.mxu0 0.0
    %1806 = vmatprep.subr.mxu0 0.0
    %1807 = vmatpush2.msra.mxu0 0.0
    %1808 = vmatprep.subr.mxu0 0.0
    %1809 = vmatpush2.msra.mxu0 0.0
    %1810 = vmatprep.subr.mxu0 0.0
    %1811 = vmatpush2.msra.mxu0 0.0
    %1812 = vmatprep.subr.mxu0 0.0
    %1813 = vmatpush2.msra.mxu0 0.0
    %1814 = vmatprep.subr.mxu0 0.0
    %1815 = vmatpush2.msra.mxu0 0.0
    %1816 = vmatprep.subr.mxu0 0.0
    %1817 = vmatpush2.msra.mxu0 0.0
    %1818 = vmatprep.subr.mxu0 0.0
    %1819 = vmatpush2.msra.mxu0 0.0
    %1820 = vmatprep.subr.mxu0 0.0
    %1821 = vmatpush2.msra.mxu0 0.0
    %1822 = vmatprep.subr.mxu0 0.0
    %1823 = vmatpush2.msra.mxu0 0.0
    %1824 = vmatprep.subr.mxu0 0.0
    %1825 = vmatpush2.msra.mxu0 0.0
    %1826 = vmatprep.subr.mxu0 0.0
    %1827 = vmatpush2.msra.mxu0 0.0
    %1828 = vmatprep.subr.mxu0 0.0
    %1829 = vmatpush2.msra.mxu0 0.0
    %1830 = vmatprep.subr.mxu0 0.0
    %1831 = vmatpush2.msra.mxu0 0.0
    %1832 = vmatprep.subr.mxu0 0.0
    %1833 = vmatpush2.msra.mxu0 0.0
    %1834 = vmatprep.subr.mxu0 0.0
    %1835 = vmatpush2.msra.mxu0 0.0
    %1836 = vmatprep.mubr.f32.mxu0 0.0
    %1837 = vmatmul.mubr.f32.gmra.mxu0 %v1768
    %v1838 = vpop.f32.mrf.mxu0
    %v1839 = vadd.f32 %v1754, %v1838
    %v1840 = vpop.f32.mrf.mxu0
    %1841 = vmatprep.mubr.f32.mxu0 0.0
    %1842 = vmatmul.mubr.f32.gmra.mxu0 %v1770
    %v1843 = vpop.f32.mrf.mxu0
    %v1844 = vadd.f32 %v1759, %v1843
    %v1845 = vpop.f32.mrf.mxu0
    %1846 = vdwg.mxu0
    %v1847 = vld [vmem:[#allocation4 + $0xf0] sm:$0x1]
    %v1848 = vlaneseq
    %v1849 = vshrl.u32 %v1848, 7
    %v1850 = vsub.s32 0, %v1849
    %v1851 = vrot.slane %v1847, %v1850
    %v1852 = vadd.f32 %v1839, %v1851
    %v1853 = vadd.f32 %v1844, %v1851
    %v1854 = vmax.f32 %v1852, 0.0
    %v1855 = vmax.f32 %v1853, 0.0
    %v1856 = vld [vmem:[#allocation4 + $0xf8] sm:$0xff]
    %v1857 = vld [vmem:[#allocation4 + $0x100] sm:$0xff]
    %v1858 = vld [vmem:[#allocation4 + $0x108] sm:$0xff]
    %v1859 = vld [vmem:[#allocation4 + $0x110] sm:$0xff]
    %v1860 = vld [vmem:[#allocation4 + $0x118] sm:$0xff]
    %v1861 = vld [vmem:[#allocation4 + $0x120] sm:$0xff]
    %v1862 = vld [vmem:[#allocation4 + $0x128] sm:$0xff]
    %v1863 = vld [vmem:[#allocation4 + $0x130] sm:$0xff]
    %v1864 = vld [vmem:[#allocation4 + $0x138] sm:$0x1]
    %v1865 = vlaneseq
    %v1866 = vshrl.u32 %v1865, 7
    %v1867 = vsub.s32 0, %v1866
    %v1868 = vrot.slane %v1864, %v1867
    %v1870 = vsel %vm130, %v1854, 0
    %v1873 = vsel %vm130, %v1855, 0
    %1875 = vmatprep.subr.mxu0 0.0
    %1876 = vmatpush1.msra.mxu0 0.0
    %1877 = vmatprep.subr.mxu0 0.0
    %1878 = vmatpush1.msra.mxu0 0.0
    %1879 = vmatprep.subr.mxu0 0.0
    %1880 = vmatpush1.msra.mxu0 0.0
    %1881 = vmatprep.subr.mxu0 0.0
    %1882 = vmatpush1.msra.mxu0 0.0
    %1883 = vmatprep.subr.mxu0 0.0
    %1884 = vmatpush1.msra.mxu0 0.0
    %1885 = vmatprep.subr.mxu0 0.0
    %1886 = vmatpush1.msra.mxu0 0.0
    %1887 = vmatprep.subr.mxu0 0.0
    %1888 = vmatpush1.msra.mxu0 0.0
    %1889 = vmatprep.subr.mxu0 0.0
    %1890 = vmatpush1.msra.mxu0 0.0
    %1891 = vmatprep.subr.mxu0 0.0
    %1892 = vmatpush1.msra.mxu0 %v1863
    %1893 = vmatprep.subr.mxu0 0.0
    %1894 = vmatpush1.msra.mxu0 %v1862
    %1895 = vmatprep.subr.mxu0 0.0
    %1896 = vmatpush1.msra.mxu0 %v1861
    %1897 = vmatprep.subr.mxu0 0.0
    %1898 = vmatpush1.msra.mxu0 %v1860
    %1899 = vmatprep.subr.mxu0 0.0
    %1900 = vmatpush1.msra.mxu0 %v1859
    %1901 = vmatprep.subr.mxu0 0.0
    %1902 = vmatpush1.msra.mxu0 %v1858
    %1903 = vmatprep.subr.mxu0 0.0
    %1904 = vmatpush1.msra.mxu0 %v1857
    %1905 = vmatprep.subr.mxu0 0.0
    %1906 = vmatpush1.msra.mxu0 %v1856
    %1907 = vmatprep.subr.mxu0 0.0
    %1908 = vmatpush2.msra.mxu0 0.0
    %1909 = vmatprep.subr.mxu0 0.0
    %1910 = vmatpush2.msra.mxu0 0.0
    %1911 = vmatprep.subr.mxu0 0.0
    %1912 = vmatpush2.msra.mxu0 0.0
    %1913 = vmatprep.subr.mxu0 0.0
    %1914 = vmatpush2.msra.mxu0 0.0
    %1915 = vmatprep.subr.mxu0 0.0
    %1916 = vmatpush2.msra.mxu0 0.0
    %1917 = vmatprep.subr.mxu0 0.0
    %1918 = vmatpush2.msra.mxu0 0.0
    %1919 = vmatprep.subr.mxu0 0.0
    %1920 = vmatpush2.msra.mxu0 0.0
    %1921 = vmatprep.subr.mxu0 0.0
    %1922 = vmatpush2.msra.mxu0 0.0
    %1923 = vmatprep.subr.mxu0 0.0
    %1924 = vmatpush2.msra.mxu0 0.0
    %1925 = vmatprep.subr.mxu0 0.0
    %1926 = vmatpush2.msra.mxu0 0.0
    %1927 = vmatprep.subr.mxu0 0.0
    %1928 = vmatpush2.msra.mxu0 0.0
    %1929 = vmatprep.subr.mxu0 0.0
    %1930 = vmatpush2.msra.mxu0 0.0
    %1931 = vmatprep.subr.mxu0 0.0
    %1932 = vmatpush2.msra.mxu0 0.0
    %1933 = vmatprep.subr.mxu0 0.0
    %1934 = vmatpush2.msra.mxu0 0.0
    %1935 = vmatprep.subr.mxu0 0.0
    %1936 = vmatpush2.msra.mxu0 0.0
    %1937 = vmatprep.subr.mxu0 0.0
    %1938 = vmatpush2.msra.mxu0 0.0
    %1939 = vmatprep.mubr.f32.mxu0 0.0
    %1940 = vmatmul.mubr.f32.gmra.mxu0 %v1870
    %v1941 = vpop.f32.mrf.mxu0
    %v1942 = vadd.f32 %v1868, %v1941
    %v1943 = vpop.f32.mrf.mxu0
    %1944 = vmatprep.mubr.f32.mxu0 0.0
    %1945 = vmatmul.mubr.f32.gmra.mxu0 %v1873
    %v1946 = vpop.f32.mrf.mxu0
    %v1947 = vadd.f32 %v1868, %v1946
    %v1948 = vpop.f32.mrf.mxu0
    %1949 = vdwg.mxu0
    %v1950 = vld [vmem:[#allocation4 + $0x180] sm:$0xff]
    %v1951 = vld [vmem:[#allocation4 + $0x188] sm:$0xff]
    %v1952 = vld [vmem:[#allocation4 + $0x190] sm:$0xff]
    %v1953 = vld [vmem:[#allocation4 + $0x198] sm:$0xff]
    %v1954 = vld [vmem:[#allocation4 + $0x1a0] sm:$0x1]
    %v1955 = vlaneseq
    %v1956 = vshrl.u32 %v1955, 7
    %v1957 = vsub.s32 0, %v1956
    %v1958 = vrot.slane %v1954, %v1957
    %v1960 = vsel %vm377, %v1942, 0
    %v1963 = vsel %vm377, %v1947, 0
    %1965 = vmatprep.subr.mxu0 0.0
    %1966 = vmatpush1.msra.mxu0 0.0
    %1967 = vmatprep.subr.mxu0 0.0
    %1968 = vmatpush1.msra.mxu0 0.0
    %1969 = vmatprep.subr.mxu0 0.0
    %1970 = vmatpush1.msra.mxu0 0.0
    %1971 = vmatprep.subr.mxu0 0.0
    %1972 = vmatpush1.msra.mxu0 0.0
    %1973 = vmatprep.subr.mxu0 0.0
    %1974 = vmatpush1.msra.mxu0 0.0
    %1975 = vmatprep.subr.mxu0 0.0
    %1976 = vmatpush1.msra.mxu0 0.0
    %1977 = vmatprep.subr.mxu0 0.0
    %1978 = vmatpush1.msra.mxu0 0.0
    %1979 = vmatprep.subr.mxu0 0.0
    %1980 = vmatpush1.msra.mxu0 0.0
    %1981 = vmatprep.subr.mxu0 0.0
    %1982 = vmatpush1.msra.mxu0 0.0
    %1983 = vmatprep.subr.mxu0 0.0
    %1984 = vmatpush1.msra.mxu0 0.0
    %1985 = vmatprep.subr.mxu0 0.0
    %1986 = vmatpush1.msra.mxu0 0.0
    %1987 = vmatprep.subr.mxu0 0.0
    %1988 = vmatpush1.msra.mxu0 0.0
    %1989 = vmatprep.subr.mxu0 0.0
    %1990 = vmatpush1.msra.mxu0 %v1953
    %1991 = vmatprep.subr.mxu0 0.0
    %1992 = vmatpush1.msra.mxu0 %v1952
    %1993 = vmatprep.subr.mxu0 0.0
    %1994 = vmatpush1.msra.mxu0 %v1951
    %1995 = vmatprep.subr.mxu0 0.0
    %1996 = vmatpush1.msra.mxu0 %v1950
    %1997 = vmatprep.subr.mxu0 0.0
    %1998 = vmatpush2.msra.mxu0 0.0
    %1999 = vmatprep.subr.mxu0 0.0
    %2000 = vmatpush2.msra.mxu0 0.0
    %2001 = vmatprep.subr.mxu0 0.0
    %2002 = vmatpush2.msra.mxu0 0.0
    %2003 = vmatprep.subr.mxu0 0.0
    %2004 = vmatpush2.msra.mxu0 0.0
    %2005 = vmatprep.subr.mxu0 0.0
    %2006 = vmatpush2.msra.mxu0 0.0
    %2007 = vmatprep.subr.mxu0 0.0
    %2008 = vmatpush2.msra.mxu0 0.0
    %2009 = vmatprep.subr.mxu0 0.0
    %2010 = vmatpush2.msra.mxu0 0.0
    %2011 = vmatprep.subr.mxu0 0.0
    %2012 = vmatpush2.msra.mxu0 0.0
    %2013 = vmatprep.subr.mxu0 0.0
    %2014 = vmatpush2.msra.mxu0 0.0
    %2015 = vmatprep.subr.mxu0 0.0
    %2016 = vmatpush2.msra.mxu0 0.0
    %2017 = vmatprep.subr.mxu0 0.0
    %2018 = vmatpush2.msra.mxu0 0.0
    %2019 = vmatprep.subr.mxu0 0.0
    %2020 = vmatpush2.msra.mxu0 0.0
    %2021 = vmatprep.subr.mxu0 0.0
    %2022 = vmatpush2.msra.mxu0 0.0
    %2023 = vmatprep.subr.mxu0 0.0
    %2024 = vmatpush2.msra.mxu0 0.0
    %2025 = vmatprep.subr.mxu0 0.0
    %2026 = vmatpush2.msra.mxu0 0.0
    %2027 = vmatprep.subr.mxu0 0.0
    %2028 = vmatpush2.msra.mxu0 0.0
    %2029 = vmatprep.mubr.f32.mxu0 0.0
    %2030 = vmatmul.mubr.f32.gmra.mxu0 %v1960
    %v2031 = vpop.f32.mrf.mxu0
    %v2032 = vadd.f32 %v1958, %v2031
    %v2033 = vpop.f32.mrf.mxu0
    %2034 = vmatprep.mubr.f32.mxu0 0.0
    %2035 = vmatmul.mubr.f32.gmra.mxu0 %v1963
    %v2036 = vpop.f32.mrf.mxu0
    %v2037 = vadd.f32 %v1958, %v2036
    %v2038 = vpop.f32.mrf.mxu0
    %2039 = vdwg.mxu0
    %v2040 = vld [vmem:[#allocation4 + $0x140] sm:$0xff]
    %v2041 = vld [vmem:[#allocation4 + $0x148] sm:$0xff]
    %v2042 = vld [vmem:[#allocation4 + $0x150] sm:$0xff]
    %v2043 = vld [vmem:[#allocation4 + $0x158] sm:$0xff]
    %v2044 = vld [vmem:[#allocation4 + $0x160] sm:$0xff]
    %v2045 = vld [vmem:[#allocation4 + $0x168] sm:$0xff]
    %v2046 = vld [vmem:[#allocation4 + $0x170] sm:$0xff]
    %v2047 = vld [vmem:[#allocation4 + $0x178] sm:$0xff]
    %vm2048 = vcmask 130048
    %v2050 = vsel %vm2048, %v2040, 0
    %v2053 = vsel %vm2048, %v2041, 0
    %v2056 = vsel %vm2048, %v2042, 0
    %v2059 = vsel %vm2048, %v2043, 0
    %v2062 = vsel %vm2048, %v2044, 0
    %v2065 = vsel %vm2048, %v2045, 0
    %v2068 = vsel %vm2048, %v2046, 0
    %v2071 = vsel %vm2048, %v2047, 0
    %2073 = vmatprep.subr.mxu0 0.0
    %2074 = vmatpush1.msra.mxu0 0.0
    %2075 = vmatprep.subr.mxu0 0.0
    %2076 = vmatpush1.msra.mxu0 0.0
    %2077 = vmatprep.subr.mxu0 0.0
    %2078 = vmatpush1.msra.mxu0 0.0
    %2079 = vmatprep.subr.mxu0 0.0
    %2080 = vmatpush1.msra.mxu0 0.0
    %2081 = vmatprep.subr.mxu0 0.0
    %2082 = vmatpush1.msra.mxu0 0.0
    %2083 = vmatprep.subr.mxu0 0.0
    %2084 = vmatpush1.msra.mxu0 0.0
    %2085 = vmatprep.subr.mxu0 0.0
    %2086 = vmatpush1.msra.mxu0 0.0
    %2087 = vmatprep.subr.mxu0 0.0
    %2088 = vmatpush1.msra.mxu0 0.0
    %2089 = vmatprep.subr.mxu0 0.0
    %2090 = vmatpush1.msra.mxu0 0.0
    %2091 = vmatprep.subr.mxu0 0.0
    %2092 = vmatpush1.msra.mxu0 0.0
    %2093 = vmatprep.subr.mxu0 0.0
    %2094 = vmatpush1.msra.mxu0 0.0
    %2095 = vmatprep.subr.mxu0 0.0
    %2096 = vmatpush1.msra.mxu0 0.0
    %2097 = vmatprep.subr.mxu0 0.0
    %2098 = vmatpush1.msra.mxu0 0.0
    %2099 = vmatprep.subr.mxu0 0.0
    %2100 = vmatpush1.msra.mxu0 0.0
    %2101 = vmatprep.subr.mxu0 0.0
    %2102 = vmatpush1.msra.mxu0 %v2037
    %2103 = vmatprep.subr.mxu0 0.0
    %2104 = vmatpush1.msra.mxu0 %v2032
    %2105 = vmatprep.subr.mxu0 0.0
    %2106 = vmatpush2.msra.mxu0 0.0
    %2107 = vmatprep.subr.mxu0 0.0
    %2108 = vmatpush2.msra.mxu0 0.0
    %2109 = vmatprep.subr.mxu0 0.0
    %2110 = vmatpush2.msra.mxu0 0.0
    %2111 = vmatprep.subr.mxu0 0.0
    %2112 = vmatpush2.msra.mxu0 0.0
    %2113 = vmatprep.subr.mxu0 0.0
    %2114 = vmatpush2.msra.mxu0 0.0
    %2115 = vmatprep.subr.mxu0 0.0
    %2116 = vmatpush2.msra.mxu0 0.0
    %2117 = vmatprep.subr.mxu0 0.0
    %2118 = vmatpush2.msra.mxu0 0.0
    %2119 = vmatprep.subr.mxu0 0.0
    %2120 = vmatpush2.msra.mxu0 0.0
    %2121 = vmatprep.subr.mxu0 0.0
    %2122 = vmatpush2.msra.mxu0 0.0
    %2123 = vmatprep.subr.mxu0 0.0
    %2124 = vmatpush2.msra.mxu0 0.0
    %2125 = vmatprep.subr.mxu0 0.0
    %2126 = vmatpush2.msra.mxu0 0.0
    %2127 = vmatprep.subr.mxu0 0.0
    %2128 = vmatpush2.msra.mxu0 0.0
    %2129 = vmatprep.subr.mxu0 0.0
    %2130 = vmatpush2.msra.mxu0 0.0
    %2131 = vmatprep.subr.mxu0 0.0
    %2132 = vmatpush2.msra.mxu0 0.0
    %2133 = vmatprep.subr.mxu0 0.0
    %2134 = vmatpush2.msra.mxu0 0.0
    %2135 = vmatprep.subr.mxu0 0.0
    %2136 = vmatpush2.msra.mxu0 0.0
    %2137 = vmatprep.mubr.f32.mxu0 0.0
    %2138 = vmatmul.mubr.f32.gmra.mxu0 %v2050
    %v2139 = vpop.f32.mrf.mxu0
    %v2140 = vadd.f32 0.0, %v2139
    %v2141 = vpop.f32.mrf.mxu0
    %2142 = vmatprep.mubr.f32.mxu0 0.0
    %2143 = vmatmul.mubr.f32.gmra.mxu0 %v2053
    %v2144 = vpop.f32.mrf.mxu0
    %v2145 = vadd.f32 0.0, %v2144
    %v2146 = vpop.f32.mrf.mxu0
    %2147 = vmatprep.mubr.f32.mxu0 0.0
    %2148 = vmatmul.mubr.f32.gmra.mxu0 %v2056
    %v2149 = vpop.f32.mrf.mxu0
    %v2150 = vadd.f32 0.0, %v2149
    %v2151 = vpop.f32.mrf.mxu0
    %2152 = vmatprep.mubr.f32.mxu0 0.0
    %2153 = vmatmul.mubr.f32.gmra.mxu0 %v2059
    %v2154 = vpop.f32.mrf.mxu0
    %v2155 = vadd.f32 0.0, %v2154
    %v2156 = vpop.f32.mrf.mxu0
    %2157 = vmatprep.mubr.f32.mxu0 0.0
    %2158 = vmatmul.mubr.f32.gmra.mxu0 %v2062
    %v2159 = vpop.f32.mrf.mxu0
    %v2160 = vadd.f32 0.0, %v2159
    %v2161 = vpop.f32.mrf.mxu0
    %2162 = vmatprep.mubr.f32.mxu0 0.0
    %2163 = vmatmul.mubr.f32.gmra.mxu0 %v2065
    %v2164 = vpop.f32.mrf.mxu0
    %v2165 = vadd.f32 0.0, %v2164
    %v2166 = vpop.f32.mrf.mxu0
    %2167 = vmatprep.mubr.f32.mxu0 0.0
    %2168 = vmatmul.mubr.f32.gmra.mxu0 %v2068
    %v2169 = vpop.f32.mrf.mxu0
    %v2170 = vadd.f32 0.0, %v2169
    %v2171 = vpop.f32.mrf.mxu0
    %2172 = vmatprep.mubr.f32.mxu0 0.0
    %2173 = vmatmul.mubr.f32.gmra.mxu0 %v2071
    %v2174 = vpop.f32.mrf.mxu0
    %v2175 = vadd.f32 0.0, %v2174
    %v2176 = vpop.f32.mrf.mxu0
    %2177 = vdwg.mxu0
    %v2178 = vld [vmem:[#allocation4 + $0x1a8] sm:$0xff]
    %v2179 = vld [vmem:[#allocation4 + $0x1b0] sm:$0xff]
    %v2180 = vld [vmem:[#allocation4 + $0x1b8] sm:$0xff]
    %v2181 = vld [vmem:[#allocation4 + $0x1c0] sm:$0xff]
    %v2182 = vld [vmem:[#allocation4 + $0x1c8] sm:$0x1]
    %v2183 = vlaneseq
    %v2184 = vshrl.u32 %v2183, 7
    %v2185 = vsub.s32 0, %v2184
    %v2186 = vrot.slane %v2182, %v2185
    %2187 = vmatprep.subr.mxu0 0.0
    %2188 = vmatpush1.msra.mxu0 0.0
    %2189 = vmatprep.subr.mxu0 0.0
    %2190 = vmatpush1.msra.mxu0 0.0
    %2191 = vmatprep.subr.mxu0 0.0
    %2192 = vmatpush1.msra.mxu0 0.0
    %2193 = vmatprep.subr.mxu0 0.0
    %2194 = vmatpush1.msra.mxu0 0.0
    %2195 = vmatprep.subr.mxu0 0.0
    %2196 = vmatpush1.msra.mxu0 0.0
    %2197 = vmatprep.subr.mxu0 0.0
    %2198 = vmatpush1.msra.mxu0 0.0
    %2199 = vmatprep.subr.mxu0 0.0
    %2200 = vmatpush1.msra.mxu0 0.0
    %2201 = vmatprep.subr.mxu0 0.0
    %2202 = vmatpush1.msra.mxu0 0.0
    %2203 = vmatprep.subr.mxu0 0.0
    %2204 = vmatpush1.msra.mxu0 0.0
    %2205 = vmatprep.subr.mxu0 0.0
    %2206 = vmatpush1.msra.mxu0 0.0
    %2207 = vmatprep.subr.mxu0 0.0
    %2208 = vmatpush1.msra.mxu0 0.0
    %2209 = vmatprep.subr.mxu0 0.0
    %2210 = vmatpush1.msra.mxu0 0.0
    %2211 = vmatprep.subr.mxu0 0.0
    %2212 = vmatpush1.msra.mxu0 %v2181
    %2213 = vmatprep.subr.mxu0 0.0
    %2214 = vmatpush1.msra.mxu0 %v2180
    %2215 = vmatprep.subr.mxu0 0.0
    %2216 = vmatpush1.msra.mxu0 %v2179
    %2217 = vmatprep.subr.mxu0 0.0
    %2218 = vmatpush1.msra.mxu0 %v2178
    %2219 = vmatprep.subr.mxu0 0.0
    %2220 = vmatpush2.msra.mxu0 0.0
    %2221 = vmatprep.subr.mxu0 0.0
    %2222 = vmatpush2.msra.mxu0 0.0
    %2223 = vmatprep.subr.mxu0 0.0
    %2224 = vmatpush2.msra.mxu0 0.0
    %2225 = vmatprep.subr.mxu0 0.0
    %2226 = vmatpush2.msra.mxu0 0.0
    %2227 = vmatprep.subr.mxu0 0.0
    %2228 = vmatpush2.msra.mxu0 0.0
    %2229 = vmatprep.subr.mxu0 0.0
    %2230 = vmatpush2.msra.mxu0 0.0
    %2231 = vmatprep.subr.mxu0 0.0
    %2232 = vmatpush2.msra.mxu0 0.0
    %2233 = vmatprep.subr.mxu0 0.0
    %2234 = vmatpush2.msra.mxu0 0.0
    %2235 = vmatprep.subr.mxu0 0.0
    %2236 = vmatpush2.msra.mxu0 0.0
    %2237 = vmatprep.subr.mxu0 0.0
    %2238 = vmatpush2.msra.mxu0 0.0
    %2239 = vmatprep.subr.mxu0 0.0
    %2240 = vmatpush2.msra.mxu0 0.0
    %2241 = vmatprep.subr.mxu0 0.0
    %2242 = vmatpush2.msra.mxu0 0.0
    %2243 = vmatprep.subr.mxu0 0.0
    %2244 = vmatpush2.msra.mxu0 0.0
    %2245 = vmatprep.subr.mxu0 0.0
    %2246 = vmatpush2.msra.mxu0 0.0
    %2247 = vmatprep.subr.mxu0 0.0
    %2248 = vmatpush2.msra.mxu0 0.0
    %2249 = vmatprep.subr.mxu0 0.0
    %2250 = vmatpush2.msra.mxu0 0.0
    %2251 = vmatprep.mubr.f32.mxu0 0.0
    %2252 = vmatmul.mubr.f32.gmra.mxu0 %v379
    %v2253 = vpop.f32.mrf.mxu0
    %v2254 = vadd.f32 0.0, %v2253
    %v2255 = vpop.f32.mrf.mxu0
    %2256 = vdwg.mxu0
    %v2257 = vadd.f32 %v2140, %v2254
    %v2258 = vxor.u32 %v2257, 2147483648
    %v2259 = vmul.f32 %v2258, 1.442695
    %v2260 = vpow.pop %v2259
    %v2261 = vadd.f32 %v2260, 1.0
    %v2262 = vrcp.pop %v2261
    %v2263 = vmul.f32 1.0, %v2262
    %2265 = vrot.lane.b32.xlu0 %v2186, 64
    %v2266 = vpop.permute.xlu0 %2265
    %v2268 = vadd.f32 %v2254, %v2266
    %2270 = vrot.lane.b32.xlu0 %v2268, 64
    %v2271 = vpop.permute.xlu0 %2270
    %v2273 = vmul.f32 %v2263, %v2271
    %2275 = vrot.lane.b32.xlu0 %v2273, 64
    %v2276 = vpop.permute.xlu0 %2275
    %v2278 = vadd.f32 %v2140, %v2276
    %v2279 = vtanh.pop %v2278
    %v2280 = vsub.f32 1.0, %v2263
    %2282 = vrot.lane.b32.xlu0 %v2279, 96
    %v2283 = vpop.permute.xlu0 %2282
    %v2285 = vmul.f32 %v2280, %v2283
    %v2286 = vmul.f32 %v2263, 0.0
    %v2287 = vadd.f32 %v2285, %v2286
    %2289 = vrot.lane.b32.xlu0 %v2287, 96
    %v2290 = vpop.permute.xlu0 %2289
    %v2291 = vsel %vm377, %v2290, 0
    %2293 = vmatprep.subr.mxu0 0.0
    %2294 = vmatpush1.msra.mxu0 0.0
    %2295 = vmatprep.subr.mxu0 0.0
    %2296 = vmatpush1.msra.mxu0 0.0
    %2297 = vmatprep.subr.mxu0 0.0
    %2298 = vmatpush1.msra.mxu0 0.0
    %2299 = vmatprep.subr.mxu0 0.0
    %2300 = vmatpush1.msra.mxu0 0.0
    %2301 = vmatprep.subr.mxu0 0.0
    %2302 = vmatpush1.msra.mxu0 0.0
    %2303 = vmatprep.subr.mxu0 0.0
    %2304 = vmatpush1.msra.mxu0 0.0
    %2305 = vmatprep.subr.mxu0 0.0
    %2306 = vmatpush1.msra.mxu0 0.0
    %2307 = vmatprep.subr.mxu0 0.0
    %2308 = vmatpush1.msra.mxu0 0.0
    %2309 = vmatprep.subr.mxu0 0.0
    %2310 = vmatpush1.msra.mxu0 0.0
    %2311 = vmatprep.subr.mxu0 0.0
    %2312 = vmatpush1.msra.mxu0 0.0
    %2313 = vmatprep.subr.mxu0 0.0
    %2314 = vmatpush1.msra.mxu0 0.0
    %2315 = vmatprep.subr.mxu0 0.0
    %2316 = vmatpush1.msra.mxu0 0.0
    %2317 = vmatprep.subr.mxu0 0.0
    %2318 = vmatpush1.msra.mxu0 %v2181
    %2319 = vmatprep.subr.mxu0 0.0
    %2320 = vmatpush1.msra.mxu0 %v2180
    %2321 = vmatprep.subr.mxu0 0.0
    %2322 = vmatpush1.msra.mxu0 %v2179
    %2323 = vmatprep.subr.mxu0 0.0
    %2324 = vmatpush1.msra.mxu0 %v2178
    %2325 = vmatprep.subr.mxu0 0.0
    %2326 = vmatpush2.msra.mxu0 0.0
    %2327 = vmatprep.subr.mxu0 0.0
    %2328 = vmatpush2.msra.mxu0 0.0
    %2329 = vmatprep.subr.mxu0 0.0
    %2330 = vmatpush2.msra.mxu0 0.0
    %2331 = vmatprep.subr.mxu0 0.0
    %2332 = vmatpush2.msra.mxu0 0.0
    %2333 = vmatprep.subr.mxu0 0.0
    %2334 = vmatpush2.msra.mxu0 0.0
    %2335 = vmatprep.subr.mxu0 0.0
    %2336 = vmatpush2.msra.mxu0 0.0
    %2337 = vmatprep.subr.mxu0 0.0
    %2338 = vmatpush2.msra.mxu0 0.0
    %2339 = vmatprep.subr.mxu0 0.0
    %2340 = vmatpush2.msra.mxu0 0.0
    %2341 = vmatprep.subr.mxu0 0.0
    %2342 = vmatpush2.msra.mxu0 0.0
    %2343 = vmatprep.subr.mxu0 0.0
    %2344 = vmatpush2.msra.mxu0 0.0
    %2345 = vmatprep.subr.mxu0 0.0
    %2346 = vmatpush2.msra.mxu0 0.0
    %2347 = vmatprep.subr.mxu0 0.0
    %2348 = vmatpush2.msra.mxu0 0.0
    %2349 = vmatprep.subr.mxu0 0.0
    %2350 = vmatpush2.msra.mxu0 0.0
    %2351 = vmatprep.subr.mxu0 0.0
    %2352 = vmatpush2.msra.mxu0 0.0
    %2353 = vmatprep.subr.mxu0 0.0
    %2354 = vmatpush2.msra.mxu0 0.0
    %2355 = vmatprep.subr.mxu0 0.0
    %2356 = vmatpush2.msra.mxu0 0.0
    %2357 = vmatprep.mubr.f32.mxu0 0.0
    %2358 = vmatmul.mubr.f32.gmra.mxu0 %v2291
    %v2359 = vpop.f32.mrf.mxu0
    %v2360 = vadd.f32 0.0, %v2359
    %v2361 = vpop.f32.mrf.mxu0
    %2362 = vdwg.mxu0
    %v2363 = vadd.f32 %v2145, %v2360
    %v2364 = vxor.u32 %v2363, 2147483648
    %v2365 = vmul.f32 %v2364, 1.442695
    %v2366 = vpow.pop %v2365
    %v2367 = vadd.f32 %v2366, 1.0
    %v2368 = vrcp.pop %v2367
    %v2369 = vmul.f32 1.0, %v2368
    %v2370 = vadd.f32 %v2360, %v2266
    %2372 = vrot.lane.b32.xlu0 %v2370, 64
    %v2373 = vpop.permute.xlu0 %2372
    %v2375 = vmul.f32 %v2369, %v2373
    %2377 = vrot.lane.b32.xlu0 %v2375, 64
    %v2378 = vpop.permute.xlu0 %2377
    %v2380 = vadd.f32 %v2145, %v2378
    %v2381 = vtanh.pop %v2380
    %v2382 = vsub.f32 1.0, %v2369
    %2384 = vrot.lane.b32.xlu0 %v2381, 96
    %v2385 = vpop.permute.xlu0 %2384
    %v2387 = vmul.f32 %v2382, %v2385
    %v2388 = vmul.f32 %v2369, %v2287
    %v2389 = vadd.f32 %v2387, %v2388
    %2391 = vrot.lane.b32.xlu0 %v2389, 96
    %v2392 = vpop.permute.xlu0 %2391
    %v2393 = vsel %vm377, %v2392, 0
    %2395 = vmatprep.subr.mxu0 0.0
    %2396 = vmatpush1.msra.mxu0 0.0
    %2397 = vmatprep.subr.mxu0 0.0
    %2398 = vmatpush1.msra.mxu0 0.0
    %2399 = vmatprep.subr.mxu0 0.0
    %2400 = vmatpush1.msra.mxu0 0.0
    %2401 = vmatprep.subr.mxu0 0.0
    %2402 = vmatpush1.msra.mxu0 0.0
    %2403 = vmatprep.subr.mxu0 0.0
    %2404 = vmatpush1.msra.mxu0 0.0
    %2405 = vmatprep.subr.mxu0 0.0
    %2406 = vmatpush1.msra.mxu0 0.0
    %2407 = vmatprep.subr.mxu0 0.0
    %2408 = vmatpush1.msra.mxu0 0.0
    %2409 = vmatprep.subr.mxu0 0.0
    %2410 = vmatpush1.msra.mxu0 0.0
    %2411 = vmatprep.subr.mxu0 0.0
    %2412 = vmatpush1.msra.mxu0 0.0
    %2413 = vmatprep.subr.mxu0 0.0
    %2414 = vmatpush1.msra.mxu0 0.0
    %2415 = vmatprep.subr.mxu0 0.0
    %2416 = vmatpush1.msra.mxu0 0.0
    %2417 = vmatprep.subr.mxu0 0.0
    %2418 = vmatpush1.msra.mxu0 0.0
    %2419 = vmatprep.subr.mxu0 0.0
    %2420 = vmatpush1.msra.mxu0 %v2181
    %2421 = vmatprep.subr.mxu0 0.0
    %2422 = vmatpush1.msra.mxu0 %v2180
    %2423 = vmatprep.subr.mxu0 0.0
    %2424 = vmatpush1.msra.mxu0 %v2179
    %2425 = vmatprep.subr.mxu0 0.0
    %2426 = vmatpush1.msra.mxu0 %v2178
    %2427 = vmatprep.subr.mxu0 0.0
    %2428 = vmatpush2.msra.mxu0 0.0
    %2429 = vmatprep.subr.mxu0 0.0
    %2430 = vmatpush2.msra.mxu0 0.0
    %2431 = vmatprep.subr.mxu0 0.0
    %2432 = vmatpush2.msra.mxu0 0.0
    %2433 = vmatprep.subr.mxu0 0.0
    %2434 = vmatpush2.msra.mxu0 0.0
    %2435 = vmatprep.subr.mxu0 0.0
    %2436 = vmatpush2.msra.mxu0 0.0
    %2437 = vmatprep.subr.mxu0 0.0
    %2438 = vmatpush2.msra.mxu0 0.0
    %2439 = vmatprep.subr.mxu0 0.0
    %2440 = vmatpush2.msra.mxu0 0.0
    %2441 = vmatprep.subr.mxu0 0.0
    %2442 = vmatpush2.msra.mxu0 0.0
    %2443 = vmatprep.subr.mxu0 0.0
    %2444 = vmatpush2.msra.mxu0 0.0
    %2445 = vmatprep.subr.mxu0 0.0
    %2446 = vmatpush2.msra.mxu0 0.0
    %2447 = vmatprep.subr.mxu0 0.0
    %2448 = vmatpush2.msra.mxu0 0.0
    %2449 = vmatprep.subr.mxu0 0.0
    %2450 = vmatpush2.msra.mxu0 0.0
    %2451 = vmatprep.subr.mxu0 0.0
    %2452 = vmatpush2.msra.mxu0 0.0
    %2453 = vmatprep.subr.mxu0 0.0
    %2454 = vmatpush2.msra.mxu0 0.0
    %2455 = vmatprep.subr.mxu0 0.0
    %2456 = vmatpush2.msra.mxu0 0.0
    %2457 = vmatprep.subr.mxu0 0.0
    %2458 = vmatpush2.msra.mxu0 0.0
    %2459 = vmatprep.mubr.f32.mxu0 0.0
    %2460 = vmatmul.mubr.f32.gmra.mxu0 %v2393
    %v2461 = vpop.f32.mrf.mxu0
    %v2462 = vadd.f32 0.0, %v2461
    %v2463 = vpop.f32.mrf.mxu0
    %2464 = vdwg.mxu0
    %v2465 = vadd.f32 %v2150, %v2462
    %v2466 = vxor.u32 %v2465, 2147483648
    %v2467 = vmul.f32 %v2466, 1.442695
    %v2468 = vpow.pop %v2467
    %v2469 = vadd.f32 %v2468, 1.0
    %v2470 = vrcp.pop %v2469
    %v2471 = vmul.f32 1.0, %v2470
    %v2472 = vadd.f32 %v2462, %v2266
    %2474 = vrot.lane.b32.xlu0 %v2472, 64
    %v2475 = vpop.permute.xlu0 %2474
    %v2477 = vmul.f32 %v2471, %v2475
    %2479 = vrot.lane.b32.xlu0 %v2477, 64
    %v2480 = vpop.permute.xlu0 %2479
    %v2482 = vadd.f32 %v2150, %v2480
    %v2483 = vtanh.pop %v2482
    %v2484 = vsub.f32 1.0, %v2471
    %2486 = vrot.lane.b32.xlu0 %v2483, 96
    %v2487 = vpop.permute.xlu0 %2486
    %v2489 = vmul.f32 %v2484, %v2487
    %v2490 = vmul.f32 %v2471, %v2389
    %v2491 = vadd.f32 %v2489, %v2490
    %2493 = vrot.lane.b32.xlu0 %v2491, 96
    %v2494 = vpop.permute.xlu0 %2493
    %v2495 = vsel %vm377, %v2494, 0
    %2497 = vmatprep.subr.mxu0 0.0
    %2498 = vmatpush1.msra.mxu0 0.0
    %2499 = vmatprep.subr.mxu0 0.0
    %2500 = vmatpush1.msra.mxu0 0.0
    %2501 = vmatprep.subr.mxu0 0.0
    %2502 = vmatpush1.msra.mxu0 0.0
    %2503 = vmatprep.subr.mxu0 0.0
    %2504 = vmatpush1.msra.mxu0 0.0
    %2505 = vmatprep.subr.mxu0 0.0
    %2506 = vmatpush1.msra.mxu0 0.0
    %2507 = vmatprep.subr.mxu0 0.0
    %2508 = vmatpush1.msra.mxu0 0.0
    %2509 = vmatprep.subr.mxu0 0.0
    %2510 = vmatpush1.msra.mxu0 0.0
    %2511 = vmatprep.subr.mxu0 0.0
    %2512 = vmatpush1.msra.mxu0 0.0
    %2513 = vmatprep.subr.mxu0 0.0
    %2514 = vmatpush1.msra.mxu0 0.0
    %2515 = vmatprep.subr.mxu0 0.0
    %2516 = vmatpush1.msra.mxu0 0.0
    %2517 = vmatprep.subr.mxu0 0.0
    %2518 = vmatpush1.msra.mxu0 0.0
    %2519 = vmatprep.subr.mxu0 0.0
    %2520 = vmatpush1.msra.mxu0 0.0
    %2521 = vmatprep.subr.mxu0 0.0
    %2522 = vmatpush1.msra.mxu0 %v2181
    %2523 = vmatprep.subr.mxu0 0.0
    %2524 = vmatpush1.msra.mxu0 %v2180
    %2525 = vmatprep.subr.mxu0 0.0
    %2526 = vmatpush1.msra.mxu0 %v2179
    %2527 = vmatprep.subr.mxu0 0.0
    %2528 = vmatpush1.msra.mxu0 %v2178
    %2529 = vmatprep.subr.mxu0 0.0
    %2530 = vmatpush2.msra.mxu0 0.0
    %2531 = vmatprep.subr.mxu0 0.0
    %2532 = vmatpush2.msra.mxu0 0.0
    %2533 = vmatprep.subr.mxu0 0.0
    %2534 = vmatpush2.msra.mxu0 0.0
    %2535 = vmatprep.subr.mxu0 0.0
    %2536 = vmatpush2.msra.mxu0 0.0
    %2537 = vmatprep.subr.mxu0 0.0
    %2538 = vmatpush2.msra.mxu0 0.0
    %2539 = vmatprep.subr.mxu0 0.0
    %2540 = vmatpush2.msra.mxu0 0.0
    %2541 = vmatprep.subr.mxu0 0.0
    %2542 = vmatpush2.msra.mxu0 0.0
    %2543 = vmatprep.subr.mxu0 0.0
    %2544 = vmatpush2.msra.mxu0 0.0
    %2545 = vmatprep.subr.mxu0 0.0
    %2546 = vmatpush2.msra.mxu0 0.0
    %2547 = vmatprep.subr.mxu0 0.0
    %2548 = vmatpush2.msra.mxu0 0.0
    %2549 = vmatprep.subr.mxu0 0.0
    %2550 = vmatpush2.msra.mxu0 0.0
    %2551 = vmatprep.subr.mxu0 0.0
    %2552 = vmatpush2.msra.mxu0 0.0
    %2553 = vmatprep.subr.mxu0 0.0
    %2554 = vmatpush2.msra.mxu0 0.0
    %2555 = vmatprep.subr.mxu0 0.0
    %2556 = vmatpush2.msra.mxu0 0.0
    %2557 = vmatprep.subr.mxu0 0.0
    %2558 = vmatpush2.msra.mxu0 0.0
    %2559 = vmatprep.subr.mxu0 0.0
    %2560 = vmatpush2.msra.mxu0 0.0
    %2561 = vmatprep.mubr.f32.mxu0 0.0
    %2562 = vmatmul.mubr.f32.gmra.mxu0 %v2495
    %v2563 = vpop.f32.mrf.mxu0
    %v2564 = vadd.f32 0.0, %v2563
    %v2565 = vpop.f32.mrf.mxu0
    %2566 = vdwg.mxu0
    %v2567 = vadd.f32 %v2155, %v2564
    %v2568 = vxor.u32 %v2567, 2147483648
    %v2569 = vmul.f32 %v2568, 1.442695
    %v2570 = vpow.pop %v2569
    %v2571 = vadd.f32 %v2570, 1.0
    %v2572 = vrcp.pop %v2571
    %v2573 = vmul.f32 1.0, %v2572
    %v2574 = vadd.f32 %v2564, %v2266
    %2576 = vrot.lane.b32.xlu0 %v2574, 64
    %v2577 = vpop.permute.xlu0 %2576
    %v2579 = vmul.f32 %v2573, %v2577
    %2581 = vrot.lane.b32.xlu0 %v2579, 64
    %v2582 = vpop.permute.xlu0 %2581
    %v2584 = vadd.f32 %v2155, %v2582
    %v2585 = vtanh.pop %v2584
    %v2586 = vsub.f32 1.0, %v2573
    %2588 = vrot.lane.b32.xlu0 %v2585, 96
    %v2589 = vpop.permute.xlu0 %2588
    %v2591 = vmul.f32 %v2586, %v2589
    %v2592 = vmul.f32 %v2573, %v2491
    %v2593 = vadd.f32 %v2591, %v2592
    %2595 = vrot.lane.b32.xlu0 %v2593, 96
    %v2596 = vpop.permute.xlu0 %2595
    %v2597 = vsel %vm377, %v2596, 0
    %2599 = vmatprep.subr.mxu0 0.0
    %2600 = vmatpush1.msra.mxu0 0.0
    %2601 = vmatprep.subr.mxu0 0.0
    %2602 = vmatpush1.msra.mxu0 0.0
    %2603 = vmatprep.subr.mxu0 0.0
    %2604 = vmatpush1.msra.mxu0 0.0
    %2605 = vmatprep.subr.mxu0 0.0
    %2606 = vmatpush1.msra.mxu0 0.0
    %2607 = vmatprep.subr.mxu0 0.0
    %2608 = vmatpush1.msra.mxu0 0.0
    %2609 = vmatprep.subr.mxu0 0.0
    %2610 = vmatpush1.msra.mxu0 0.0
    %2611 = vmatprep.subr.mxu0 0.0
    %2612 = vmatpush1.msra.mxu0 0.0
    %2613 = vmatprep.subr.mxu0 0.0
    %2614 = vmatpush1.msra.mxu0 0.0
    %2615 = vmatprep.subr.mxu0 0.0
    %2616 = vmatpush1.msra.mxu0 0.0
    %2617 = vmatprep.subr.mxu0 0.0
    %2618 = vmatpush1.msra.mxu0 0.0
    %2619 = vmatprep.subr.mxu0 0.0
    %2620 = vmatpush1.msra.mxu0 0.0
    %2621 = vmatprep.subr.mxu0 0.0
    %2622 = vmatpush1.msra.mxu0 0.0
    %2623 = vmatprep.subr.mxu0 0.0
    %2624 = vmatpush1.msra.mxu0 %v2181
    %2625 = vmatprep.subr.mxu0 0.0
    %2626 = vmatpush1.msra.mxu0 %v2180
    %2627 = vmatprep.subr.mxu0 0.0
    %2628 = vmatpush1.msra.mxu0 %v2179
    %2629 = vmatprep.subr.mxu0 0.0
    %2630 = vmatpush1.msra.mxu0 %v2178
    %2631 = vmatprep.subr.mxu0 0.0
    %2632 = vmatpush2.msra.mxu0 0.0
    %2633 = vmatprep.subr.mxu0 0.0
    %2634 = vmatpush2.msra.mxu0 0.0
    %2635 = vmatprep.subr.mxu0 0.0
    %2636 = vmatpush2.msra.mxu0 0.0
    %2637 = vmatprep.subr.mxu0 0.0
    %2638 = vmatpush2.msra.mxu0 0.0
    %2639 = vmatprep.subr.mxu0 0.0
    %2640 = vmatpush2.msra.mxu0 0.0
    %2641 = vmatprep.subr.mxu0 0.0
    %2642 = vmatpush2.msra.mxu0 0.0
    %2643 = vmatprep.subr.mxu0 0.0
    %2644 = vmatpush2.msra.mxu0 0.0
    %2645 = vmatprep.subr.mxu0 0.0
    %2646 = vmatpush2.msra.mxu0 0.0
    %2647 = vmatprep.subr.mxu0 0.0
    %2648 = vmatpush2.msra.mxu0 0.0
    %2649 = vmatprep.subr.mxu0 0.0
    %2650 = vmatpush2.msra.mxu0 0.0
    %2651 = vmatprep.subr.mxu0 0.0
    %2652 = vmatpush2.msra.mxu0 0.0
    %2653 = vmatprep.subr.mxu0 0.0
    %2654 = vmatpush2.msra.mxu0 0.0
    %2655 = vmatprep.subr.mxu0 0.0
    %2656 = vmatpush2.msra.mxu0 0.0
    %2657 = vmatprep.subr.mxu0 0.0
    %2658 = vmatpush2.msra.mxu0 0.0
    %2659 = vmatprep.subr.mxu0 0.0
    %2660 = vmatpush2.msra.mxu0 0.0
    %2661 = vmatprep.subr.mxu0 0.0
    %2662 = vmatpush2.msra.mxu0 0.0
    %2663 = vmatprep.mubr.f32.mxu0 0.0
    %2664 = vmatmul.mubr.f32.gmra.mxu0 %v2597
    %v2665 = vpop.f32.mrf.mxu0
    %v2666 = vadd.f32 0.0, %v2665
    %v2667 = vpop.f32.mrf.mxu0
    %2668 = vdwg.mxu0
    %v2669 = vadd.f32 %v2160, %v2666
    %v2670 = vxor.u32 %v2669, 2147483648
    %v2671 = vmul.f32 %v2670, 1.442695
    %v2672 = vpow.pop %v2671
    %v2673 = vadd.f32 %v2672, 1.0
    %v2674 = vrcp.pop %v2673
    %v2675 = vmul.f32 1.0, %v2674
    %v2676 = vadd.f32 %v2666, %v2266
    %2678 = vrot.lane.b32.xlu0 %v2676, 64
    %v2679 = vpop.permute.xlu0 %2678
    %v2681 = vmul.f32 %v2675, %v2679
    %2683 = vrot.lane.b32.xlu0 %v2681, 64
    %v2684 = vpop.permute.xlu0 %2683
    %v2686 = vadd.f32 %v2160, %v2684
    %v2687 = vtanh.pop %v2686
    %v2688 = vsub.f32 1.0, %v2675
    %2690 = vrot.lane.b32.xlu0 %v2687, 96
    %v2691 = vpop.permute.xlu0 %2690
    %v2693 = vmul.f32 %v2688, %v2691
    %v2694 = vmul.f32 %v2675, %v2593
    %v2695 = vadd.f32 %v2693, %v2694
    %2697 = vrot.lane.b32.xlu0 %v2695, 96
    %v2698 = vpop.permute.xlu0 %2697
    %v2699 = vsel %vm377, %v2698, 0
    %2701 = vmatprep.subr.mxu0 0.0
    %2702 = vmatpush1.msra.mxu0 0.0
    %2703 = vmatprep.subr.mxu0 0.0
    %2704 = vmatpush1.msra.mxu0 0.0
    %2705 = vmatprep.subr.mxu0 0.0
    %2706 = vmatpush1.msra.mxu0 0.0
    %2707 = vmatprep.subr.mxu0 0.0
    %2708 = vmatpush1.msra.mxu0 0.0
    %2709 = vmatprep.subr.mxu0 0.0
    %2710 = vmatpush1.msra.mxu0 0.0
    %2711 = vmatprep.subr.mxu0 0.0
    %2712 = vmatpush1.msra.mxu0 0.0
    %2713 = vmatprep.subr.mxu0 0.0
    %2714 = vmatpush1.msra.mxu0 0.0
    %2715 = vmatprep.subr.mxu0 0.0
    %2716 = vmatpush1.msra.mxu0 0.0
    %2717 = vmatprep.subr.mxu0 0.0
    %2718 = vmatpush1.msra.mxu0 0.0
    %2719 = vmatprep.subr.mxu0 0.0
    %2720 = vmatpush1.msra.mxu0 0.0
    %2721 = vmatprep.subr.mxu0 0.0
    %2722 = vmatpush1.msra.mxu0 0.0
    %2723 = vmatprep.subr.mxu0 0.0
    %2724 = vmatpush1.msra.mxu0 0.0
    %2725 = vmatprep.subr.mxu0 0.0
    %2726 = vmatpush1.msra.mxu0 %v2181
    %2727 = vmatprep.subr.mxu0 0.0
    %2728 = vmatpush1.msra.mxu0 %v2180
    %2729 = vmatprep.subr.mxu0 0.0
    %2730 = vmatpush1.msra.mxu0 %v2179
    %2731 = vmatprep.subr.mxu0 0.0
    %2732 = vmatpush1.msra.mxu0 %v2178
    %2733 = vmatprep.subr.mxu0 0.0
    %2734 = vmatpush2.msra.mxu0 0.0
    %2735 = vmatprep.subr.mxu0 0.0
    %2736 = vmatpush2.msra.mxu0 0.0
    %2737 = vmatprep.subr.mxu0 0.0
    %2738 = vmatpush2.msra.mxu0 0.0
    %2739 = vmatprep.subr.mxu0 0.0
    %2740 = vmatpush2.msra.mxu0 0.0
    %2741 = vmatprep.subr.mxu0 0.0
    %2742 = vmatpush2.msra.mxu0 0.0
    %2743 = vmatprep.subr.mxu0 0.0
    %2744 = vmatpush2.msra.mxu0 0.0
    %2745 = vmatprep.subr.mxu0 0.0
    %2746 = vmatpush2.msra.mxu0 0.0
    %2747 = vmatprep.subr.mxu0 0.0
    %2748 = vmatpush2.msra.mxu0 0.0
    %2749 = vmatprep.subr.mxu0 0.0
    %2750 = vmatpush2.msra.mxu0 0.0
    %2751 = vmatprep.subr.mxu0 0.0
    %2752 = vmatpush2.msra.mxu0 0.0
    %2753 = vmatprep.subr.mxu0 0.0
    %2754 = vmatpush2.msra.mxu0 0.0
    %2755 = vmatprep.subr.mxu0 0.0
    %2756 = vmatpush2.msra.mxu0 0.0
    %2757 = vmatprep.subr.mxu0 0.0
    %2758 = vmatpush2.msra.mxu0 0.0
    %2759 = vmatprep.subr.mxu0 0.0
    %2760 = vmatpush2.msra.mxu0 0.0
    %2761 = vmatprep.subr.mxu0 0.0
    %2762 = vmatpush2.msra.mxu0 0.0
    %2763 = vmatprep.subr.mxu0 0.0
    %2764 = vmatpush2.msra.mxu0 0.0
    %2765 = vmatprep.mubr.f32.mxu0 0.0
    %2766 = vmatmul.mubr.f32.gmra.mxu0 %v2699
    %v2767 = vpop.f32.mrf.mxu0
    %v2768 = vadd.f32 0.0, %v2767
    %v2769 = vpop.f32.mrf.mxu0
    %2770 = vdwg.mxu0
    %v2771 = vadd.f32 %v2165, %v2768
    %v2772 = vxor.u32 %v2771, 2147483648
    %v2773 = vmul.f32 %v2772, 1.442695
    %v2774 = vpow.pop %v2773
    %v2775 = vadd.f32 %v2774, 1.0
    %v2776 = vrcp.pop %v2775
    %v2777 = vmul.f32 1.0, %v2776
    %v2778 = vadd.f32 %v2768, %v2266
    %2780 = vrot.lane.b32.xlu0 %v2778, 64
    %v2781 = vpop.permute.xlu0 %2780
    %v2783 = vmul.f32 %v2777, %v2781
    %2785 = vrot.lane.b32.xlu0 %v2783, 64
    %v2786 = vpop.permute.xlu0 %2785
    %v2788 = vadd.f32 %v2165, %v2786
    %v2789 = vtanh.pop %v2788
    %v2790 = vsub.f32 1.0, %v2777
    %2792 = vrot.lane.b32.xlu0 %v2789, 96
    %v2793 = vpop.permute.xlu0 %2792
    %v2795 = vmul.f32 %v2790, %v2793
    %v2796 = vmul.f32 %v2777, %v2695
    %v2797 = vadd.f32 %v2795, %v2796
    %2799 = vrot.lane.b32.xlu0 %v2797, 96
    %v2800 = vpop.permute.xlu0 %2799
    %v2801 = vsel %vm377, %v2800, 0
    %2803 = vmatprep.subr.mxu0 0.0
    %2804 = vmatpush1.msra.mxu0 0.0
    %2805 = vmatprep.subr.mxu0 0.0
    %2806 = vmatpush1.msra.mxu0 0.0
    %2807 = vmatprep.subr.mxu0 0.0
    %2808 = vmatpush1.msra.mxu0 0.0
    %2809 = vmatprep.subr.mxu0 0.0
    %2810 = vmatpush1.msra.mxu0 0.0
    %2811 = vmatprep.subr.mxu0 0.0
    %2812 = vmatpush1.msra.mxu0 0.0
    %2813 = vmatprep.subr.mxu0 0.0
    %2814 = vmatpush1.msra.mxu0 0.0
    %2815 = vmatprep.subr.mxu0 0.0
    %2816 = vmatpush1.msra.mxu0 0.0
    %2817 = vmatprep.subr.mxu0 0.0
    %2818 = vmatpush1.msra.mxu0 0.0
    %2819 = vmatprep.subr.mxu0 0.0
    %2820 = vmatpush1.msra.mxu0 0.0
    %2821 = vmatprep.subr.mxu0 0.0
    %2822 = vmatpush1.msra.mxu0 0.0
    %2823 = vmatprep.subr.mxu0 0.0
    %2824 = vmatpush1.msra.mxu0 0.0
    %2825 = vmatprep.subr.mxu0 0.0
    %2826 = vmatpush1.msra.mxu0 0.0
    %2827 = vmatprep.subr.mxu0 0.0
    %2828 = vmatpush1.msra.mxu0 %v2181
    %2829 = vmatprep.subr.mxu0 0.0
    %2830 = vmatpush1.msra.mxu0 %v2180
    %2831 = vmatprep.subr.mxu0 0.0
    %2832 = vmatpush1.msra.mxu0 %v2179
    %2833 = vmatprep.subr.mxu0 0.0
    %2834 = vmatpush1.msra.mxu0 %v2178
    %2835 = vmatprep.subr.mxu0 0.0
    %2836 = vmatpush2.msra.mxu0 0.0
    %2837 = vmatprep.subr.mxu0 0.0
    %2838 = vmatpush2.msra.mxu0 0.0
    %2839 = vmatprep.subr.mxu0 0.0
    %2840 = vmatpush2.msra.mxu0 0.0
    %2841 = vmatprep.subr.mxu0 0.0
    %2842 = vmatpush2.msra.mxu0 0.0
    %2843 = vmatprep.subr.mxu0 0.0
    %2844 = vmatpush2.msra.mxu0 0.0
    %2845 = vmatprep.subr.mxu0 0.0
    %2846 = vmatpush2.msra.mxu0 0.0
    %2847 = vmatprep.subr.mxu0 0.0
    %2848 = vmatpush2.msra.mxu0 0.0
    %2849 = vmatprep.subr.mxu0 0.0
    %2850 = vmatpush2.msra.mxu0 0.0
    %2851 = vmatprep.subr.mxu0 0.0
    %2852 = vmatpush2.msra.mxu0 0.0
    %2853 = vmatprep.subr.mxu0 0.0
    %2854 = vmatpush2.msra.mxu0 0.0
    %2855 = vmatprep.subr.mxu0 0.0
    %2856 = vmatpush2.msra.mxu0 0.0
    %2857 = vmatprep.subr.mxu0 0.0
    %2858 = vmatpush2.msra.mxu0 0.0
    %2859 = vmatprep.subr.mxu0 0.0
    %2860 = vmatpush2.msra.mxu0 0.0
    %2861 = vmatprep.subr.mxu0 0.0
    %2862 = vmatpush2.msra.mxu0 0.0
    %2863 = vmatprep.subr.mxu0 0.0
    %2864 = vmatpush2.msra.mxu0 0.0
    %2865 = vmatprep.subr.mxu0 0.0
    %2866 = vmatpush2.msra.mxu0 0.0
    %2867 = vmatprep.mubr.f32.mxu0 0.0
    %2868 = vmatmul.mubr.f32.gmra.mxu0 %v2801
    %v2869 = vpop.f32.mrf.mxu0
    %v2870 = vadd.f32 0.0, %v2869
    %v2871 = vpop.f32.mrf.mxu0
    %2872 = vdwg.mxu0
    %v2873 = vadd.f32 %v2170, %v2870
    %v2874 = vxor.u32 %v2873, 2147483648
    %v2875 = vmul.f32 %v2874, 1.442695
    %v2876 = vpow.pop %v2875
    %v2877 = vadd.f32 %v2876, 1.0
    %v2878 = vrcp.pop %v2877
    %v2879 = vmul.f32 1.0, %v2878
    %v2880 = vadd.f32 %v2870, %v2266
    %2882 = vrot.lane.b32.xlu0 %v2880, 64
    %v2883 = vpop.permute.xlu0 %2882
    %v2885 = vmul.f32 %v2879, %v2883
    %2887 = vrot.lane.b32.xlu0 %v2885, 64
    %v2888 = vpop.permute.xlu0 %2887
    %v2890 = vadd.f32 %v2170, %v2888
    %v2891 = vtanh.pop %v2890
    %v2892 = vsub.f32 1.0, %v2879
    %2894 = vrot.lane.b32.xlu0 %v2891, 96
    %v2895 = vpop.permute.xlu0 %2894
    %v2897 = vmul.f32 %v2892, %v2895
    %v2898 = vmul.f32 %v2879, %v2797
    %v2899 = vadd.f32 %v2897, %v2898
    %2901 = vrot.lane.b32.xlu0 %v2899, 96
    %v2902 = vpop.permute.xlu0 %2901
    %v2903 = vsel %vm377, %v2902, 0
    %2905 = vmatprep.subr.mxu0 0.0
    %2906 = vmatpush1.msra.mxu0 0.0
    %2907 = vmatprep.subr.mxu0 0.0
    %2908 = vmatpush1.msra.mxu0 0.0
    %2909 = vmatprep.subr.mxu0 0.0
    %2910 = vmatpush1.msra.mxu0 0.0
    %2911 = vmatprep.subr.mxu0 0.0
    %2912 = vmatpush1.msra.mxu0 0.0
    %2913 = vmatprep.subr.mxu0 0.0
    %2914 = vmatpush1.msra.mxu0 0.0
    %2915 = vmatprep.subr.mxu0 0.0
    %2916 = vmatpush1.msra.mxu0 0.0
    %2917 = vmatprep.subr.mxu0 0.0
    %2918 = vmatpush1.msra.mxu0 0.0
    %2919 = vmatprep.subr.mxu0 0.0
    %2920 = vmatpush1.msra.mxu0 0.0
    %2921 = vmatprep.subr.mxu0 0.0
    %2922 = vmatpush1.msra.mxu0 0.0
    %2923 = vmatprep.subr.mxu0 0.0
    %2924 = vmatpush1.msra.mxu0 0.0
    %2925 = vmatprep.subr.mxu0 0.0
    %2926 = vmatpush1.msra.mxu0 0.0
    %2927 = vmatprep.subr.mxu0 0.0
    %2928 = vmatpush1.msra.mxu0 0.0
    %2929 = vmatprep.subr.mxu0 0.0
    %2930 = vmatpush1.msra.mxu0 %v2181
    %2931 = vmatprep.subr.mxu0 0.0
    %2932 = vmatpush1.msra.mxu0 %v2180
    %2933 = vmatprep.subr.mxu0 0.0
    %2934 = vmatpush1.msra.mxu0 %v2179
    %2935 = vmatprep.subr.mxu0 0.0
    %2936 = vmatpush1.msra.mxu0 %v2178
    %2937 = vmatprep.subr.mxu0 0.0
    %2938 = vmatpush2.msra.mxu0 0.0
    %2939 = vmatprep.subr.mxu0 0.0
    %2940 = vmatpush2.msra.mxu0 0.0
    %2941 = vmatprep.subr.mxu0 0.0
    %2942 = vmatpush2.msra.mxu0 0.0
    %2943 = vmatprep.subr.mxu0 0.0
    %2944 = vmatpush2.msra.mxu0 0.0
    %2945 = vmatprep.subr.mxu0 0.0
    %2946 = vmatpush2.msra.mxu0 0.0
    %2947 = vmatprep.subr.mxu0 0.0
    %2948 = vmatpush2.msra.mxu0 0.0
    %2949 = vmatprep.subr.mxu0 0.0
    %2950 = vmatpush2.msra.mxu0 0.0
    %2951 = vmatprep.subr.mxu0 0.0
    %2952 = vmatpush2.msra.mxu0 0.0
    %2953 = vmatprep.subr.mxu0 0.0
    %2954 = vmatpush2.msra.mxu0 0.0
    %2955 = vmatprep.subr.mxu0 0.0
    %2956 = vmatpush2.msra.mxu0 0.0
    %2957 = vmatprep.subr.mxu0 0.0
    %2958 = vmatpush2.msra.mxu0 0.0
    %2959 = vmatprep.subr.mxu0 0.0
    %2960 = vmatpush2.msra.mxu0 0.0
    %2961 = vmatprep.subr.mxu0 0.0
    %2962 = vmatpush2.msra.mxu0 0.0
    %2963 = vmatprep.subr.mxu0 0.0
    %2964 = vmatpush2.msra.mxu0 0.0
    %2965 = vmatprep.subr.mxu0 0.0
    %2966 = vmatpush2.msra.mxu0 0.0
    %2967 = vmatprep.subr.mxu0 0.0
    %2968 = vmatpush2.msra.mxu0 0.0
    %2969 = vmatprep.mubr.f32.mxu0 0.0
    %2970 = vmatmul.mubr.f32.gmra.mxu0 %v2903
    %v2971 = vpop.f32.mrf.mxu0
    %v2972 = vadd.f32 0.0, %v2971
    %v2973 = vpop.f32.mrf.mxu0
    %2974 = vdwg.mxu0
    %v2975 = vadd.f32 %v2175, %v2972
    %v2976 = vxor.u32 %v2975, 2147483648
    %v2977 = vmul.f32 %v2976, 1.442695
    %v2978 = vpow.pop %v2977
    %v2979 = vadd.f32 %v2978, 1.0
    %v2980 = vrcp.pop %v2979
    %v2981 = vmul.f32 1.0, %v2980
    %v2982 = vadd.f32 %v2972, %v2266
    %2984 = vrot.lane.b32.xlu0 %v2982, 64
    %v2985 = vpop.permute.xlu0 %2984
    %v2987 = vmul.f32 %v2981, %v2985
    %2989 = vrot.lane.b32.xlu0 %v2987, 64
    %v2990 = vpop.permute.xlu0 %2989
    %v2992 = vadd.f32 %v2175, %v2990
    %v2993 = vtanh.pop %v2992
    %v2994 = vsub.f32 1.0, %v2981
    %2996 = vrot.lane.b32.xlu0 %v2993, 96
    %v2997 = vpop.permute.xlu0 %2996
    %v2999 = vmul.f32 %v2994, %v2997
    %v3000 = vmul.f32 %v2981, %v2899
    %v3001 = vadd.f32 %v2999, %v3000
    %v3002 = vld [vmem:[#allocation4 + $0x1d0] sm:$0xff]
    %v3003 = vld [vmem:[#allocation4 + $0x1d8] sm:$0xff]
    %v3004 = vld [vmem:[#allocation4 + $0x1e0] sm:$0xff]
    %v3005 = vld [vmem:[#allocation4 + $0x1e8] sm:$0xff]
    %v3006 = vld [vmem:[#allocation4 + $0x1f0] sm:$0x1]
    %v3007 = vlaneseq
    %v3008 = vshrl.u32 %v3007, 7
    %v3009 = vsub.s32 0, %v3008
    %v3010 = vrot.slane %v3006, %v3009
    %3012 = vrot.lane.b32.xlu0 %v3001, 96
    %v3013 = vpop.permute.xlu0 %3012
    %v3014 = vsel %vm377, %v3013, 0
    %3016 = vmatprep.subr.mxu0 0.0
    %3017 = vmatpush1.msra.mxu0 0.0
    %3018 = vmatprep.subr.mxu0 0.0
    %3019 = vmatpush1.msra.mxu0 0.0
    %3020 = vmatprep.subr.mxu0 0.0
    %3021 = vmatpush1.msra.mxu0 0.0
    %3022 = vmatprep.subr.mxu0 0.0
    %3023 = vmatpush1.msra.mxu0 0.0
    %3024 = vmatprep.subr.mxu0 0.0
    %3025 = vmatpush1.msra.mxu0 0.0
    %3026 = vmatprep.subr.mxu0 0.0
    %3027 = vmatpush1.msra.mxu0 0.0
    %3028 = vmatprep.subr.mxu0 0.0
    %3029 = vmatpush1.msra.mxu0 0.0
    %3030 = vmatprep.subr.mxu0 0.0
    %3031 = vmatpush1.msra.mxu0 0.0
    %3032 = vmatprep.subr.mxu0 0.0
    %3033 = vmatpush1.msra.mxu0 0.0
    %3034 = vmatprep.subr.mxu0 0.0
    %3035 = vmatpush1.msra.mxu0 0.0
    %3036 = vmatprep.subr.mxu0 0.0
    %3037 = vmatpush1.msra.mxu0 0.0
    %3038 = vmatprep.subr.mxu0 0.0
    %3039 = vmatpush1.msra.mxu0 0.0
    %3040 = vmatprep.subr.mxu0 0.0
    %3041 = vmatpush1.msra.mxu0 %v3005
    %3042 = vmatprep.subr.mxu0 0.0
    %3043 = vmatpush1.msra.mxu0 %v3004
    %3044 = vmatprep.subr.mxu0 0.0
    %3045 = vmatpush1.msra.mxu0 %v3003
    %3046 = vmatprep.subr.mxu0 0.0
    %3047 = vmatpush1.msra.mxu0 %v3002
    %3048 = vmatprep.subr.mxu0 0.0
    %3049 = vmatpush2.msra.mxu0 0.0
    %3050 = vmatprep.subr.mxu0 0.0
    %3051 = vmatpush2.msra.mxu0 0.0
    %3052 = vmatprep.subr.mxu0 0.0
    %3053 = vmatpush2.msra.mxu0 0.0
    %3054 = vmatprep.subr.mxu0 0.0
    %3055 = vmatpush2.msra.mxu0 0.0
    %3056 = vmatprep.subr.mxu0 0.0
    %3057 = vmatpush2.msra.mxu0 0.0
    %3058 = vmatprep.subr.mxu0 0.0
    %3059 = vmatpush2.msra.mxu0 0.0
    %3060 = vmatprep.subr.mxu0 0.0
    %3061 = vmatpush2.msra.mxu0 0.0
    %3062 = vmatprep.subr.mxu0 0.0
    %3063 = vmatpush2.msra.mxu0 0.0
    %3064 = vmatprep.subr.mxu0 0.0
    %3065 = vmatpush2.msra.mxu0 0.0
    %3066 = vmatprep.subr.mxu0 0.0
    %3067 = vmatpush2.msra.mxu0 0.0
    %3068 = vmatprep.subr.mxu0 0.0
    %3069 = vmatpush2.msra.mxu0 0.0
    %3070 = vmatprep.subr.mxu0 0.0
    %3071 = vmatpush2.msra.mxu0 0.0
    %3072 = vmatprep.subr.mxu0 0.0
    %3073 = vmatpush2.msra.mxu0 0.0
    %3074 = vmatprep.subr.mxu0 0.0
    %3075 = vmatpush2.msra.mxu0 0.0
    %3076 = vmatprep.subr.mxu0 0.0
    %3077 = vmatpush2.msra.mxu0 0.0
    %3078 = vmatprep.subr.mxu0 0.0
    %3079 = vmatpush2.msra.mxu0 0.0
    %3080 = vmatprep.mubr.f32.mxu0 0.0
    %3081 = vmatmul.mubr.f32.gmra.mxu0 %v3014
    %v3082 = vpop.f32.mrf.mxu0
    %v3083 = vadd.f32 %v3010, %v3082
    %v3084 = vpop.f32.mrf.mxu0
    %3085 = vdwg.mxu0
    %v3086 = vmax.f32 %v3083, 0.0
    %v3087 = vld [vmem:[#allocation4 + $0x1f8] sm:$0xff]
    %v3088 = vld [vmem:[#allocation4 + $0x200] sm:$0xff]
    %v3089 = vld [vmem:[#allocation4 + $0x208] sm:$0xff]
    %v3090 = vld [vmem:[#allocation4 + $0x210] sm:$0xff]
    %v3091 = vld [vmem:[#allocation4 + $0x218] sm:$0xff]
    %v3092 = vld [vmem:[#allocation4 + $0x220] sm:$0xff]
    %v3093 = vld [vmem:[#allocation4 + $0x228] sm:$0xff]
    %v3094 = vld [vmem:[#allocation4 + $0x230] sm:$0xff]
    %v3095 = vld [vmem:[#allocation4 + $0x238] sm:$0x1]
    %v3096 = vlaneseq
    %v3097 = vshrl.u32 %v3096, 7
    %v3098 = vsub.s32 0, %v3097
    %v3099 = vrot.slane %v3095, %v3098
    %v3101 = vsel %vm130, %v3086, 0
    %3103 = vmatprep.subr.mxu0 0.0
    %3104 = vmatpush1.msra.mxu0 0.0
    %3105 = vmatprep.subr.mxu0 0.0
    %3106 = vmatpush1.msra.mxu0 0.0
    %3107 = vmatprep.subr.mxu0 0.0
    %3108 = vmatpush1.msra.mxu0 0.0
    %3109 = vmatprep.subr.mxu0 0.0
    %3110 = vmatpush1.msra.mxu0 0.0
    %3111 = vmatprep.subr.mxu0 0.0
    %3112 = vmatpush1.msra.mxu0 0.0
    %3113 = vmatprep.subr.mxu0 0.0
    %3114 = vmatpush1.msra.mxu0 0.0
    %3115 = vmatprep.subr.mxu0 0.0
    %3116 = vmatpush1.msra.mxu0 0.0
    %3117 = vmatprep.subr.mxu0 0.0
    %3118 = vmatpush1.msra.mxu0 0.0
    %3119 = vmatprep.subr.mxu0 0.0
    %3120 = vmatpush1.msra.mxu0 %v3094
    %3121 = vmatprep.subr.mxu0 0.0
    %3122 = vmatpush1.msra.mxu0 %v3093
    %3123 = vmatprep.subr.mxu0 0.0
    %3124 = vmatpush1.msra.mxu0 %v3092
    %3125 = vmatprep.subr.mxu0 0.0
    %3126 = vmatpush1.msra.mxu0 %v3091
    %3127 = vmatprep.subr.mxu0 0.0
    %3128 = vmatpush1.msra.mxu0 %v3090
    %3129 = vmatprep.subr.mxu0 0.0
    %3130 = vmatpush1.msra.mxu0 %v3089
    %3131 = vmatprep.subr.mxu0 0.0
    %3132 = vmatpush1.msra.mxu0 %v3088
    %3133 = vmatprep.subr.mxu0 0.0
    %3134 = vmatpush1.msra.mxu0 %v3087
    %3135 = vmatprep.subr.mxu0 0.0
    %3136 = vmatpush2.msra.mxu0 0.0
    %3137 = vmatprep.subr.mxu0 0.0
    %3138 = vmatpush2.msra.mxu0 0.0
    %3139 = vmatprep.subr.mxu0 0.0
    %3140 = vmatpush2.msra.mxu0 0.0
    %3141 = vmatprep.subr.mxu0 0.0
    %3142 = vmatpush2.msra.mxu0 0.0
    %3143 = vmatprep.subr.mxu0 0.0
    %3144 = vmatpush2.msra.mxu0 0.0
    %3145 = vmatprep.subr.mxu0 0.0
    %3146 = vmatpush2.msra.mxu0 0.0
    %3147 = vmatprep.subr.mxu0 0.0
    %3148 = vmatpush2.msra.mxu0 0.0
    %3149 = vmatprep.subr.mxu0 0.0
    %3150 = vmatpush2.msra.mxu0 0.0
    %3151 = vmatprep.subr.mxu0 0.0
    %3152 = vmatpush2.msra.mxu0 0.0
    %3153 = vmatprep.subr.mxu0 0.0
    %3154 = vmatpush2.msra.mxu0 0.0
    %3155 = vmatprep.subr.mxu0 0.0
    %3156 = vmatpush2.msra.mxu0 0.0
    %3157 = vmatprep.subr.mxu0 0.0
    %3158 = vmatpush2.msra.mxu0 0.0
    %3159 = vmatprep.subr.mxu0 0.0
    %3160 = vmatpush2.msra.mxu0 0.0
    %3161 = vmatprep.subr.mxu0 0.0
    %3162 = vmatpush2.msra.mxu0 0.0
    %3163 = vmatprep.subr.mxu0 0.0
    %3164 = vmatpush2.msra.mxu0 0.0
    %3165 = vmatprep.subr.mxu0 0.0
    %3166 = vmatpush2.msra.mxu0 0.0
    %3167 = vmatprep.mubr.f32.mxu0 0.0
    %3168 = vmatmul.mubr.f32.gmra.mxu0 %v3101
    %v3169 = vpop.f32.mrf.mxu0
    %v3170 = vadd.f32 %v3099, %v3169
    %v3171 = vpop.f32.mrf.mxu0
    %3172 = vdwg.mxu0
    %v3173 = vmax.f32 %v3170, 0.0
    %v3174 = vld [vmem:[#allocation4 + $0x240] sm:$0xff]
    %v3175 = vld [vmem:[#allocation4 + $0x248] sm:$0xff]
    %v3176 = vld [vmem:[#allocation4 + $0x250] sm:$0xff]
    %v3177 = vld [vmem:[#allocation4 + $0x258] sm:$0xff]
    %v3178 = vld [vmem:[#allocation4 + $0x260] sm:$0xff]
    %v3179 = vld [vmem:[#allocation4 + $0x268] sm:$0xff]
    %v3180 = vld [vmem:[#allocation4 + $0x270] sm:$0xff]
    %v3181 = vld [vmem:[#allocation4 + $0x278] sm:$0xff]
    %v3182 = vld [vmem:[#allocation4 + $0x280] sm:$0x1]
    %v3183 = vlaneseq
    %v3184 = vshrl.u32 %v3183, 7
    %v3185 = vsub.s32 0, %v3184
    %v3186 = vrot.slane %v3182, %v3185
    %3187 = vmatprep.subr.mxu0 0.0
    %3188 = vmatpush1.msra.mxu0 0.0
    %3189 = vmatprep.subr.mxu0 0.0
    %3190 = vmatpush1.msra.mxu0 0.0
    %3191 = vmatprep.subr.mxu0 0.0
    %3192 = vmatpush1.msra.mxu0 0.0
    %3193 = vmatprep.subr.mxu0 0.0
    %3194 = vmatpush1.msra.mxu0 0.0
    %3195 = vmatprep.subr.mxu0 0.0
    %3196 = vmatpush1.msra.mxu0 0.0
    %3197 = vmatprep.subr.mxu0 0.0
    %3198 = vmatpush1.msra.mxu0 0.0
    %3199 = vmatprep.subr.mxu0 0.0
    %3200 = vmatpush1.msra.mxu0 0.0
    %3201 = vmatprep.subr.mxu0 0.0
    %3202 = vmatpush1.msra.mxu0 0.0
    %3203 = vmatprep.subr.mxu0 0.0
    %3204 = vmatpush1.msra.mxu0 %v3181
    %3205 = vmatprep.subr.mxu0 0.0
    %3206 = vmatpush1.msra.mxu0 %v3180
    %3207 = vmatprep.subr.mxu0 0.0
    %3208 = vmatpush1.msra.mxu0 %v3179
    %3209 = vmatprep.subr.mxu0 0.0
    %3210 = vmatpush1.msra.mxu0 %v3178
    %3211 = vmatprep.subr.mxu0 0.0
    %3212 = vmatpush1.msra.mxu0 %v3177
    %3213 = vmatprep.subr.mxu0 0.0
    %3214 = vmatpush1.msra.mxu0 %v3176
    %3215 = vmatprep.subr.mxu0 0.0
    %3216 = vmatpush1.msra.mxu0 %v3175
    %3217 = vmatprep.subr.mxu0 0.0
    %3218 = vmatpush1.msra.mxu0 %v3174
    %3219 = vmatprep.subr.mxu0 0.0
    %3220 = vmatpush2.msra.mxu0 0.0
    %3221 = vmatprep.subr.mxu0 0.0
    %3222 = vmatpush2.msra.mxu0 0.0
    %3223 = vmatprep.subr.mxu0 0.0
    %3224 = vmatpush2.msra.mxu0 0.0
    %3225 = vmatprep.subr.mxu0 0.0
    %3226 = vmatpush2.msra.mxu0 0.0
    %3227 = vmatprep.subr.mxu0 0.0
    %3228 = vmatpush2.msra.mxu0 0.0
    %3229 = vmatprep.subr.mxu0 0.0
    %3230 = vmatpush2.msra.mxu0 0.0
    %3231 = vmatprep.subr.mxu0 0.0
    %3232 = vmatpush2.msra.mxu0 0.0
    %3233 = vmatprep.subr.mxu0 0.0
    %3234 = vmatpush2.msra.mxu0 0.0
    %3235 = vmatprep.subr.mxu0 0.0
    %3236 = vmatpush2.msra.mxu0 0.0
    %3237 = vmatprep.subr.mxu0 0.0
    %3238 = vmatpush2.msra.mxu0 0.0
    %3239 = vmatprep.subr.mxu0 0.0
    %3240 = vmatpush2.msra.mxu0 0.0
    %3241 = vmatprep.subr.mxu0 0.0
    %3242 = vmatpush2.msra.mxu0 0.0
    %3243 = vmatprep.subr.mxu0 0.0
    %3244 = vmatpush2.msra.mxu0 0.0
    %3245 = vmatprep.subr.mxu0 0.0
    %3246 = vmatpush2.msra.mxu0 0.0
    %3247 = vmatprep.subr.mxu0 0.0
    %3248 = vmatpush2.msra.mxu0 0.0
    %3249 = vmatprep.subr.mxu0 0.0
    %3250 = vmatpush2.msra.mxu0 0.0
    %3251 = vmatprep.mubr.f32.mxu0 0.0
    %3252 = vmatmul.mubr.f32.gmra.mxu0 %v3101
    %v3253 = vpop.f32.mrf.mxu0
    %v3254 = vadd.f32 %v3186, %v3253
    %v3255 = vpop.f32.mrf.mxu0
    %3256 = vdwg.mxu0
    %v3257 = vmax.f32 %v3254, 0.0
    %v3258 = vld [vmem:[#allocation4 + $0x288] sm:$0xff]
    %v3259 = vld [vmem:[#allocation4 + $0x290] sm:$0xff]
    %v3260 = vld [vmem:[#allocation4 + $0x298] sm:$0xff]
    %v3261 = vld [vmem:[#allocation4 + $0x2a0] sm:$0xff]
    %v3262 = vld [vmem:[#allocation4 + $0x2a8] sm:$0xff]
    %v3263 = vld [vmem:[#allocation4 + $0x2b0] sm:$0xff]
    %v3264 = vld [vmem:[#allocation4 + $0x2b8] sm:$0xff]
    %v3265 = vld [vmem:[#allocation4 + $0x2c0] sm:$0xff]
    %v3266 = vld [vmem:[#allocation4 + $0x2c8] sm:$0xff]
    %v3267 = vld [vmem:[#allocation4 + $0x2d0] sm:$0xff]
    %v3268 = vld [vmem:[#allocation4 + $0x2d8] sm:$0xff]
    %v3269 = vld [vmem:[#allocation4 + $0x2e0] sm:$0xff]
    %v3270 = vld [vmem:[#allocation4 + $0x2e8] sm:$0xff]
    %v3271 = vld [vmem:[#allocation4 + $0x2f0] sm:$0xff]
    %v3272 = vld [vmem:[#allocation4 + $0x2f8] sm:$0xff]
    %v3273 = vld [vmem:[#allocation4 + $0x300] sm:$0xff]
    %v3275 = vsel %vm130, %v3257, 0
    %3277 = vmatprep.subr.mxu0 0.0
    %3278 = vmatpush1.msra.mxu0 0.0
    %3279 = vmatprep.subr.mxu0 0.0
    %3280 = vmatpush1.msra.mxu0 0.0
    %3281 = vmatprep.subr.mxu0 0.0
    %3282 = vmatpush1.msra.mxu0 0.0
    %3283 = vmatprep.subr.mxu0 0.0
    %3284 = vmatpush1.msra.mxu0 0.0
    %3285 = vmatprep.subr.mxu0 0.0
    %3286 = vmatpush1.msra.mxu0 0.0
    %3287 = vmatprep.subr.mxu0 0.0
    %3288 = vmatpush1.msra.mxu0 0.0
    %3289 = vmatprep.subr.mxu0 0.0
    %3290 = vmatpush1.msra.mxu0 0.0
    %3291 = vmatprep.subr.mxu0 0.0
    %3292 = vmatpush1.msra.mxu0 0.0
    %3293 = vmatprep.subr.mxu0 0.0
    %3294 = vmatpush1.msra.mxu0 %v3273
    %3295 = vmatprep.subr.mxu0 0.0
    %3296 = vmatpush1.msra.mxu0 %v3272
    %3297 = vmatprep.subr.mxu0 0.0
    %3298 = vmatpush1.msra.mxu0 %v3271
    %3299 = vmatprep.subr.mxu0 0.0
    %3300 = vmatpush1.msra.mxu0 %v3270
    %3301 = vmatprep.subr.mxu0 0.0
    %3302 = vmatpush1.msra.mxu0 %v3269
    %3303 = vmatprep.subr.mxu0 0.0
    %3304 = vmatpush1.msra.mxu0 %v3268
    %3305 = vmatprep.subr.mxu0 0.0
    %3306 = vmatpush1.msra.mxu0 %v3267
    %3307 = vmatprep.subr.mxu0 0.0
    %3308 = vmatpush1.msra.mxu0 %v3266
    %3309 = vmatprep.subr.mxu0 0.0
    %3310 = vmatpush2.msra.mxu0 0.0
    %3311 = vmatprep.subr.mxu0 0.0
    %3312 = vmatpush2.msra.mxu0 0.0
    %3313 = vmatprep.subr.mxu0 0.0
    %3314 = vmatpush2.msra.mxu0 0.0
    %3315 = vmatprep.subr.mxu0 0.0
    %3316 = vmatpush2.msra.mxu0 0.0
    %3317 = vmatprep.subr.mxu0 0.0
    %3318 = vmatpush2.msra.mxu0 0.0
    %3319 = vmatprep.subr.mxu0 0.0
    %3320 = vmatpush2.msra.mxu0 0.0
    %3321 = vmatprep.subr.mxu0 0.0
    %3322 = vmatpush2.msra.mxu0 0.0
    %3323 = vmatprep.subr.mxu0 0.0
    %3324 = vmatpush2.msra.mxu0 0.0
    %3325 = vmatprep.subr.mxu0 0.0
    %3326 = vmatpush2.msra.mxu0 0.0
    %3327 = vmatprep.subr.mxu0 0.0
    %3328 = vmatpush2.msra.mxu0 0.0
    %3329 = vmatprep.subr.mxu0 0.0
    %3330 = vmatpush2.msra.mxu0 0.0
    %3331 = vmatprep.subr.mxu0 0.0
    %3332 = vmatpush2.msra.mxu0 0.0
    %3333 = vmatprep.subr.mxu0 0.0
    %3334 = vmatpush2.msra.mxu0 0.0
    %3335 = vmatprep.subr.mxu0 0.0
    %3336 = vmatpush2.msra.mxu0 0.0
    %3337 = vmatprep.subr.mxu0 0.0
    %3338 = vmatpush2.msra.mxu0 0.0
    %3339 = vmatprep.subr.mxu0 0.0
    %3340 = vmatpush2.msra.mxu0 0.0
    %3341 = vmatprep.mubr.f32.mxu0 0.0
    %3342 = vmatmul.mubr.f32.gmra.mxu0 %v3275
    %v3343 = vpop.f32.mrf.mxu0
    %v3344 = vadd.f32 0.0, %v3343
    %v3345 = vpop.f32.mrf.mxu0
    %3346 = vdwg.mxu0
    %v3348 = vsel %vm130, %v3173, 0
    %3350 = vmatprep.subr.mxu0 0.0
    %3351 = vmatpush1.msra.mxu0 0.0
    %3352 = vmatprep.subr.mxu0 0.0
    %3353 = vmatpush1.msra.mxu0 0.0
    %3354 = vmatprep.subr.mxu0 0.0
    %3355 = vmatpush1.msra.mxu0 0.0
    %3356 = vmatprep.subr.mxu0 0.0
    %3357 = vmatpush1.msra.mxu0 0.0
    %3358 = vmatprep.subr.mxu0 0.0
    %3359 = vmatpush1.msra.mxu0 0.0
    %3360 = vmatprep.subr.mxu0 0.0
    %3361 = vmatpush1.msra.mxu0 0.0
    %3362 = vmatprep.subr.mxu0 0.0
    %3363 = vmatpush1.msra.mxu0 0.0
    %3364 = vmatprep.subr.mxu0 0.0
    %3365 = vmatpush1.msra.mxu0 0.0
    %3366 = vmatprep.subr.mxu0 0.0
    %3367 = vmatpush1.msra.mxu0 %v3265
    %3368 = vmatprep.subr.mxu0 0.0
    %3369 = vmatpush1.msra.mxu0 %v3264
    %3370 = vmatprep.subr.mxu0 0.0
    %3371 = vmatpush1.msra.mxu0 %v3263
    %3372 = vmatprep.subr.mxu0 0.0
    %3373 = vmatpush1.msra.mxu0 %v3262
    %3374 = vmatprep.subr.mxu0 0.0
    %3375 = vmatpush1.msra.mxu0 %v3261
    %3376 = vmatprep.subr.mxu0 0.0
    %3377 = vmatpush1.msra.mxu0 %v3260
    %3378 = vmatprep.subr.mxu0 0.0
    %3379 = vmatpush1.msra.mxu0 %v3259
    %3380 = vmatprep.subr.mxu0 0.0
    %3381 = vmatpush1.msra.mxu0 %v3258
    %3382 = vmatprep.subr.mxu0 0.0
    %3383 = vmatpush2.msra.mxu0 0.0
    %3384 = vmatprep.subr.mxu0 0.0
    %3385 = vmatpush2.msra.mxu0 0.0
    %3386 = vmatprep.subr.mxu0 0.0
    %3387 = vmatpush2.msra.mxu0 0.0
    %3388 = vmatprep.subr.mxu0 0.0
    %3389 = vmatpush2.msra.mxu0 0.0
    %3390 = vmatprep.subr.mxu0 0.0
    %3391 = vmatpush2.msra.mxu0 0.0
    %3392 = vmatprep.subr.mxu0 0.0
    %3393 = vmatpush2.msra.mxu0 0.0
    %3394 = vmatprep.subr.mxu0 0.0
    %3395 = vmatpush2.msra.mxu0 0.0
    %3396 = vmatprep.subr.mxu0 0.0
    %3397 = vmatpush2.msra.mxu0 0.0
    %3398 = vmatprep.subr.mxu0 0.0
    %3399 = vmatpush2.msra.mxu0 0.0
    %3400 = vmatprep.subr.mxu0 0.0
    %3401 = vmatpush2.msra.mxu0 0.0
    %3402 = vmatprep.subr.mxu0 0.0
    %3403 = vmatpush2.msra.mxu0 0.0
    %3404 = vmatprep.subr.mxu0 0.0
    %3405 = vmatpush2.msra.mxu0 0.0
    %3406 = vmatprep.subr.mxu0 0.0
    %3407 = vmatpush2.msra.mxu0 0.0
    %3408 = vmatprep.subr.mxu0 0.0
    %3409 = vmatpush2.msra.mxu0 0.0
    %3410 = vmatprep.subr.mxu0 0.0
    %3411 = vmatpush2.msra.mxu0 0.0
    %3412 = vmatprep.subr.mxu0 0.0
    %3413 = vmatpush2.msra.mxu0 0.0
    %3414 = vmatprep.mubr.f32.mxu0 0.0
    %3415 = vmatmul.mubr.f32.gmra.mxu0 %v3348
    %v3416 = vpop.f32.mrf.mxu0
    %v3417 = vadd.f32 %v3344, %v3416
    %v3418 = vpop.f32.mrf.mxu0
    %3419 = vdwg.mxu0
    %v3420 = vld [vmem:[#allocation4 + $0x308] sm:$0x1]
    %v3421 = vlaneseq
    %v3422 = vshrl.u32 %v3421, 7
    %v3423 = vsub.s32 0, %v3422
    %v3424 = vrot.slane %v3420, %v3423
    %v3425 = vadd.f32 %v3417, %v3424
    %v3426 = vsel %vm2048, %v3425, -inf
    %3427 = vmax.xlane.f32.xlu0 %v3426
    %v3428 = vpop.xlane.xlu0 %3427
    %v3429 = vsub.f32 %v3425, %v3428
    %v3430 = vmul.f32 %v3429, 1.442695
    %v3431 = vpow.pop %v3430
    %v3432 = vld [vmem:[#allocation4 + $0x310] sm:$0xff]
    %v3433 = vld [vmem:[#allocation4 + $0x318] sm:$0xff]
    %v3435 = vsel %vm2048, %v3431, 0
    %3437 = vmatprep.subr.mxu0 0.0
    %3438 = vmatpush1.msra.mxu0 0.0
    %3439 = vmatprep.subr.mxu0 0.0
    %3440 = vmatpush1.msra.mxu0 0.0
    %3441 = vmatprep.subr.mxu0 0.0
    %3442 = vmatpush1.msra.mxu0 0.0
    %3443 = vmatprep.subr.mxu0 0.0
    %3444 = vmatpush1.msra.mxu0 0.0
    %3445 = vmatprep.subr.mxu0 0.0
    %3446 = vmatpush1.msra.mxu0 0.0
    %3447 = vmatprep.subr.mxu0 0.0
    %3448 = vmatpush1.msra.mxu0 0.0
    %3449 = vmatprep.subr.mxu0 0.0
    %3450 = vmatpush1.msra.mxu0 0.0
    %3451 = vmatprep.subr.mxu0 0.0
    %3452 = vmatpush1.msra.mxu0 0.0
    %3453 = vmatprep.subr.mxu0 0.0
    %3454 = vmatpush1.msra.mxu0 0.0
    %3455 = vmatprep.subr.mxu0 0.0
    %3456 = vmatpush1.msra.mxu0 0.0
    %3457 = vmatprep.subr.mxu0 0.0
    %3458 = vmatpush1.msra.mxu0 0.0
    %3459 = vmatprep.subr.mxu0 0.0
    %3460 = vmatpush1.msra.mxu0 0.0
    %3461 = vmatprep.subr.mxu0 0.0
    %3462 = vmatpush1.msra.mxu0 0.0
    %3463 = vmatprep.subr.mxu0 0.0
    %3464 = vmatpush1.msra.mxu0 0.0
    %3465 = vmatprep.subr.mxu0 0.0
    %3466 = vmatpush1.msra.mxu0 %v3433
    %3467 = vmatprep.subr.mxu0 0.0
    %3468 = vmatpush1.msra.mxu0 %v3432
    %3469 = vmatprep.subr.mxu0 0.0
    %3470 = vmatpush2.msra.mxu0 0.0
    %3471 = vmatprep.subr.mxu0 0.0
    %3472 = vmatpush2.msra.mxu0 0.0
    %3473 = vmatprep.subr.mxu0 0.0
    %3474 = vmatpush2.msra.mxu0 0.0
    %3475 = vmatprep.subr.mxu0 0.0
    %3476 = vmatpush2.msra.mxu0 0.0
    %3477 = vmatprep.subr.mxu0 0.0
    %3478 = vmatpush2.msra.mxu0 0.0
    %3479 = vmatprep.subr.mxu0 0.0
    %3480 = vmatpush2.msra.mxu0 0.0
    %3481 = vmatprep.subr.mxu0 0.0
    %3482 = vmatpush2.msra.mxu0 0.0
    %3483 = vmatprep.subr.mxu0 0.0
    %3484 = vmatpush2.msra.mxu0 0.0
    %3485 = vmatprep.subr.mxu0 0.0
    %3486 = vmatpush2.msra.mxu0 0.0
    %3487 = vmatprep.subr.mxu0 0.0
    %3488 = vmatpush2.msra.mxu0 0.0
    %3489 = vmatprep.subr.mxu0 0.0
    %3490 = vmatpush2.msra.mxu0 0.0
    %3491 = vmatprep.subr.mxu0 0.0
    %3492 = vmatpush2.msra.mxu0 0.0
    %3493 = vmatprep.subr.mxu0 0.0
    %3494 = vmatpush2.msra.mxu0 0.0
    %3495 = vmatprep.subr.mxu0 0.0
    %3496 = vmatpush2.msra.mxu0 0.0
    %3497 = vmatprep.subr.mxu0 0.0
    %3498 = vmatpush2.msra.mxu0 0.0
    %3499 = vmatprep.subr.mxu0 0.0
    %3500 = vmatpush2.msra.mxu0 0.0
    %3501 = vmatprep.mubr.f32.mxu0 0.0
    %3502 = vmatmul.mubr.f32.gmra.mxu0 %v3435
    %v3503 = vpop.f32.mrf.mxu0
    %v3504 = vadd.f32 0.0, %v3503
    %v3505 = vpop.f32.mrf.mxu0
    %3506 = vdwg.mxu0
    %v3507 = vrcp.pop %v3504
    %v3508 = vmul.f32 %v3431, %v3507
    %vm3509 = vcmask 123904
    %3510 = vst.msk [vmem:[%s4] sm:$0x3] %vm3509, %v3508
    // Predicated region
    $region26: #{_lambda_.1} parent=1 // pred_check
      _
    $region27: #{_lambda_.1} parent=1 // pred_check_branch
      %3512 = sbr.rel (0) target = $region29
    $region28: #{_lambda_.1} parent=1 // pred_region
      _
    $region29: #{_lambda_.1} parent=1 // pred_fallthru
      _
    // Predicated region
    $region30: #{_lambda_.1} parent=1 // pred_check
      _
    $region31: #{_lambda_.1} parent=1 // pred_check_branch
      %3514 = sbr.rel (0) target = $region33
    $region32: #{_lambda_.1} parent=1 // pred_region
      _
    $region33: #{_lambda_.1} parent=1 // pred_fallthru
      _
    %3515 = vsyncpa [#allocation3], 1
    %3516 = vsyncpa [#allocation5], 1

</llo_original>
